<compile_context>
chip_gen: v5e
topology: v5e:2x2
jax: 0.10.0
libtpu: 0.0.40
codegen_flags: <defaults>
</compile_context>

<pallas_src>
import jax
import jax.numpy as jnp
from jax import lax
from jax.experimental import pallas as pl
from jax.experimental.pallas import tpu as pltpu

EPS = 1e-12          # F.normalize default eps
BACKBONE_DIM = 2048  # ResNet50 feature width
HID1 = 512           # fc1 output width
MLP_HID = 256        # clf_model2 hidden width (stand-in)
MLP_OUT = 512        # clf_model2 output width
OUT_PAD = 128        # lane-padded width of the final Linear(512, 2)
TK = 512             # K-pipeline chunk over the 2048 backbone feature dim


def fusion_kernel(img_ref, seq_ref,
                  wbb_ref, bbb_ref,                    # clf_model1 stand-in -> 2048 (K chunk)
                  w1_ref, b1_ref,                      # fc1: Linear(2048,512) (K chunk of rows)
                  wm1_ref, bm1_ref, wm2_ref, bm2_ref,  # clf_model2 MLP -> 512
                  w2a1_ref, w2a2_ref, b2a_ref,         # fc2[0]: Linear(1024,512) split halves
                  w2b_ref, b2b_ref,                    # fc2[3]: Linear(512,2) padded to 128 lanes
                  out_ref,
                  f1_acc):                             # VMEM scratch (TB, 512) f32
    f32 = jnp.float32
    bf16 = jnp.bfloat16
    k = pl.program_id(1)
    nk = pl.num_programs(1)

    @pl.when(k == 0)
    def _():
        f1_acc[...] = jnp.zeros_like(f1_acc)

    # --- clf_model1 (ResNet50 backbone, fc=Identity) stand-in, K-chunked ---
    # TODO(synk): full ResNet50 conv backbone not reproduced; a single linear
    # projection of the flattened image to the 2048-d feature space stands in.
    img_bf = img_ref[...].astype(bf16)
    feat1_chunk = (jnp.dot(img_bf, wbb_ref[...], preferred_element_type=f32)
                   + bbb_ref[...])

    # --- fc1 = Linear(2048, 512): accumulate this K chunk's contribution ---
    f1_acc[...] += jnp.dot(feat1_chunk.astype(bf16), w1_ref[...],
                           preferred_element_type=f32)

    @pl.when(k == nk - 1)
    def _():
        # fc1 bias + ReLU
        f1 = jnp.maximum(f1_acc[...] + b1_ref[...], 0.0)

        # --- clf_model2 (MLP on seq) -> 512 features ---
        h = jnp.maximum(
            jnp.dot(seq_ref[...].astype(bf16), wm1_ref[...],
                    preferred_element_type=f32) + bm1_ref[...], 0.0)
        f2 = jnp.dot(h.astype(bf16), wm2_ref[...],
                     preferred_element_type=f32) + bm2_ref[...]

        # --- F.normalize(p=2, dim=1): x * rsqrt(max(||x||^2, eps^2)) ---
        inv1 = lax.rsqrt(jnp.maximum(jnp.sum(f1 * f1, axis=1, keepdims=True),
                                     EPS * EPS))
        inv2 = lax.rsqrt(jnp.maximum(jnp.sum(f2 * f2, axis=1, keepdims=True),
                                     EPS * EPS))
        f1n = f1 * inv1
        f2n = f2 * inv2

        # --- fc2[0]: Linear(1024, 512) on cat([f1n, f2n], dim=1), as two
        #     split-weight matmuls (exactly equivalent to the concat). ---
        h2 = (jnp.dot(f1n.astype(bf16), w2a1_ref[...], preferred_element_type=f32)
              + jnp.dot(f2n.astype(bf16), w2a2_ref[...], preferred_element_type=f32)
              + b2a_ref[...])
        # fc2[1]: Dropout(p=0.5) -- identity at eval time ("val_" script).
        # fc2[2]: ReLU
        h2 = jnp.maximum(h2, 0.0)

        # --- fc2[3]: Linear(512, 2), zero-padded to 128 output lanes ---
        out_ref[...] = (jnp.dot(h2.astype(bf16), w2b_ref[...],
                                preferred_element_type=f32)
                        + b2b_ref[...]).astype(out_ref.dtype)


def fusion_forward(img, seq, params, *, tb=8, tk=TK):
    """img: (B, C, H, W) NCHW float32; seq: (B, S) float32 -> (B, 2) logits."""
    B = img.shape[0]
    img_flat = img.reshape(B, -1).astype(jnp.float32)
    seq = seq.astype(jnp.float32)
    F_img = img_flat.shape[1]
    S = seq.shape[1]

    # Pad batch up to a multiple of the batch tile (sublane-aligned).
    Bp = ((B + tb - 1) // tb) * tb
    if Bp != B:
        img_flat = jnp.pad(img_flat, ((0, Bp - B), (0, 0)))
        seq = jnp.pad(seq, ((0, Bp - B), (0, 0)))

    bf16 = jnp.bfloat16
    # Weights in bf16 (halve HBM traffic); biases stay f32.
    wbb = params["wbb"].astype(bf16)
    w1 = params["w1"].astype(bf16)
    wm1 = params["wm1"].astype(bf16)
    wm2 = params["wm2"].astype(bf16)
    w2a1 = params["w2a1"].astype(bf16)
    w2a2 = params["w2a2"].astype(bf16)
    # Pad the tiny head (512,2) to (512,128) so the output store is lane-dense.
    w2b = jnp.zeros((HID1, OUT_PAD), bf16).at[:, :2].set(params["w2b"].astype(bf16))
    b2b = jnp.zeros((1, OUT_PAD), jnp.float32).at[:, :2].set(params["b2b"])

    nb = Bp // tb
    assert BACKBONE_DIM % tk == 0
    nk = BACKBONE_DIM // tk

    in_specs = [
        pl.BlockSpec((tb, F_img), lambda b, k: (b, 0)),            # img (f32)
        pl.BlockSpec((tb, S), lambda b, k: (b, 0)),                # seq (f32)
        pl.BlockSpec((F_img, tk), lambda b, k: (0, k)),            # wbb chunk
        pl.BlockSpec((1, tk), lambda b, k: (0, k)),                # bbb chunk
        pl.BlockSpec((tk, HID1), lambda b, k: (k, 0)),             # w1 chunk
        pl.BlockSpec((1, HID1), lambda b, k: (0, 0)),              # b1
        pl.BlockSpec((S, MLP_HID), lambda b, k: (0, 0)),           # wm1
        pl.BlockSpec((1, MLP_HID), lambda b, k: (0, 0)),           # bm1
        pl.BlockSpec((MLP_HID, MLP_OUT), lambda b, k: (0, 0)),     # wm2
        pl.BlockSpec((1, MLP_OUT), lambda b, k: (0, 0)),           # bm2
        pl.BlockSpec((HID1, HID1), lambda b, k: (0, 0)),           # w2a1
        pl.BlockSpec((MLP_OUT, HID1), lambda b, k: (0, 0)),        # w2a2
        pl.BlockSpec((1, HID1), lambda b, k: (0, 0)),              # b2a
        pl.BlockSpec((HID1, OUT_PAD), lambda b, k: (0, 0)),        # w2b (padded)
        pl.BlockSpec((1, OUT_PAD), lambda b, k: (0, 0)),           # b2b (padded)
    ]
    out_specs = pl.BlockSpec((tb, OUT_PAD), lambda b, k: (b, 0))

    out_padded = pl.pallas_call(
        fusion_kernel,
        out_shape=jax.ShapeDtypeStruct((Bp, OUT_PAD), jnp.float32),
        grid_spec=pltpu.PrefetchScalarGridSpec(
            num_scalar_prefetch=0,
            grid=(nb, nk),
            in_specs=in_specs,
            out_specs=out_specs,
            scratch_shapes=[pltpu.VMEM((tb, HID1), jnp.float32)],
        ),
        compiler_params=pltpu.CompilerParams(
            dimension_semantics=("parallel", "arbitrary"),
            vmem_limit_bytes=32 << 20,
        ),
    )(img_flat, seq,
      wbb, params["bbb"], w1, params["b1"],
      wm1, params["bm1"], wm2, params["bm2"],
      w2a1, w2a2, params["b2a"], w2b, b2b)

    return out_padded[:B, :2]


def ref_forward(img, seq, params):
    """Pure-JAX f32 reference of the same stand-in model."""
    B = img.shape[0]
    x = img.reshape(B, -1).astype(jnp.float32)
    feat1 = x @ params["wbb"] + params["bbb"]
    f1 = jnp.maximum(feat1 @ params["w1"] + params["b1"], 0.0)
    h = jnp.maximum(seq @ params["wm1"] + params["bm1"], 0.0)
    f2 = h @ params["wm2"] + params["bm2"]
    f1n = f1 / jnp.maximum(jnp.linalg.norm(f1, axis=1, keepdims=True), EPS)
    f2n = f2 / jnp.maximum(jnp.linalg.norm(f2, axis=1, keepdims=True), EPS)
    h2 = jnp.maximum(f1n @ params["w2a1"] + f2n @ params["w2a2"] + params["b2a"], 0.0)
    return h2 @ params["w2b"] + params["b2b"]


def init_params(key, img_feat_in, seq_in):
    """Deterministic synthetic parameters matching the module's fixed widths."""
    ks = jax.random.split(key, 16)

    def dense(k, fan_in, fan_out):
        scale = 1.0 / jnp.sqrt(jnp.float32(fan_in))
        return jax.random.normal(k, (fan_in, fan_out), jnp.float32) * scale

    def bias(k, fan_out):
        return jax.random.normal(k, (1, fan_out), jnp.float32) * 0.01

    return {
        # clf_model1 stand-in: flattened image -> 2048 (ResNet50 feature dim)
        "wbb": dense(ks[0], img_feat_in, BACKBONE_DIM), "bbb": bias(ks[1], BACKBONE_DIM),
        # clf_model2 MLP: seq -> 256 -> 512
        "wm1": dense(ks[2], seq_in, MLP_HID), "bm1": bias(ks[3], MLP_HID),
        "wm2": dense(ks[4], MLP_HID, MLP_OUT), "bm2": bias(ks[5], MLP_OUT),
        # fc1: Linear(2048, 512)
        "w1": dense(ks[6], BACKBONE_DIM, HID1), "b1": bias(ks[7], HID1),
        # fc2[0]: Linear(1024, 512) stored as two 512x512 halves (concat split)
        "w2a1": dense(ks[8], HID1, HID1),
        "w2a2": dense(ks[9], MLP_OUT, HID1),
        "b2a": bias(ks[10], HID1),
        # fc2[3]: Linear(512, 2)
        "w2b": dense(ks[11], HID1, 2), "b2b": bias(ks[12], 2),
    }


if __name__ == "__main__":
    key = jax.random.PRNGKey(0)
    k_img, k_seq, k_par = jax.random.split(key, 3)

    B, C, H, W = 2, 3, 16, 16   # NCHW image input
    S = 8                       # sequence feature width for clf_model2

    img1 = jax.random.normal(k_img, (B, C, H, W), jnp.float32)
    seq = jax.random.normal(k_seq, (B, S), jnp.float32)
    params = init_params(k_par, C * H * W, S)

    out = fusion_forward(img1, seq, params)
    out = jax.block_until_ready(out)
    assert out.shape == (B, 2) and out.dtype == jnp.float32

    # Loose tolerance: kernel uses bf16 weights / matmul operands, ref is f32.
    ref = jax.block_until_ready(ref_forward(img1, seq, params))
    import numpy as np
    np.testing.assert_allclose(np.asarray(out), np.asarray(ref), rtol=0.1, atol=0.03)

    print("KERNEL_OK")
</pallas_src>

<mosaic_0001>
module attributes {stable_mosaic.version = 11 : i64} {
  func.func @fusion_kernel(%arg0: i32, %arg1: i32, %arg2: memref<8x768xf32, #tpu.memory_space<vmem>>, %arg3: memref<8x8xf32, #tpu.memory_space<vmem>>, %arg4: memref<768x512xbf16, #tpu.memory_space<vmem>>, %arg5: memref<1x512xf32, #tpu.memory_space<vmem>>, %arg6: memref<512x512xbf16, #tpu.memory_space<vmem>>, %arg7: memref<1x512xf32, #tpu.memory_space<vmem>>, %arg8: memref<8x256xbf16, #tpu.memory_space<vmem>>, %arg9: memref<1x256xf32, #tpu.memory_space<vmem>>, %arg10: memref<256x512xbf16, #tpu.memory_space<vmem>>, %arg11: memref<1x512xf32, #tpu.memory_space<vmem>>, %arg12: memref<512x512xbf16, #tpu.memory_space<vmem>>, %arg13: memref<512x512xbf16, #tpu.memory_space<vmem>>, %arg14: memref<1x512xf32, #tpu.memory_space<vmem>>, %arg15: memref<512x128xbf16, #tpu.memory_space<vmem>>, %arg16: memref<1x128xf32, #tpu.memory_space<vmem>>, %arg17: memref<8x128xf32, #tpu.memory_space<vmem>>, %arg18: memref<8x512xf32, #tpu.memory_space<vmem>>) attributes {dimension_semantics = [#tpu.dimension_semantics<parallel>, #tpu.dimension_semantics<arbitrary>], iteration_bounds = array<i64: 1, 4>, scalar_prefetch = 0 : i64, scratch_operands = 1 : i64, tpu.core_type = #tpu.core_type<tc>, window_params = [{transform_indices = @transform_0, window_bounds = array<i64: 8, 768>}, {transform_indices = @transform_1, window_bounds = array<i64: 8, 8>}, {transform_indices = @transform_2, window_bounds = array<i64: 768, 512>}, {transform_indices = @transform_3, window_bounds = array<i64: 1, 512>}, {transform_indices = @transform_4, window_bounds = array<i64: 512, 512>}, {pipeline_mode = #tpu.pipeline_mode<synchronous>, transform_indices = @transform_5, window_bounds = array<i64: 1, 512>}, {pipeline_mode = #tpu.pipeline_mode<synchronous>, transform_indices = @transform_6, window_bounds = array<i64: 8, 256>}, {pipeline_mode = #tpu.pipeline_mode<synchronous>, transform_indices = @transform_7, window_bounds = array<i64: 1, 256>}, {pipeline_mode = #tpu.pipeline_mode<synchronous>, transform_indices = @transform_8, window_bounds = array<i64: 256, 512>}, {pipeline_mode = #tpu.pipeline_mode<synchronous>, transform_indices = @transform_9, window_bounds = array<i64: 1, 512>}, {pipeline_mode = #tpu.pipeline_mode<synchronous>, transform_indices = @transform_10, window_bounds = array<i64: 512, 512>}, {pipeline_mode = #tpu.pipeline_mode<synchronous>, transform_indices = @transform_11, window_bounds = array<i64: 512, 512>}, {pipeline_mode = #tpu.pipeline_mode<synchronous>, transform_indices = @transform_12, window_bounds = array<i64: 1, 512>}, {pipeline_mode = #tpu.pipeline_mode<synchronous>, transform_indices = @transform_13, window_bounds = array<i64: 512, 128>}, {pipeline_mode = #tpu.pipeline_mode<synchronous>, transform_indices = @transform_14, window_bounds = array<i64: 1, 128>}, {transform_indices = @transform_15, window_bounds = array<i64: 8, 128>}]} {
    %c0_i32 = arith.constant 0 : i32
    %0 = arith.cmpi eq, %arg1, %c0_i32 : i32
    %1 = arith.extui %0 : i1 to i32
    %c0_i32_0 = arith.constant 0 : i32
    %2 = arith.cmpi ne, %1, %c0_i32_0 : i32
    scf.if %2 {
      %cst_14 = arith.constant 0.000000e+00 : f32
      %19 = vector.broadcast %cst_14 : f32 to vector<8x512xf32>
      %c0_15 = arith.constant 0 : index
      %c0_16 = arith.constant 0 : index
      %20 = vector.load %arg18[%c0_15, %c0_16] : memref<8x512xf32, #tpu.memory_space<vmem>>, vector<8x512xf32>
      tpu.vector_store %arg18[%c0_15, %c0_16], %19 {strides = array<i32>} : memref<8x512xf32, #tpu.memory_space<vmem>>, vector<8x512xf32>,
    } else {
    }
    %c0 = arith.constant 0 : index
    %c0_1 = arith.constant 0 : index
    %3 = vector.load %arg2[%c0, %c0_1] : memref<8x768xf32, #tpu.memory_space<vmem>>, vector<8x768xf32>
    %4 = arith.truncf %3 : vector<8x768xf32> to vector<8x768xbf16>
    %c0_2 = arith.constant 0 : index
    %c0_3 = arith.constant 0 : index
    %5 = vector.load %arg4[%c0_2, %c0_3] : memref<768x512xbf16, #tpu.memory_space<vmem>>, vector<768x512xbf16>
    %cst = arith.constant dense<0.000000e+00> : vector<8x512xf32>
    %6 = tpu.matmul %4, %5, %cst {dimension_numbers = #tpu.dot_dimension_numbers<[1], [0], [0], [1], [0, 0, 1, 1], [], []>} : vector<8x768xbf16>, vector<768x512xbf16>, vector<8x512xf32> -> vector<8x512xf32>
    %c0_4 = arith.constant 0 : index
    %c0_5 = arith.constant 0 : index
    %7 = vector.load %arg5[%c0_4, %c0_5] : memref<1x512xf32, #tpu.memory_space<vmem>>, vector<1x512xf32>
    %8 = vector.broadcast %7 : vector<1x512xf32> to vector<8x512xf32>
    %9 = arith.addf %6, %8 : vector<8x512xf32>
    %c0_6 = arith.constant 0 : index
    %c0_7 = arith.constant 0 : index
    %10 = vector.load %arg18[%c0_6, %c0_7] : memref<8x512xf32, #tpu.memory_space<vmem>>, vector<8x512xf32>
    %11 = arith.truncf %9 : vector<8x512xf32> to vector<8x512xbf16>
    %c0_8 = arith.constant 0 : index
    %c0_9 = arith.constant 0 : index
    %12 = vector.load %arg6[%c0_8, %c0_9] : memref<512x512xbf16, #tpu.memory_space<vmem>>, vector<512x512xbf16>
    %cst_10 = arith.constant dense<0.000000e+00> : vector<8x512xf32>
    %13 = tpu.matmul %11, %12, %cst_10 {dimension_numbers = #tpu.dot_dimension_numbers<[1], [0], [0], [1], [0, 0, 1, 1], [], []>} : vector<8x512xbf16>, vector<512x512xbf16>, vector<8x512xf32> -> vector<8x512xf32>
    %14 = arith.addf %10, %13 : vector<8x512xf32>
    %c0_11 = arith.constant 0 : index
    %c0_12 = arith.constant 0 : index
    %15 = vector.load %arg18[%c0_11, %c0_12] : memref<8x512xf32, #tpu.memory_space<vmem>>, vector<8x512xf32>
    tpu.vector_store %arg18[%c0_11, %c0_12], %14 {strides = array<i32>} : memref<8x512xf32, #tpu.memory_space<vmem>>, vector<8x512xf32>,
    %c3_i32 = arith.constant 3 : i32
    %16 = arith.cmpi eq, %arg1, %c3_i32 : i32
    %17 = arith.extui %16 : i1 to i32
    %c0_i32_13 = arith.constant 0 : i32
    %18 = arith.cmpi ne, %17, %c0_i32_13 : i32
    scf.if %18 {
      %c0_14 = arith.constant 0 : index
      %c0_15 = arith.constant 0 : index
      %19 = vector.load %arg18[%c0_14, %c0_15] : memref<8x512xf32, #tpu.memory_space<vmem>>, vector<8x512xf32>
      %c0_16 = arith.constant 0 : index
      %c0_17 = arith.constant 0 : index
      %20 = vector.load %arg7[%c0_16, %c0_17] : memref<1x512xf32, #tpu.memory_space<vmem>>, vector<1x512xf32>
      %21 = vector.broadcast %20 : vector<1x512xf32> to vector<8x512xf32>
      %22 = arith.addf %19, %21 : vector<8x512xf32>
      %cst_18 = arith.constant 0.000000e+00 : f32
      %23 = vector.broadcast %cst_18 : f32 to vector<8x512xf32>
      %24 = arith.maximumf %22, %23 : vector<8x512xf32>
      %c0_19 = arith.constant 0 : index
      %c0_20 = arith.constant 0 : index
      %25 = vector.load %arg3[%c0_19, %c0_20] : memref<8x8xf32, #tpu.memory_space<vmem>>, vector<8x8xf32>
      %26 = arith.truncf %25 : vector<8x8xf32> to vector<8x8xbf16>
      %c0_21 = arith.constant 0 : index
      %c0_22 = arith.constant 0 : index
      %27 = vector.load %arg8[%c0_21, %c0_22] : memref<8x256xbf16, #tpu.memory_space<vmem>>, vector<8x256xbf16>
      %cst_23 = arith.constant dense<0.000000e+00> : vector<8x256xf32>
      %28 = tpu.matmul %26, %27, %cst_23 {dimension_numbers = #tpu.dot_dimension_numbers<[1], [0], [0], [1], [0, 0, 1, 1], [], []>} : vector<8x8xbf16>, vector<8x256xbf16>, vector<8x256xf32> -> vector<8x256xf32>
      %c0_24 = arith.constant 0 : index
      %c0_25 = arith.constant 0 : index
      %29 = vector.load %arg9[%c0_24, %c0_25] : memref<1x256xf32, #tpu.memory_space<vmem>>, vector<1x256xf32>
      %30 = vector.broadcast %29 : vector<1x256xf32> to vector<8x256xf32>
      %31 = arith.addf %28, %30 : vector<8x256xf32>
      %cst_26 = arith.constant 0.000000e+00 : f32
      %32 = vector.broadcast %cst_26 : f32 to vector<8x256xf32>
      %33 = arith.maximumf %31, %32 : vector<8x256xf32>
      %34 = arith.truncf %33 : vector<8x256xf32> to vector<8x256xbf16>
      %c0_27 = arith.constant 0 : index
      %c0_28 = arith.constant 0 : index
      %35 = vector.load %arg10[%c0_27, %c0_28] : memref<256x512xbf16, #tpu.memory_space<vmem>>, vector<256x512xbf16>
      %cst_29 = arith.constant dense<0.000000e+00> : vector<8x512xf32>
      %36 = tpu.matmul %34, %35, %cst_29 {dimension_numbers = #tpu.dot_dimension_numbers<[1], [0], [0], [1], [0, 0, 1, 1], [], []>} : vector<8x256xbf16>, vector<256x512xbf16>, vector<8x512xf32> -> vector<8x512xf32>
      %c0_30 = arith.constant 0 : index
      %c0_31 = arith.constant 0 : index
      %37 = vector.load %arg11[%c0_30, %c0_31] : memref<1x512xf32, #tpu.memory_space<vmem>>, vector<1x512xf32>
      %38 = vector.broadcast %37 : vector<1x512xf32> to vector<8x512xf32>
      %39 = arith.addf %36, %38 : vector<8x512xf32>
      %40 = arith.mulf %24, %24 : vector<8x512xf32>
      %cst_32 = arith.constant dense<0.000000e+00> : vector<8xf32>
      %41 = vector.multi_reduction <add>, %40, %cst_32 [1] : vector<8x512xf32> to vector<8xf32>
      %42 = vector.shape_cast %41 : vector<8xf32> to vector<8x1xf32>
      %cst_33 = arith.constant 1.000000e-24 : f32
      %43 = vector.broadcast %cst_33 : f32 to vector<8x1xf32>
      %44 = arith.maximumf %42, %43 : vector<8x1xf32>
      %45 = math.rsqrt %44 : vector<8x1xf32>
      %46 = arith.mulf %39, %39 : vector<8x512xf32>
      %cst_34 = arith.constant dense<0.000000e+00> : vector<8xf32>
      %47 = vector.multi_reduction <add>, %46, %cst_34 [1] : vector<8x512xf32> to vector<8xf32>
      %48 = vector.shape_cast %47 : vector<8xf32> to vector<8x1xf32>
      %cst_35 = arith.constant 1.000000e-24 : f32
      %49 = vector.broadcast %cst_35 : f32 to vector<8x1xf32>
      %50 = arith.maximumf %48, %49 : vector<8x1xf32>
      %51 = math.rsqrt %50 : vector<8x1xf32>
      %52 = vector.broadcast %45 : vector<8x1xf32> to vector<8x512xf32>
      %53 = arith.mulf %24, %52 : vector<8x512xf32>
      %54 = vector.broadcast %51 : vector<8x1xf32> to vector<8x512xf32>
      %55 = arith.mulf %39, %54 : vector<8x512xf32>
      %56 = arith.truncf %53 : vector<8x512xf32> to vector<8x512xbf16>
      %c0_36 = arith.constant 0 : index
      %c0_37 = arith.constant 0 : index
      %57 = vector.load %arg12[%c0_36, %c0_37] : memref<512x512xbf16, #tpu.memory_space<vmem>>, vector<512x512xbf16>
      %cst_38 = arith.constant dense<0.000000e+00> : vector<8x512xf32>
      %58 = tpu.matmul %56, %57, %cst_38 {dimension_numbers = #tpu.dot_dimension_numbers<[1], [0], [0], [1], [0, 0, 1, 1], [], []>} : vector<8x512xbf16>, vector<512x512xbf16>, vector<8x512xf32> -> vector<8x512xf32>
      %59 = arith.truncf %55 : vector<8x512xf32> to vector<8x512xbf16>
      %c0_39 = arith.constant 0 : index
      %c0_40 = arith.constant 0 : index
      %60 = vector.load %arg13[%c0_39, %c0_40] : memref<512x512xbf16, #tpu.memory_space<vmem>>, vector<512x512xbf16>
      %cst_41 = arith.constant dense<0.000000e+00> : vector<8x512xf32>
      %61 = tpu.matmul %59, %60, %cst_41 {dimension_numbers = #tpu.dot_dimension_numbers<[1], [0], [0], [1], [0, 0, 1, 1], [], []>} : vector<8x512xbf16>, vector<512x512xbf16>, vector<8x512xf32> -> vector<8x512xf32>
      %62 = arith.addf %58, %61 : vector<8x512xf32>
      %c0_42 = arith.constant 0 : index
      %c0_43 = arith.constant 0 : index
      %63 = vector.load %arg14[%c0_42, %c0_43] : memref<1x512xf32, #tpu.memory_space<vmem>>, vector<1x512xf32>
      %64 = vector.broadcast %63 : vector<1x512xf32> to vector<8x512xf32>
      %65 = arith.addf %62, %64 : vector<8x512xf32>
      %cst_44 = arith.constant 0.000000e+00 : f32
      %66 = vector.broadcast %cst_44 : f32 to vector<8x512xf32>
      %67 = arith.maximumf %65, %66 : vector<8x512xf32>
      %68 = arith.truncf %67 : vector<8x512xf32> to vector<8x512xbf16>
      %c0_45 = arith.constant 0 : index
      %c0_46 = arith.constant 0 : index
      %69 = vector.load %arg15[%c0_45, %c0_46] : memref<512x128xbf16, #tpu.memory_space<vmem>>, vector<512x128xbf16>
      %cst_47 = arith.constant dense<0.000000e+00> : vector<8x128xf32>
      %70 = tpu.matmul %68, %69, %cst_47 {dimension_numbers = #tpu.dot_dimension_numbers<[1], [0], [0], [1], [0, 0, 1, 1], [], []>} : vector<8x512xbf16>, vector<512x128xbf16>, vector<8x128xf32> -> vector<8x128xf32>
      %c0_48 = arith.constant 0 : index
      %c0_49 = arith.constant 0 : index
      %71 = vector.load %arg16[%c0_48, %c0_49] : memref<1x128xf32, #tpu.memory_space<vmem>>, vector<1x128xf32>
      %72 = vector.broadcast %71 : vector<1x128xf32> to vector<8x128xf32>
      %73 = arith.addf %70, %72 : vector<8x128xf32>
      %c0_50 = arith.constant 0 : index
      %c0_51 = arith.constant 0 : index
      %74 = vector.load %arg17[%c0_50, %c0_51] : memref<8x128xf32, #tpu.memory_space<vmem>>, vector<8x128xf32>
      tpu.vector_store %arg17[%c0_50, %c0_51], %73 {strides = array<i32>} : memref<8x128xf32, #tpu.memory_space<vmem>>, vector<8x128xf32>,
    } else {
    }
    return
  }
  func.func @transform_0(%arg0: i32, %arg1: i32) -> (i32, i32) {
    %c0_i32 = arith.constant 0 : i32
    %c0_i32_0 = arith.constant 0 : i32
    return %arg0, %c0_i32 : i32, i32
  }
  func.func @transform_1(%arg0: i32, %arg1: i32) -> (i32, i32) {
    %c0_i32 = arith.constant 0 : i32
    %c0_i32_0 = arith.constant 0 : i32
    return %arg0, %c0_i32 : i32, i32
  }
  func.func @transform_2(%arg0: i32, %arg1: i32) -> (i32, i32) {
    %c0_i32 = arith.constant 0 : i32
    %c0_i32_0 = arith.constant 0 : i32
    return %c0_i32, %arg1 : i32, i32
  }
  func.func @transform_3(%arg0: i32, %arg1: i32) -> (i32, i32) {
    %c0_i32 = arith.constant 0 : i32
    %c0_i32_0 = arith.constant 0 : i32
    return %c0_i32, %arg1 : i32, i32
  }
  func.func @transform_4(%arg0: i32, %arg1: i32) -> (i32, i32) {
    %c0_i32 = arith.constant 0 : i32
    %c0_i32_0 = arith.constant 0 : i32
    return %arg1, %c0_i32 : i32, i32
  }
  func.func @transform_5(%arg0: i32, %arg1: i32) -> (i32, i32) {
    %c0_i32 = arith.constant 0 : i32
    %c0_i32_0 = arith.constant 0 : i32
    %c0_i32_1 = arith.constant 0 : i32
    return %c0_i32, %c0_i32_0 : i32, i32
  }
  func.func @transform_6(%arg0: i32, %arg1: i32) -> (i32, i32) {
    %c0_i32 = arith.constant 0 : i32
    %c0_i32_0 = arith.constant 0 : i32
    %c0_i32_1 = arith.constant 0 : i32
    return %c0_i32, %c0_i32_0 : i32, i32
  }
  func.func @transform_7(%arg0: i32, %arg1: i32) -> (i32, i32) {
    %c0_i32 = arith.constant 0 : i32
    %c0_i32_0 = arith.constant 0 : i32
    %c0_i32_1 = arith.constant 0 : i32
    return %c0_i32, %c0_i32_0 : i32, i32
  }
  func.func @transform_8(%arg0: i32, %arg1: i32) -> (i32, i32) {
    %c0_i32 = arith.constant 0 : i32
    %c0_i32_0 = arith.constant 0 : i32
    %c0_i32_1 = arith.constant 0 : i32
    return %c0_i32, %c0_i32_0 : i32, i32
  }
  func.func @transform_9(%arg0: i32, %arg1: i32) -> (i32, i32) {
    %c0_i32 = arith.constant 0 : i32
    %c0_i32_0 = arith.constant 0 : i32
    %c0_i32_1 = arith.constant 0 : i32
    return %c0_i32, %c0_i32_0 : i32, i32
  }
  func.func @transform_10(%arg0: i32, %arg1: i32) -> (i32, i32) {
    %c0_i32 = arith.constant 0 : i32
    %c0_i32_0 = arith.constant 0 : i32
    %c0_i32_1 = arith.constant 0 : i32
    return %c0_i32, %c0_i32_0 : i32, i32
  }
  func.func @transform_11(%arg0: i32, %arg1: i32) -> (i32, i32) {
    %c0_i32 = arith.constant 0 : i32
    %c0_i32_0 = arith.constant 0 : i32
    %c0_i32_1 = arith.constant 0 : i32
    return %c0_i32, %c0_i32_0 : i32, i32
  }
  func.func @transform_12(%arg0: i32, %arg1: i32) -> (i32, i32) {
    %c0_i32 = arith.constant 0 : i32
    %c0_i32_0 = arith.constant 0 : i32
    %c0_i32_1 = arith.constant 0 : i32
    return %c0_i32, %c0_i32_0 : i32, i32
  }
  func.func @transform_13(%arg0: i32, %arg1: i32) -> (i32, i32) {
    %c0_i32 = arith.constant 0 : i32
    %c0_i32_0 = arith.constant 0 : i32
    %c0_i32_1 = arith.constant 0 : i32
    return %c0_i32, %c0_i32_0 : i32, i32
  }
  func.func @transform_14(%arg0: i32, %arg1: i32) -> (i32, i32) {
    %c0_i32 = arith.constant 0 : i32
    %c0_i32_0 = arith.constant 0 : i32
    %c0_i32_1 = arith.constant 0 : i32
    return %c0_i32, %c0_i32_0 : i32, i32
  }
  func.func @transform_15(%arg0: i32, %arg1: i32) -> (i32, i32) {
    %c0_i32 = arith.constant 0 : i32
    %c0_i32_0 = arith.constant 0 : i32
    return %arg0, %c0_i32 : i32, i32
  }
}

</mosaic_0001>

<llo_original>
// kernel: tpu_custom_call.1
$region0: #{tpu_custom_call.1}
  #allocation0 [shape = 'u32[]', space=smem, size = 0x4, offset = 0x4, fixed_abs, tag = 'smem constant byte address 0x4 - core index']
  #allocation1 [shape = 'u32[72,128]{1,0:T(1,128)}', space=vmem, size = 0x9000, scoped, tag = 'internal scratch']
  #allocation2 [shape = 'f32[8,512]{1,0:T(8,128)}', space=vmem, size = 0x4000, scoped, tag = 'scratch operand']
  %s0 = inlined_call_operand.hbm [shape: f32[8,768], index: 0, kind: input, shape index: {}]
  %s1 = inlined_call_operand.hbm [shape: f32[8,8], index: 1, kind: input, shape index: {}]
  %s2 = inlined_call_operand.hbm [shape: bf16[768,2048], index: 2, kind: input, shape index: {}]
  %s3 = inlined_call_operand.hbm [shape: f32[1,2048], index: 3, kind: input, shape index: {}]
  %s4 = inlined_call_operand.hbm [shape: bf16[2048,512], index: 4, kind: input, shape index: {}]
  %s5 = inlined_call_operand.hbm [shape: f32[1,512], index: 5, kind: input, shape index: {}]
  %s6 = inlined_call_operand.hbm [shape: bf16[8,256], index: 6, kind: input, shape index: {}]
  %s7 = inlined_call_operand.hbm [shape: f32[1,256], index: 7, kind: input, shape index: {}]
  %s8 = inlined_call_operand.hbm [shape: bf16[256,512], index: 8, kind: input, shape index: {}]
  %s9 = inlined_call_operand.hbm [shape: f32[1,512], index: 9, kind: input, shape index: {}]
  %s10 = inlined_call_operand.hbm [shape: bf16[512,512], index: 10, kind: input, shape index: {}]
  %s11 = inlined_call_operand.hbm [shape: bf16[512,512], index: 11, kind: input, shape index: {}]
  %s12 = inlined_call_operand.hbm [shape: f32[1,512], index: 12, kind: input, shape index: {}]
  %s13 = inlined_call_operand.hbm [shape: bf16[512,128], index: 13, kind: input, shape index: {}]
  %s14 = inlined_call_operand.hbm [shape: f32[1,128], index: 14, kind: input, shape index: {}]
  %s15 = inlined_call_operand.hbm [shape: f32[8,128], index: 15, kind: output, shape index: {}]
  %s16 = sld [smem:[#allocation0]]
  $region161: #{tpu_custom_call.1} parent=0
    _
  %s18 = ssub.s32 1, %s16
  %s19 = scalar_select 0, %s18, %s16
  $region1: #{tpu_custom_call.1} parent=0
    #allocation3 [shape = 'u8[24576]{0}', space=vmem, size = 0x6000, scoped, tag = 'input window, operand 0, single buffered']
    #allocation4 [shape = 's32[2]{0}', space=sflag, size = 0x8, scoped, tag = 'scoped memory for tpu_custom_call.1']
    #allocation5 [shape = 's32[2]{0}', space=sflag, size = 0x8, scoped, tag = 'scoped memory for tpu_custom_call.1']
    #allocation6 [shape = 'u8[4096]{0}', space=vmem, size = 0x1000, scoped, tag = 'input window, operand 1, single buffered']
    #allocation7 [shape = 's32[1]{0}', space=sflag, size = 0x4, scoped, tag = 'scoped memory for tpu_custom_call.1']
    #allocation8 [shape = 'u8[1572864]{0}', space=vmem, size = 0x180000, scoped, tag = 'input window, operand 2']
    #allocation9 [shape = 'u8[4096]{0}', space=vmem, size = 0x1000, scoped, tag = 'input window, operand 3']
    #allocation10 [shape = 'u8[1048576]{0}', space=vmem, size = 0x100000, scoped, tag = 'input window, operand 4']
    #allocation11 [shape = 'u8[2048]{0}', space=vmem, size = 0x800, scoped, tag = 'input window, operand 5, single buffered']
    #allocation12 [shape = 'u8[4096]{0}', space=vmem, size = 0x1000, scoped, tag = 'input window, operand 6, single buffered']
    #allocation13 [shape = 's32[1]{0}', space=sflag, size = 0x4, scoped, tag = 'scoped memory for tpu_custom_call.1']
    #allocation14 [shape = 'u8[1024]{0}', space=vmem, size = 0x400, scoped, tag = 'input window, operand 7, single buffered']
    #allocation15 [shape = 'u8[262144]{0}', space=vmem, size = 0x40000, scoped, tag = 'input window, operand 8, single buffered']
    #allocation16 [shape = 's32[1]{0}', space=sflag, size = 0x4, scoped, tag = 'scoped memory for tpu_custom_call.1']
    #allocation17 [shape = 'u8[2048]{0}', space=vmem, size = 0x800, scoped, tag = 'input window, operand 9, single buffered']
    #allocation18 [shape = 'u8[524288]{0}', space=vmem, size = 0x80000, scoped, tag = 'input window, operand 10, single buffered']
    #allocation19 [shape = 's32[1]{0}', space=sflag, size = 0x4, scoped, tag = 'scoped memory for tpu_custom_call.1']
    #allocation20 [shape = 'u8[524288]{0}', space=vmem, size = 0x80000, scoped, tag = 'input window, operand 11, single buffered']
    #allocation21 [shape = 'u8[2048]{0}', space=vmem, size = 0x800, scoped, tag = 'input window, operand 12, single buffered']
    #allocation22 [shape = 's32[1]{0}', space=sflag, size = 0x4, scoped, tag = 'scoped memory for tpu_custom_call.1']
    #allocation23 [shape = 'u8[131072]{0}', space=vmem, size = 0x20000, scoped, tag = 'input window, operand 13, single buffered']
    #allocation24 [shape = 'u8[512]{0}', space=vmem, size = 0x400, scoped, tag = 'input window, operand 14, single buffered']
    #allocation25 [shape = 's32[1]{0}', space=sflag, size = 0x4, scoped, tag = 'scoped memory for tpu_custom_call.1']
    #allocation26 [shape = 'u8[4096]{0}', space=vmem, size = 0x1000, scoped, tag = 'output window, operand 0, single buffered']
    %20 = vsyncpa [#allocation4], 0
    %21 = vsyncpa [#allocation7], 0
    %22 = vsyncpa [#allocation13], 0
    %23 = vsyncpa [#allocation16], 0
    %24 = vsyncpa [#allocation19], 0
    %25 = vsyncpa [#allocation22], 0
    %26 = vsyncpa [#allocation25], 0
    %27 = vsyncpa [#allocation5], 0
    loop: start=0, step=1, limit=6
    $region2: #{tpu_custom_call.1} parent=1 // loop_pre_header
      _
    $region3: #{tpu_custom_call.1} parent=1 // loop_header
      %s29 = sphi 0, %s33
      %p30 = scmp.ge.s32.totalorder %s29, 6
      %s36 = sphi 0, %s48
      %s37 = sphi 0, %s44
      %s38 = sphi 0, %s36
      %s39 = sphi 0, %s37
      %s40 = sphi 0, %s38
      %s41 = sphi 0, %s39
      %s51 = sphi 0, %s53
      %s54 = sphi 0, %s51
      %s55 = sphi 0, %s54
      %s71 = sphi 0, %s55
      %s77 = sphi 0, %s79
      %s80 = sphi 0, %s77
      %s81 = sphi 0, %s80
      %s97 = sphi 0, %s81
      %s103 = sphi 0, %s105
      %s106 = sphi 0, %s103
      %s107 = sphi 0, %s106
      %s123 = sphi 0, %s107
      %s129 = sphi 0, %s131
      %s132 = sphi 0, %s129
      %s133 = sphi 0, %s132
      %s149 = sphi 0, %s133
      %s155 = sphi 0, %s157
      %s158 = sphi 0, %s155
      %s159 = sphi 0, %s158
      %s175 = sphi 0, %s159
      %s179 = sphi 0, %s179
      %s181 = sphi 0, %s179
      %s182 = sphi 0, %s181
      %s196 = sphi 0, %s182
      %s200 = sphi 0, %s200
      %s202 = sphi 0, %s200
      %s203 = sphi 0, %s202
      %s217 = sphi 0, %s203
      %s221 = sphi 0, %s221
      %s223 = sphi 0, %s221
      %s224 = sphi 0, %s223
      %s238 = sphi 0, %s224
      %s242 = sphi 0, %s242
      %s244 = sphi 0, %s242
      %s245 = sphi 0, %s244
      %s259 = sphi 0, %s245
      %s263 = sphi 0, %s263
      %s265 = sphi 0, %s263
      %s266 = sphi 0, %s265
      %s280 = sphi 0, %s266
      %s284 = sphi 0, %s284
      %s286 = sphi 0, %s284
      %s287 = sphi 0, %s286
      %s301 = sphi 0, %s287
      %s305 = sphi 0, %s305
      %s307 = sphi 0, %s305
      %s308 = sphi 0, %s307
      %s322 = sphi 0, %s308
      %s326 = sphi 0, %s326
      %s328 = sphi 0, %s326
      %s329 = sphi 0, %s328
      %s343 = sphi 0, %s329
      %s347 = sphi 0, %s347
      %s349 = sphi 0, %s347
      %s350 = sphi 0, %s349
      %s364 = sphi 0, %s350
      %s368 = sphi 0, %s368
      %s370 = sphi 0, %s368
      %s371 = sphi 0, %s370
      %s385 = sphi 0, %s371
      %s391 = sphi 0, %s393
      %s394 = sphi 0, %s391
      %s395 = sphi 0, %s394
      %s411 = sphi 0, %s395
    $region4: #{tpu_custom_call.1} parent=1 // loop_header_branch
      %32 = sbr.rel (%p30) target = $region8
    $region5: #{tpu_custom_call.1} parent=1 // loop_body
      %s34 = ssub.s32 %s29, 1
      %s35 = ssub.s32 %s29, 2
      %s42 = sadd.s32 1, %s37
      %p43 = scmp.ge.s32.totalorder %s42, 4
      %s44 = scalar_select %p43, 0, %s42
      %s45 = sadd.s32 1, %s36
      %s46 = scalar_select %p43, %s45, %s36
      %p47 = scmp.ge.s32.totalorder %s46, 1
      %s48 = scalar_select %p47, 0, %s46
      %s49 = ssub.s32 %s36, %s48
      %p50 = scmp.eq.s32.totalorder %s49, 0
      %s52 = sadd.s32 %s51, 1
      %s53 = scalar_select %p50, %s51, %s52
      %p56 = pneg %p50
      %p57 = scmp.eq.s32.totalorder %s29, 3
      %p58 = por %p56, %p57
      %p59 = scmp.ne.s32.totalorder %s51, %s54
      %p60 = scmp.eq.s32.totalorder %s29, 0
      %p61 = por %p59, %p60
      %p62 = scmp.ne.s32.totalorder %s51, %s54
      %p63 = scmp.eq.s32.totalorder %s34, 3
      %p64 = por %p62, %p63
      %p65 = scmp.ne.s32.totalorder %s54, %s55
      %p66 = scmp.eq.s32.totalorder %s34, 0
      %p67 = por %p65, %p66
      %p68 = scmp.ne.s32.totalorder %s54, %s55
      %p69 = scmp.eq.s32.totalorder %s35, 3
      %p70 = por %p68, %p69
      %p72 = scmp.ne.s32.totalorder %s55, %s71
      %p73 = scmp.eq.s32.totalorder %s35, 0
      %p74 = por %p72, %p73
      %s75 = ssub.s32 %s36, %s48
      %p76 = scmp.eq.s32.totalorder %s75, 0
      %s78 = sadd.s32 %s77, 1
      %s79 = scalar_select %p76, %s77, %s78
      %p82 = pneg %p76
      %p83 = scmp.eq.s32.totalorder %s29, 3
      %p84 = por %p82, %p83
      %p85 = scmp.ne.s32.totalorder %s77, %s80
      %p86 = scmp.eq.s32.totalorder %s29, 0
      %p87 = por %p85, %p86
      %p88 = scmp.ne.s32.totalorder %s77, %s80
      %p89 = scmp.eq.s32.totalorder %s34, 3
      %p90 = por %p88, %p89
      %p91 = scmp.ne.s32.totalorder %s80, %s81
      %p92 = scmp.eq.s32.totalorder %s34, 0
      %p93 = por %p91, %p92
      %p94 = scmp.ne.s32.totalorder %s80, %s81
      %p95 = scmp.eq.s32.totalorder %s35, 3
      %p96 = por %p94, %p95
      %p98 = scmp.ne.s32.totalorder %s81, %s97
      %p99 = scmp.eq.s32.totalorder %s35, 0
      %p100 = por %p98, %p99
      %s101 = ssub.s32 %s37, %s44
      %p102 = scmp.eq.s32.totalorder %s101, 0
      %s104 = sadd.s32 %s103, 1
      %s105 = scalar_select %p102, %s103, %s104
      %p108 = pneg %p102
      %p109 = scmp.eq.s32.totalorder %s29, 3
      %p110 = por %p108, %p109
      %p111 = scmp.ne.s32.totalorder %s103, %s106
      %p112 = scmp.eq.s32.totalorder %s29, 0
      %p113 = por %p111, %p112
      %p114 = scmp.ne.s32.totalorder %s103, %s106
      %p115 = scmp.eq.s32.totalorder %s34, 3
      %p116 = por %p114, %p115
      %p117 = scmp.ne.s32.totalorder %s106, %s107
      %p118 = scmp.eq.s32.totalorder %s34, 0
      %p119 = por %p117, %p118
      %p120 = scmp.ne.s32.totalorder %s106, %s107
      %p121 = scmp.eq.s32.totalorder %s35, 3
      %p122 = por %p120, %p121
      %p124 = scmp.ne.s32.totalorder %s107, %s123
      %p125 = scmp.eq.s32.totalorder %s35, 0
      %p126 = por %p124, %p125
      %s127 = ssub.s32 %s37, %s44
      %p128 = scmp.eq.s32.totalorder %s127, 0
      %s130 = sadd.s32 %s129, 1
      %s131 = scalar_select %p128, %s129, %s130
      %p134 = pneg %p128
      %p135 = scmp.eq.s32.totalorder %s29, 3
      %p136 = por %p134, %p135
      %p137 = scmp.ne.s32.totalorder %s129, %s132
      %p138 = scmp.eq.s32.totalorder %s29, 0
      %p139 = por %p137, %p138
      %p140 = scmp.ne.s32.totalorder %s129, %s132
      %p141 = scmp.eq.s32.totalorder %s34, 3
      %p142 = por %p140, %p141
      %p143 = scmp.ne.s32.totalorder %s132, %s133
      %p144 = scmp.eq.s32.totalorder %s34, 0
      %p145 = por %p143, %p144
      %p146 = scmp.ne.s32.totalorder %s132, %s133
      %p147 = scmp.eq.s32.totalorder %s35, 3
      %p148 = por %p146, %p147
      %p150 = scmp.ne.s32.totalorder %s133, %s149
      %p151 = scmp.eq.s32.totalorder %s35, 0
      %p152 = por %p150, %p151
      %s153 = ssub.s32 %s37, %s44
      %p154 = scmp.eq.s32.totalorder %s153, 0
      %s156 = sadd.s32 %s155, 1
      %s157 = scalar_select %p154, %s155, %s156
      %p160 = pneg %p154
      %p161 = scmp.eq.s32.totalorder %s29, 3
      %p162 = por %p160, %p161
      %p163 = scmp.ne.s32.totalorder %s155, %s158
      %p164 = scmp.eq.s32.totalorder %s29, 0
      %p165 = por %p163, %p164
      %p166 = scmp.ne.s32.totalorder %s155, %s158
      %p167 = scmp.eq.s32.totalorder %s34, 3
      %p168 = por %p166, %p167
      %p169 = scmp.ne.s32.totalorder %s158, %s159
      %p170 = scmp.eq.s32.totalorder %s34, 0
      %p171 = por %p169, %p170
      %p172 = scmp.ne.s32.totalorder %s158, %s159
      %p173 = scmp.eq.s32.totalorder %s35, 3
      %p174 = por %p172, %p173
      %p176 = scmp.ne.s32.totalorder %s159, %s175
      %p177 = scmp.eq.s32.totalorder %s35, 0
      %p178 = por %p176, %p177
      %s180 = sadd.s32 %s179, 1
      %p183 = scmp.eq.s32.totalorder %s29, 3
      %p184 = scmp.ne.s32.totalorder %s179, %s181
      %p185 = scmp.eq.s32.totalorder %s29, 0
      %p186 = por %p184, %p185
      %p187 = scmp.ne.s32.totalorder %s179, %s181
      %p188 = scmp.eq.s32.totalorder %s34, 3
      %p189 = por %p187, %p188
      %p190 = scmp.ne.s32.totalorder %s181, %s182
      %p191 = scmp.eq.s32.totalorder %s34, 0
      %p192 = por %p190, %p191
      %p193 = scmp.ne.s32.totalorder %s181, %s182
      %p194 = scmp.eq.s32.totalorder %s35, 3
      %p195 = por %p193, %p194
      %p197 = scmp.ne.s32.totalorder %s182, %s196
      %p198 = scmp.eq.s32.totalorder %s35, 0
      %p199 = por %p197, %p198
      %s201 = sadd.s32 %s200, 1
      %p204 = scmp.eq.s32.totalorder %s29, 3
      %p205 = scmp.ne.s32.totalorder %s200, %s202
      %p206 = scmp.eq.s32.totalorder %s29, 0
      %p207 = por %p205, %p206
      %p208 = scmp.ne.s32.totalorder %s200, %s202
      %p209 = scmp.eq.s32.totalorder %s34, 3
      %p210 = por %p208, %p209
      %p211 = scmp.ne.s32.totalorder %s202, %s203
      %p212 = scmp.eq.s32.totalorder %s34, 0
      %p213 = por %p211, %p212
      %p214 = scmp.ne.s32.totalorder %s202, %s203
      %p215 = scmp.eq.s32.totalorder %s35, 3
      %p216 = por %p214, %p215
      %p218 = scmp.ne.s32.totalorder %s203, %s217
      %p219 = scmp.eq.s32.totalorder %s35, 0
      %p220 = por %p218, %p219
      %s222 = sadd.s32 %s221, 1
      %p225 = scmp.eq.s32.totalorder %s29, 3
      %p226 = scmp.ne.s32.totalorder %s221, %s223
      %p227 = scmp.eq.s32.totalorder %s29, 0
      %p228 = por %p226, %p227
      %p229 = scmp.ne.s32.totalorder %s221, %s223
      %p230 = scmp.eq.s32.totalorder %s34, 3
      %p231 = por %p229, %p230
      %p232 = scmp.ne.s32.totalorder %s223, %s224
      %p233 = scmp.eq.s32.totalorder %s34, 0
      %p234 = por %p232, %p233
      %p235 = scmp.ne.s32.totalorder %s223, %s224
      %p236 = scmp.eq.s32.totalorder %s35, 3
      %p237 = por %p235, %p236
      %p239 = scmp.ne.s32.totalorder %s224, %s238
      %p240 = scmp.eq.s32.totalorder %s35, 0
      %p241 = por %p239, %p240
      %s243 = sadd.s32 %s242, 1
      %p246 = scmp.eq.s32.totalorder %s29, 3
      %p247 = scmp.ne.s32.totalorder %s242, %s244
      %p248 = scmp.eq.s32.totalorder %s29, 0
      %p249 = por %p247, %p248
      %p250 = scmp.ne.s32.totalorder %s242, %s244
      %p251 = scmp.eq.s32.totalorder %s34, 3
      %p252 = por %p250, %p251
      %p253 = scmp.ne.s32.totalorder %s244, %s245
      %p254 = scmp.eq.s32.totalorder %s34, 0
      %p255 = por %p253, %p254
      %p256 = scmp.ne.s32.totalorder %s244, %s245
      %p257 = scmp.eq.s32.totalorder %s35, 3
      %p258 = por %p256, %p257
      %p260 = scmp.ne.s32.totalorder %s245, %s259
      %p261 = scmp.eq.s32.totalorder %s35, 0
      %p262 = por %p260, %p261
      %s264 = sadd.s32 %s263, 1
      %p267 = scmp.eq.s32.totalorder %s29, 3
      %p268 = scmp.ne.s32.totalorder %s263, %s265
      %p269 = scmp.eq.s32.totalorder %s29, 0
      %p270 = por %p268, %p269
      %p271 = scmp.ne.s32.totalorder %s263, %s265
      %p272 = scmp.eq.s32.totalorder %s34, 3
      %p273 = por %p271, %p272
      %p274 = scmp.ne.s32.totalorder %s265, %s266
      %p275 = scmp.eq.s32.totalorder %s34, 0
      %p276 = por %p274, %p275
      %p277 = scmp.ne.s32.totalorder %s265, %s266
      %p278 = scmp.eq.s32.totalorder %s35, 3
      %p279 = por %p277, %p278
      %p281 = scmp.ne.s32.totalorder %s266, %s280
      %p282 = scmp.eq.s32.totalorder %s35, 0
      %p283 = por %p281, %p282
      %s285 = sadd.s32 %s284, 1
      %p288 = scmp.eq.s32.totalorder %s29, 3
      %p289 = scmp.ne.s32.totalorder %s284, %s286
      %p290 = scmp.eq.s32.totalorder %s29, 0
      %p291 = por %p289, %p290
      %p292 = scmp.ne.s32.totalorder %s284, %s286
      %p293 = scmp.eq.s32.totalorder %s34, 3
      %p294 = por %p292, %p293
      %p295 = scmp.ne.s32.totalorder %s286, %s287
      %p296 = scmp.eq.s32.totalorder %s34, 0
      %p297 = por %p295, %p296
      %p298 = scmp.ne.s32.totalorder %s286, %s287
      %p299 = scmp.eq.s32.totalorder %s35, 3
      %p300 = por %p298, %p299
      %p302 = scmp.ne.s32.totalorder %s287, %s301
      %p303 = scmp.eq.s32.totalorder %s35, 0
      %p304 = por %p302, %p303
      %s306 = sadd.s32 %s305, 1
      %p309 = scmp.eq.s32.totalorder %s29, 3
      %p310 = scmp.ne.s32.totalorder %s305, %s307
      %p311 = scmp.eq.s32.totalorder %s29, 0
      %p312 = por %p310, %p311
      %p313 = scmp.ne.s32.totalorder %s305, %s307
      %p314 = scmp.eq.s32.totalorder %s34, 3
      %p315 = por %p313, %p314
      %p316 = scmp.ne.s32.totalorder %s307, %s308
      %p317 = scmp.eq.s32.totalorder %s34, 0
      %p318 = por %p316, %p317
      %p319 = scmp.ne.s32.totalorder %s307, %s308
      %p320 = scmp.eq.s32.totalorder %s35, 3
      %p321 = por %p319, %p320
      %p323 = scmp.ne.s32.totalorder %s308, %s322
      %p324 = scmp.eq.s32.totalorder %s35, 0
      %p325 = por %p323, %p324
      %s327 = sadd.s32 %s326, 1
      %p330 = scmp.eq.s32.totalorder %s29, 3
      %p331 = scmp.ne.s32.totalorder %s326, %s328
      %p332 = scmp.eq.s32.totalorder %s29, 0
      %p333 = por %p331, %p332
      %p334 = scmp.ne.s32.totalorder %s326, %s328
      %p335 = scmp.eq.s32.totalorder %s34, 3
      %p336 = por %p334, %p335
      %p337 = scmp.ne.s32.totalorder %s328, %s329
      %p338 = scmp.eq.s32.totalorder %s34, 0
      %p339 = por %p337, %p338
      %p340 = scmp.ne.s32.totalorder %s328, %s329
      %p341 = scmp.eq.s32.totalorder %s35, 3
      %p342 = por %p340, %p341
      %p344 = scmp.ne.s32.totalorder %s329, %s343
      %p345 = scmp.eq.s32.totalorder %s35, 0
      %p346 = por %p344, %p345
      %s348 = sadd.s32 %s347, 1
      %p351 = scmp.eq.s32.totalorder %s29, 3
      %p352 = scmp.ne.s32.totalorder %s347, %s349
      %p353 = scmp.eq.s32.totalorder %s29, 0
      %p354 = por %p352, %p353
      %p355 = scmp.ne.s32.totalorder %s347, %s349
      %p356 = scmp.eq.s32.totalorder %s34, 3
      %p357 = por %p355, %p356
      %p358 = scmp.ne.s32.totalorder %s349, %s350
      %p359 = scmp.eq.s32.totalorder %s34, 0
      %p360 = por %p358, %p359
      %p361 = scmp.ne.s32.totalorder %s349, %s350
      %p362 = scmp.eq.s32.totalorder %s35, 3
      %p363 = por %p361, %p362
      %p365 = scmp.ne.s32.totalorder %s350, %s364
      %p366 = scmp.eq.s32.totalorder %s35, 0
      %p367 = por %p365, %p366
      %s369 = sadd.s32 %s368, 1
      %p372 = scmp.eq.s32.totalorder %s29, 3
      %p373 = scmp.ne.s32.totalorder %s368, %s370
      %p374 = scmp.eq.s32.totalorder %s29, 0
      %p375 = por %p373, %p374
      %p376 = scmp.ne.s32.totalorder %s368, %s370
      %p377 = scmp.eq.s32.totalorder %s34, 3
      %p378 = por %p376, %p377
      %p379 = scmp.ne.s32.totalorder %s370, %s371
      %p380 = scmp.eq.s32.totalorder %s34, 0
      %p381 = por %p379, %p380
      %p382 = scmp.ne.s32.totalorder %s370, %s371
      %p383 = scmp.eq.s32.totalorder %s35, 3
      %p384 = por %p382, %p383
      %p386 = scmp.ne.s32.totalorder %s371, %s385
      %p387 = scmp.eq.s32.totalorder %s35, 0
      %p388 = por %p386, %p387
      %s389 = ssub.s32 %s36, %s48
      %p390 = scmp.eq.s32.totalorder %s389, 0
      %s392 = sadd.s32 %s391, 1
      %s393 = scalar_select %p390, %s391, %s392
      %p396 = pneg %p390
      %p397 = scmp.eq.s32.totalorder %s29, 3
      %p398 = por %p396, %p397
      %p399 = scmp.ne.s32.totalorder %s391, %s394
      %p400 = scmp.eq.s32.totalorder %s29, 0
      %p401 = por %p399, %p400
      %p402 = scmp.ne.s32.totalorder %s391, %s394
      %p403 = scmp.eq.s32.totalorder %s34, 3
      %p404 = por %p402, %p403
      %p405 = scmp.ne.s32.totalorder %s394, %s395
      %p406 = scmp.eq.s32.totalorder %s34, 0
      %p407 = por %p405, %p406
      %p408 = scmp.ne.s32.totalorder %s394, %s395
      %p409 = scmp.eq.s32.totalorder %s35, 3
      %p410 = por %p408, %p409
      %p412 = scmp.ne.s32.totalorder %s395, %s411
      %p413 = scmp.eq.s32.totalorder %s35, 0
      %p414 = por %p412, %p413
      %p415 = scmp.le.s32.totalorder 1, %s29
      %p416 = scmp.lt.s32.totalorder %s29, 5
      %p417 = pnand %p415, %p416
      %p418 = pneg %p417
      // Predicated region
      $region9: #{tpu_custom_call.1} parent=5 // pred_check
        _
      $region10: #{tpu_custom_call.1} parent=5 // pred_check_branch
        %420 = sbr.rel (%p417) target = $region12
      $region11: #{tpu_custom_call.1} parent=5 // pred_region
        %s421 = ssub.s32 %s29, 1
        // Predicated region
        $region13: #{tpu_custom_call.1} parent=11 // pred_check
          %p422 = pneg %p67
        $region14: #{tpu_custom_call.1} parent=11 // pred_check_branch
          %424 = sbr.rel (%p422) target = $region16
        $region15: #{tpu_custom_call.1} parent=11 // pred_region
          %426 = vsyncadd [#allocation4], 0
          %s427 = smul.addr %s38, 6
          %s428 = smul.addr %s427, 8
          %s429 = scalar_lea.hbm %s0, %s428
          %s431 = sshll.u32 %s429, 4
          %s432 = int_to_ptr.hbm [resolvable:$true] %s431
          %s433 = sshll.u32 [#allocation3], 4
          %s434 = int_to_ptr.vmem [resolvable:$true] %s433
          %436 = dma.hbm_to_vmem [thread:$0]  %s432, 768, %s434, [#allocation4]
        $region16: #{tpu_custom_call.1} parent=11 // pred_fallthru
          _
        // Predicated region
        $region17: #{tpu_custom_call.1} parent=11 // pred_check
          %p437 = pneg %p93
        $region18: #{tpu_custom_call.1} parent=11 // pred_check_branch
          %439 = sbr.rel (%p437) target = $region20
        $region19: #{tpu_custom_call.1} parent=11 // pred_region
          %441 = vsyncadd [#allocation7], 0
          %s442 = smul.addr %s38, 8
          %s443 = scalar_lea.hbm %s1, %s442
          %s445 = sshll.u32 %s443, 4
          %s446 = int_to_ptr.hbm [resolvable:$true] %s445
          %s447 = sshll.u32 [#allocation6], 4
          %s448 = int_to_ptr.vmem [resolvable:$true] %s447
          %450 = dma.hbm_to_vmem [thread:$0]  %s446, 128, %s448, [#allocation7]
        $region20: #{tpu_custom_call.1} parent=11 // pred_fallthru
          _
        // Predicated region
        $region21: #{tpu_custom_call.1} parent=11 // pred_check
          %p451 = pneg %p192
        $region22: #{tpu_custom_call.1} parent=11 // pred_check_branch
          %453 = sbr.rel (%p451) target = $region24
        $region23: #{tpu_custom_call.1} parent=11 // pred_region
          %455 = vsyncadd [#allocation7], 0
          %s457 = sshll.u32 %s5, 4
          %s458 = int_to_ptr.hbm [resolvable:$true] %s457
          %s459 = sshll.u32 [#allocation11], 4
          %s460 = int_to_ptr.vmem [resolvable:$true] %s459
          %462 = dma.hbm_to_vmem [thread:$0]  %s458, 64, %s460, [#allocation7]
        $region24: #{tpu_custom_call.1} parent=11 // pred_fallthru
          _
        // Predicated region
        $region25: #{tpu_custom_call.1} parent=11 // pred_check
          %p463 = pneg %p213
        $region26: #{tpu_custom_call.1} parent=11 // pred_check_branch
          %465 = sbr.rel (%p463) target = $region28
        $region27: #{tpu_custom_call.1} parent=11 // pred_region
          %467 = vsyncadd [#allocation13], 0
          %s469 = sshll.u32 %s6, 4
          %s470 = int_to_ptr.hbm [resolvable:$true] %s469
          %s471 = sshll.u32 [#allocation12], 4
          %s472 = int_to_ptr.vmem [resolvable:$true] %s471
          %474 = dma.hbm_to_vmem [thread:$0]  %s470, 128, %s472, [#allocation13]
        $region28: #{tpu_custom_call.1} parent=11 // pred_fallthru
          _
        // Predicated region
        $region29: #{tpu_custom_call.1} parent=11 // pred_check
          %p475 = pneg %p234
        $region30: #{tpu_custom_call.1} parent=11 // pred_check_branch
          %477 = sbr.rel (%p475) target = $region32
        $region31: #{tpu_custom_call.1} parent=11 // pred_region
          %479 = vsyncadd [#allocation13], 0
          %s481 = sshll.u32 %s7, 4
          %s482 = int_to_ptr.hbm [resolvable:$true] %s481
          %s483 = sshll.u32 [#allocation14], 4
          %s484 = int_to_ptr.vmem [resolvable:$true] %s483
          %486 = dma.hbm_to_vmem [thread:$0]  %s482, 32, %s484, [#allocation13]
        $region32: #{tpu_custom_call.1} parent=11 // pred_fallthru
          _
        // Predicated region
        $region33: #{tpu_custom_call.1} parent=11 // pred_check
          %p487 = pneg %p255
        $region34: #{tpu_custom_call.1} parent=11 // pred_check_branch
          %489 = sbr.rel (%p487) target = $region36
        $region35: #{tpu_custom_call.1} parent=11 // pred_region
          %491 = vsyncadd [#allocation16], 0
          %s492 = sshll.u32 %s8, 4
          %s493 = int_to_ptr.hbm [resolvable:$true] %s492
          %s494 = sshll.u32 [#allocation15], 4
          %s495 = int_to_ptr.vmem [resolvable:$true] %s494
          %500 = dma.hbm_to_vmem [thread:$0]  %s493, 8192, %s495, [#allocation16], 256, 256, 16
        $region36: #{tpu_custom_call.1} parent=11 // pred_fallthru
          _
        // Predicated region
        $region37: #{tpu_custom_call.1} parent=11 // pred_check
          %p501 = pneg %p276
        $region38: #{tpu_custom_call.1} parent=11 // pred_check_branch
          %503 = sbr.rel (%p501) target = $region40
        $region39: #{tpu_custom_call.1} parent=11 // pred_region
          %505 = vsyncadd [#allocation16], 0
          %s507 = sshll.u32 %s9, 4
          %s508 = int_to_ptr.hbm [resolvable:$true] %s507
          %s509 = sshll.u32 [#allocation17], 4
          %s510 = int_to_ptr.vmem [resolvable:$true] %s509
          %512 = dma.hbm_to_vmem [thread:$0]  %s508, 64, %s510, [#allocation16]
        $region40: #{tpu_custom_call.1} parent=11 // pred_fallthru
          _
        // Predicated region
        $region41: #{tpu_custom_call.1} parent=11 // pred_check
          %p513 = pneg %p297
        $region42: #{tpu_custom_call.1} parent=11 // pred_check_branch
          %515 = sbr.rel (%p513) target = $region44
        $region43: #{tpu_custom_call.1} parent=11 // pred_region
          %517 = vsyncadd [#allocation19], 0
          %s518 = sshll.u32 %s10, 4
          %s519 = int_to_ptr.hbm [resolvable:$true] %s518
          %s520 = sshll.u32 [#allocation18], 4
          %s521 = int_to_ptr.vmem [resolvable:$true] %s520
          %526 = dma.hbm_to_vmem [thread:$0]  %s519, 16384, %s521, [#allocation19], 256, 256, 16
        $region44: #{tpu_custom_call.1} parent=11 // pred_fallthru
          _
        // Predicated region
        $region45: #{tpu_custom_call.1} parent=11 // pred_check
          %p527 = pneg %p318
        $region46: #{tpu_custom_call.1} parent=11 // pred_check_branch
          %529 = sbr.rel (%p527) target = $region48
        $region47: #{tpu_custom_call.1} parent=11 // pred_region
          %531 = vsyncadd [#allocation19], 0
          %s532 = sshll.u32 %s11, 4
          %s533 = int_to_ptr.hbm [resolvable:$true] %s532
          %s534 = sshll.u32 [#allocation20], 4
          %s535 = int_to_ptr.vmem [resolvable:$true] %s534
          %540 = dma.hbm_to_vmem [thread:$0]  %s533, 16384, %s535, [#allocation19], 256, 256, 16
        $region48: #{tpu_custom_call.1} parent=11 // pred_fallthru
          _
        // Predicated region
        $region49: #{tpu_custom_call.1} parent=11 // pred_check
          %p541 = pneg %p339
        $region50: #{tpu_custom_call.1} parent=11 // pred_check_branch
          %543 = sbr.rel (%p541) target = $region52
        $region51: #{tpu_custom_call.1} parent=11 // pred_region
          %545 = vsyncadd [#allocation22], 0
          %s547 = sshll.u32 %s12, 4
          %s548 = int_to_ptr.hbm [resolvable:$true] %s547
          %s549 = sshll.u32 [#allocation21], 4
          %s550 = int_to_ptr.vmem [resolvable:$true] %s549
          %552 = dma.hbm_to_vmem [thread:$0]  %s548, 64, %s550, [#allocation22]
        $region52: #{tpu_custom_call.1} parent=11 // pred_fallthru
          _
        // Predicated region
        $region53: #{tpu_custom_call.1} parent=11 // pred_check
          %p553 = pneg %p360
        $region54: #{tpu_custom_call.1} parent=11 // pred_check_branch
          %555 = sbr.rel (%p553) target = $region56
        $region55: #{tpu_custom_call.1} parent=11 // pred_region
          %557 = vsyncadd [#allocation22], 0
          %s558 = sshll.u32 %s13, 4
          %s559 = int_to_ptr.hbm [resolvable:$true] %s558
          %s560 = sshll.u32 [#allocation23], 4
          %s561 = int_to_ptr.vmem [resolvable:$true] %s560
          %566 = dma.hbm_to_vmem [thread:$0]  %s559, 4096, %s561, [#allocation22], 64, 64, 4
        $region56: #{tpu_custom_call.1} parent=11 // pred_fallthru
          _
        // Predicated region
        $region57: #{tpu_custom_call.1} parent=11 // pred_check
          %p567 = pneg %p381
        $region58: #{tpu_custom_call.1} parent=11 // pred_check_branch
          %569 = sbr.rel (%p567) target = $region60
        $region59: #{tpu_custom_call.1} parent=11 // pred_region
          %571 = vsyncadd [#allocation25], 0
          %s573 = sshll.u32 %s14, 4
          %s574 = int_to_ptr.hbm [resolvable:$true] %s573
          %s575 = sshll.u32 [#allocation24], 4
          %s576 = int_to_ptr.vmem [resolvable:$true] %s575
          %578 = dma.hbm_to_vmem [thread:$0]  %s574, 16, %s576, [#allocation25]
        $region60: #{tpu_custom_call.1} parent=11 // pred_fallthru
          _
      $region12: #{tpu_custom_call.1} parent=5 // pred_fallthru
        _
      %p579 = scmp.lt.s32.totalorder %s29, 4
      // Predicated region
      $region61: #{tpu_custom_call.1} parent=5 // pred_check
        %p580 = pneg %p579
      $region62: #{tpu_custom_call.1} parent=5 // pred_check_branch
        %582 = sbr.rel (%p580) target = $region64
      $region63: #{tpu_custom_call.1} parent=5 // pred_region
        // Predicated region
        $region65: #{tpu_custom_call.1} parent=63 // pred_check
          %p583 = pneg %p113
        $region66: #{tpu_custom_call.1} parent=63 // pred_check_branch
          %585 = sbr.rel (%p583) target = $region68
        $region67: #{tpu_custom_call.1} parent=63 // pred_region
          %s586 = sand.u32 %s29, 1
          %s587 = scalar_lea.sflag [#allocation4], %s586
          %s588 = sand.u32 %s103, 1
          %s589 = smul.addr %s588, 1536
          %s590 = scalar_lea.vmem [#allocation8], %s589
          %s591 = smul.u32 4, %s37
          %593 = vsyncadd %s587, 0
          %s594 = smul.addr %s591, 4
          %s595 = scalar_lea.hbm %s2, %s594
          %s596 = sshll.u32 %s595, 4
          %s597 = int_to_ptr.hbm [resolvable:$true] %s596
          %s598 = sshll.u32 %s590, 4
          %s599 = int_to_ptr.vmem [resolvable:$true] %s598
          %604 = dma.hbm_to_vmem [thread:$0]  %s597, 24576, %s599, %s587, 1024, 256, 16
        $region68: #{tpu_custom_call.1} parent=63 // pred_fallthru
          _
        // Predicated region
        $region69: #{tpu_custom_call.1} parent=63 // pred_check
          %p605 = pneg %p139
        $region70: #{tpu_custom_call.1} parent=63 // pred_check_branch
          %607 = sbr.rel (%p605) target = $region72
        $region71: #{tpu_custom_call.1} parent=63 // pred_region
          %s608 = sand.u32 %s29, 1
          %s609 = scalar_lea.sflag [#allocation4], %s608
          %s610 = sand.u32 %s129, 1
          %s611 = smul.addr %s610, 4
          %s612 = scalar_lea.vmem [#allocation9], %s611
          %s613 = smul.u32 4, %s37
          %615 = vsyncadd %s609, 0
          %s616 = scalar_lea.hbm %s3, %s613
          %s618 = sshll.u32 %s616, 4
          %s619 = int_to_ptr.hbm [resolvable:$true] %s618
          %s620 = sshll.u32 %s612, 4
          %s621 = int_to_ptr.vmem [resolvable:$true] %s620
          %623 = dma.hbm_to_vmem [thread:$0]  %s619, 64, %s621, %s609
        $region72: #{tpu_custom_call.1} parent=63 // pred_fallthru
          _
        // Predicated region
        $region73: #{tpu_custom_call.1} parent=63 // pred_check
          %p624 = pneg %p165
        $region74: #{tpu_custom_call.1} parent=63 // pred_check_branch
          %626 = sbr.rel (%p624) target = $region76
        $region75: #{tpu_custom_call.1} parent=63 // pred_region
          %s627 = sand.u32 %s29, 1
          %s628 = scalar_lea.sflag [#allocation4], %s627
          %s629 = sand.u32 %s155, 1
          %s630 = smul.addr %s629, 1024
          %s631 = scalar_lea.vmem [#allocation10], %s630
          %s632 = smul.u32 64, %s37
          %634 = vsyncadd %s628, 0
          %s635 = smul.addr %s632, 4
          %s636 = smul.addr %s635, 4
          %s637 = scalar_lea.hbm %s4, %s636
          %s638 = sshll.u32 %s637, 4
          %s639 = int_to_ptr.hbm [resolvable:$true] %s638
          %s640 = sshll.u32 %s631, 4
          %s641 = int_to_ptr.vmem [resolvable:$true] %s640
          %646 = dma.hbm_to_vmem [thread:$0]  %s639, 16384, %s641, %s628, 256, 256, 16
        $region76: #{tpu_custom_call.1} parent=63 // pred_fallthru
          _
      $region64: #{tpu_custom_call.1} parent=5 // pred_fallthru
        _
      %p647 = scmp.le.s32.totalorder 1, %s29
      %p648 = scmp.lt.s32.totalorder %s29, 5
      %p649 = pnand %p647, %p648
      %p650 = pneg %p649
      // Predicated region
      $region77: #{tpu_custom_call.1} parent=5 // pred_check
        _
      $region78: #{tpu_custom_call.1} parent=5 // pred_check_branch
        %652 = sbr.rel (%p649) target = $region80
      $region79: #{tpu_custom_call.1} parent=5 // pred_region
        %s653 = ssub.s32 %s29, 1
        // Predicated region
        $region81: #{tpu_custom_call.1} parent=79 // pred_check
          %p654 = pneg %p67
        $region82: #{tpu_custom_call.1} parent=79 // pred_check_branch
          %656 = sbr.rel (%p654) target = $region84
        $region83: #{tpu_custom_call.1} parent=79 // pred_region
          %658 = dma.done [#allocation4], 768
        $region84: #{tpu_custom_call.1} parent=79 // pred_fallthru
          _
        // Predicated region
        $region85: #{tpu_custom_call.1} parent=79 // pred_check
          %p659 = pneg %p93
        $region86: #{tpu_custom_call.1} parent=79 // pred_check_branch
          %661 = sbr.rel (%p659) target = $region88
        $region87: #{tpu_custom_call.1} parent=79 // pred_region
          %663 = dma.done [#allocation7], 128
        $region88: #{tpu_custom_call.1} parent=79 // pred_fallthru
          _
        %s664 = sand.u32 %s34, 1
        %s665 = scalar_lea.sflag [#allocation4], %s664
        %s666 = sand.u32 %s106, 1
        %s667 = smul.addr %s666, 1536
        %s668 = scalar_lea.vmem [#allocation8], %s667
        // Predicated region
        $region89: #{tpu_custom_call.1} parent=79 // pred_check
          %p669 = pneg %p119
        $region90: #{tpu_custom_call.1} parent=79 // pred_check_branch
          %671 = sbr.rel (%p669) target = $region92
        $region91: #{tpu_custom_call.1} parent=79 // pred_region
          %673 = dma.done %s665, 24576
        $region92: #{tpu_custom_call.1} parent=79 // pred_fallthru
          _
        %s674 = sand.u32 %s34, 1
        %s675 = scalar_lea.sflag [#allocation4], %s674
        %s676 = sand.u32 %s132, 1
        %s677 = smul.addr %s676, 4
        %s678 = scalar_lea.vmem [#allocation9], %s677
        // Predicated region
        $region93: #{tpu_custom_call.1} parent=79 // pred_check
          %p679 = pneg %p145
        $region94: #{tpu_custom_call.1} parent=79 // pred_check_branch
          %681 = sbr.rel (%p679) target = $region96
        $region95: #{tpu_custom_call.1} parent=79 // pred_region
          %683 = dma.done %s675, 64
        $region96: #{tpu_custom_call.1} parent=79 // pred_fallthru
          _
        %s684 = sand.u32 %s34, 1
        %s685 = scalar_lea.sflag [#allocation4], %s684
        %s686 = sand.u32 %s158, 1
        %s687 = smul.addr %s686, 1024
        %s688 = scalar_lea.vmem [#allocation10], %s687
        // Predicated region
        $region97: #{tpu_custom_call.1} parent=79 // pred_check
          %p689 = pneg %p171
        $region98: #{tpu_custom_call.1} parent=79 // pred_check_branch
          %691 = sbr.rel (%p689) target = $region100
        $region99: #{tpu_custom_call.1} parent=79 // pred_region
          %693 = dma.done %s685, 16384
        $region100: #{tpu_custom_call.1} parent=79 // pred_fallthru
          _
        // Predicated region
        $region101: #{tpu_custom_call.1} parent=79 // pred_check
          %p694 = pneg %p192
        $region102: #{tpu_custom_call.1} parent=79 // pred_check_branch
          %696 = sbr.rel (%p694) target = $region104
        $region103: #{tpu_custom_call.1} parent=79 // pred_region
          %698 = dma.done [#allocation7], 64
        $region104: #{tpu_custom_call.1} parent=79 // pred_fallthru
          _
        // Predicated region
        $region105: #{tpu_custom_call.1} parent=79 // pred_check
          %p699 = pneg %p213
        $region106: #{tpu_custom_call.1} parent=79 // pred_check_branch
          %701 = sbr.rel (%p699) target = $region108
        $region107: #{tpu_custom_call.1} parent=79 // pred_region
          %703 = dma.done [#allocation13], 128
        $region108: #{tpu_custom_call.1} parent=79 // pred_fallthru
          _
        // Predicated region
        $region109: #{tpu_custom_call.1} parent=79 // pred_check
          %p704 = pneg %p234
        $region110: #{tpu_custom_call.1} parent=79 // pred_check_branch
          %706 = sbr.rel (%p704) target = $region112
        $region111: #{tpu_custom_call.1} parent=79 // pred_region
          %708 = dma.done [#allocation13], 32
        $region112: #{tpu_custom_call.1} parent=79 // pred_fallthru
          _
        // Predicated region
        $region113: #{tpu_custom_call.1} parent=79 // pred_check
          %p709 = pneg %p255
        $region114: #{tpu_custom_call.1} parent=79 // pred_check_branch
          %711 = sbr.rel (%p709) target = $region116
        $region115: #{tpu_custom_call.1} parent=79 // pred_region
          %713 = dma.done [#allocation16], 8192
        $region116: #{tpu_custom_call.1} parent=79 // pred_fallthru
          _
        // Predicated region
        $region117: #{tpu_custom_call.1} parent=79 // pred_check
          %p714 = pneg %p276
        $region118: #{tpu_custom_call.1} parent=79 // pred_check_branch
          %716 = sbr.rel (%p714) target = $region120
        $region119: #{tpu_custom_call.1} parent=79 // pred_region
          %718 = dma.done [#allocation16], 64
        $region120: #{tpu_custom_call.1} parent=79 // pred_fallthru
          _
        // Predicated region
        $region121: #{tpu_custom_call.1} parent=79 // pred_check
          %p719 = pneg %p297
        $region122: #{tpu_custom_call.1} parent=79 // pred_check_branch
          %721 = sbr.rel (%p719) target = $region124
        $region123: #{tpu_custom_call.1} parent=79 // pred_region
          %723 = dma.done [#allocation19], 16384
        $region124: #{tpu_custom_call.1} parent=79 // pred_fallthru
          _
        // Predicated region
        $region125: #{tpu_custom_call.1} parent=79 // pred_check
          %p724 = pneg %p318
        $region126: #{tpu_custom_call.1} parent=79 // pred_check_branch
          %726 = sbr.rel (%p724) target = $region128
        $region127: #{tpu_custom_call.1} parent=79 // pred_region
          %728 = dma.done [#allocation19], 16384
        $region128: #{tpu_custom_call.1} parent=79 // pred_fallthru
          _
        // Predicated region
        $region129: #{tpu_custom_call.1} parent=79 // pred_check
          %p729 = pneg %p339
        $region130: #{tpu_custom_call.1} parent=79 // pred_check_branch
          %731 = sbr.rel (%p729) target = $region132
        $region131: #{tpu_custom_call.1} parent=79 // pred_region
          %733 = dma.done [#allocation22], 64
        $region132: #{tpu_custom_call.1} parent=79 // pred_fallthru
          _
        // Predicated region
        $region133: #{tpu_custom_call.1} parent=79 // pred_check
          %p734 = pneg %p360
        $region134: #{tpu_custom_call.1} parent=79 // pred_check_branch
          %736 = sbr.rel (%p734) target = $region136
        $region135: #{tpu_custom_call.1} parent=79 // pred_region
          %738 = dma.done [#allocation22], 4096
        $region136: #{tpu_custom_call.1} parent=79 // pred_fallthru
          _
        // Predicated region
        $region137: #{tpu_custom_call.1} parent=79 // pred_check
          %p739 = pneg %p381
        $region138: #{tpu_custom_call.1} parent=79 // pred_check_branch
          %741 = sbr.rel (%p739) target = $region140
        $region139: #{tpu_custom_call.1} parent=79 // pred_region
          %743 = dma.done [#allocation25], 16
        $region140: #{tpu_custom_call.1} parent=79 // pred_fallthru
          _
        %p744 = pneg %p67
        %p745 = pneg %p64
        %p746 = pneg %p93
        %p747 = pneg %p90
        %s748 = sand.u32 %s34, 1
        %s749 = scalar_lea.sflag [#allocation4], %s748
        %s750 = sand.u32 %s106, 1
        %s751 = smul.addr %s750, 1536
        %s752 = scalar_lea.vmem [#allocation8], %s751
        %p753 = pneg %p119
        %p754 = pneg %p116
        %s755 = sand.u32 %s34, 1
        %s756 = scalar_lea.sflag [#allocation4], %s755
        %s757 = sand.u32 %s132, 1
        %s758 = smul.addr %s757, 4
        %s759 = scalar_lea.vmem [#allocation9], %s758
        %p760 = pneg %p145
        %p761 = pneg %p142
        %s762 = sand.u32 %s34, 1
        %s763 = scalar_lea.sflag [#allocation4], %s762
        %s764 = sand.u32 %s158, 1
        %s765 = smul.addr %s764, 1024
        %s766 = scalar_lea.vmem [#allocation10], %s765
        %p767 = pneg %p171
        %p768 = pneg %p168
        %p769 = pneg %p192
        %p770 = pneg %p189
        %p771 = pneg %p213
        %p772 = pneg %p210
        %p773 = pneg %p234
        %p774 = pneg %p231
        %p775 = pneg %p255
        %p776 = pneg %p252
        %p777 = pneg %p276
        %p778 = pneg %p273
        %p779 = pneg %p297
        %p780 = pneg %p294
        %p781 = pneg %p318
        %p782 = pneg %p315
        %p783 = pneg %p339
        %p784 = pneg %p336
        %p785 = pneg %p360
        %p786 = pneg %p357
        %p787 = pneg %p381
        %p788 = pneg %p378
        %p789 = pneg %p407
        %p790 = pneg %p404
        %s791 = smul.u32 4, %s39
        %s792 = smul.u32 4, %s39
        %s793 = smul.u32 64, %s39
        %p795 = scmp.eq.s32.totalorder %s39, 0
        // Predicated region
        $region141: #{tpu_custom_call.1} parent=79 // pred_check
          %p796 = pneg %p795
        $region142: #{tpu_custom_call.1} parent=79 // pred_check_branch
          %798 = sbr.rel (%p796) target = $region144
        $region143: #{tpu_custom_call.1} parent=79 // pred_region
          %799 = vst [vmem:[#allocation2] sm:$0xff] 0.0
          %800 = vst [vmem:[#allocation2 + $0x8] sm:$0xff] 0.0
          %801 = vst [vmem:[#allocation2 + $0x10] sm:$0xff] 0.0
          %802 = vst [vmem:[#allocation2 + $0x18] sm:$0xff] 0.0
        $region144: #{tpu_custom_call.1} parent=79 // pred_fallthru
          _
        %v803 = vld [vmem:[#allocation3] sm:$0xff]
        %v804 = vld [vmem:[#allocation3 + $0x8] sm:$0xff]
        %v805 = vld [vmem:[#allocation3 + $0x10] sm:$0xff]
        %v806 = vld [vmem:[#allocation3 + $0x18] sm:$0xff]
        %v807 = vld [vmem:[#allocation3 + $0x20] sm:$0xff]
        %v808 = vld [vmem:[#allocation3 + $0x28] sm:$0xff]
        %v809 = vpack.c.bf16 %v803, %v803
        %v810 = vpack.c.bf16 %v804, %v804
        %v811 = vpack.c.bf16 %v805, %v805
        %v812 = vpack.c.bf16 %v806, %v806
        %v813 = vpack.c.bf16 %v807, %v807
        %v814 = vpack.c.bf16 %v808, %v808
        %v815 = vld [vmem:[%s668] sm:$0xff]
        %v816 = vld [vmem:[%s668 + $0x8] sm:$0xff]
        %v817 = vld [vmem:[%s668 + $0x10] sm:$0xff]
        %v818 = vld [vmem:[%s668 + $0x18] sm:$0xff]
        %v819 = vld [vmem:[%s668 + $0x20] sm:$0xff]
        %v820 = vld [vmem:[%s668 + $0x28] sm:$0xff]
        %v821 = vld [vmem:[%s668 + $0x30] sm:$0xff]
        %v822 = vld [vmem:[%s668 + $0x38] sm:$0xff]
        %v823 = vld [vmem:[%s668 + $0x40] sm:$0xff]
        %v824 = vld [vmem:[%s668 + $0x48] sm:$0xff]
        %v825 = vld [vmem:[%s668 + $0x50] sm:$0xff]
        %v826 = vld [vmem:[%s668 + $0x58] sm:$0xff]
        %v827 = vld [vmem:[%s668 + $0x60] sm:$0xff]
        %v828 = vld [vmem:[%s668 + $0x68] sm:$0xff]
        %v829 = vld [vmem:[%s668 + $0x70] sm:$0xff]
        %v830 = vld [vmem:[%s668 + $0x78] sm:$0xff]
        %v831 = vld [vmem:[%s668 + $0x80] sm:$0xff]
        %v832 = vld [vmem:[%s668 + $0x88] sm:$0xff]
        %v833 = vld [vmem:[%s668 + $0x90] sm:$0xff]
        %v834 = vld [vmem:[%s668 + $0x98] sm:$0xff]
        %v835 = vld [vmem:[%s668 + $0xa0] sm:$0xff]
        %v836 = vld [vmem:[%s668 + $0xa8] sm:$0xff]
        %v837 = vld [vmem:[%s668 + $0xb0] sm:$0xff]
        %v838 = vld [vmem:[%s668 + $0xb8] sm:$0xff]
        %v839 = vld [vmem:[%s668 + $0xc0] sm:$0xff]
        %v840 = vld [vmem:[%s668 + $0xc8] sm:$0xff]
        %v841 = vld [vmem:[%s668 + $0xd0] sm:$0xff]
        %v842 = vld [vmem:[%s668 + $0xd8] sm:$0xff]
        %v843 = vld [vmem:[%s668 + $0xe0] sm:$0xff]
        %v844 = vld [vmem:[%s668 + $0xe8] sm:$0xff]
        %v845 = vld [vmem:[%s668 + $0xf0] sm:$0xff]
        %v846 = vld [vmem:[%s668 + $0xf8] sm:$0xff]
        %v847 = vld [vmem:[%s668 + $0x100] sm:$0xff]
        %v848 = vld [vmem:[%s668 + $0x108] sm:$0xff]
        %v849 = vld [vmem:[%s668 + $0x110] sm:$0xff]
        %v850 = vld [vmem:[%s668 + $0x118] sm:$0xff]
        %v851 = vld [vmem:[%s668 + $0x120] sm:$0xff]
        %v852 = vld [vmem:[%s668 + $0x128] sm:$0xff]
        %v853 = vld [vmem:[%s668 + $0x130] sm:$0xff]
        %v854 = vld [vmem:[%s668 + $0x138] sm:$0xff]
        %v855 = vld [vmem:[%s668 + $0x140] sm:$0xff]
        %v856 = vld [vmem:[%s668 + $0x148] sm:$0xff]
        %v857 = vld [vmem:[%s668 + $0x150] sm:$0xff]
        %v858 = vld [vmem:[%s668 + $0x158] sm:$0xff]
        %v859 = vld [vmem:[%s668 + $0x160] sm:$0xff]
        %v860 = vld [vmem:[%s668 + $0x168] sm:$0xff]
        %v861 = vld [vmem:[%s668 + $0x170] sm:$0xff]
        %v862 = vld [vmem:[%s668 + $0x178] sm:$0xff]
        %v863 = vld [vmem:[%s668 + $0x180] sm:$0xff]
        %v864 = vld [vmem:[%s668 + $0x188] sm:$0xff]
        %v865 = vld [vmem:[%s668 + $0x190] sm:$0xff]
        %v866 = vld [vmem:[%s668 + $0x198] sm:$0xff]
        %v867 = vld [vmem:[%s668 + $0x1a0] sm:$0xff]
        %v868 = vld [vmem:[%s668 + $0x1a8] sm:$0xff]
        %v869 = vld [vmem:[%s668 + $0x1b0] sm:$0xff]
        %v870 = vld [vmem:[%s668 + $0x1b8] sm:$0xff]
        %v871 = vld [vmem:[%s668 + $0x1c0] sm:$0xff]
        %v872 = vld [vmem:[%s668 + $0x1c8] sm:$0xff]
        %v873 = vld [vmem:[%s668 + $0x1d0] sm:$0xff]
        %v874 = vld [vmem:[%s668 + $0x1d8] sm:$0xff]
        %v875 = vld [vmem:[%s668 + $0x1e0] sm:$0xff]
        %v876 = vld [vmem:[%s668 + $0x1e8] sm:$0xff]
        %v877 = vld [vmem:[%s668 + $0x1f0] sm:$0xff]
        %v878 = vld [vmem:[%s668 + $0x1f8] sm:$0xff]
        %v879 = vld [vmem:[%s668 + $0x200] sm:$0xff]
        %v880 = vld [vmem:[%s668 + $0x208] sm:$0xff]
        %v881 = vld [vmem:[%s668 + $0x210] sm:$0xff]
        %v882 = vld [vmem:[%s668 + $0x218] sm:$0xff]
        %v883 = vld [vmem:[%s668 + $0x220] sm:$0xff]
        %v884 = vld [vmem:[%s668 + $0x228] sm:$0xff]
        %v885 = vld [vmem:[%s668 + $0x230] sm:$0xff]
        %v886 = vld [vmem:[%s668 + $0x238] sm:$0xff]
        %v887 = vld [vmem:[%s668 + $0x240] sm:$0xff]
        %v888 = vld [vmem:[%s668 + $0x248] sm:$0xff]
        %v889 = vld [vmem:[%s668 + $0x250] sm:$0xff]
        %v890 = vld [vmem:[%s668 + $0x258] sm:$0xff]
        %v891 = vld [vmem:[%s668 + $0x260] sm:$0xff]
        %v892 = vld [vmem:[%s668 + $0x268] sm:$0xff]
        %v893 = vld [vmem:[%s668 + $0x270] sm:$0xff]
        %v894 = vld [vmem:[%s668 + $0x278] sm:$0xff]
        %v895 = vld [vmem:[%s668 + $0x280] sm:$0xff]
        %v896 = vld [vmem:[%s668 + $0x288] sm:$0xff]
        %v897 = vld [vmem:[%s668 + $0x290] sm:$0xff]
        %v898 = vld [vmem:[%s668 + $0x298] sm:$0xff]
        %v899 = vld [vmem:[%s668 + $0x2a0] sm:$0xff]
        %v900 = vld [vmem:[%s668 + $0x2a8] sm:$0xff]
        %v901 = vld [vmem:[%s668 + $0x2b0] sm:$0xff]
        %v902 = vld [vmem:[%s668 + $0x2b8] sm:$0xff]
        %v903 = vld [vmem:[%s668 + $0x2c0] sm:$0xff]
        %v904 = vld [vmem:[%s668 + $0x2c8] sm:$0xff]
        %v905 = vld [vmem:[%s668 + $0x2d0] sm:$0xff]
        %v906 = vld [vmem:[%s668 + $0x2d8] sm:$0xff]
        %v907 = vld [vmem:[%s668 + $0x2e0] sm:$0xff]
        %v908 = vld [vmem:[%s668 + $0x2e8] sm:$0xff]
        %v909 = vld [vmem:[%s668 + $0x2f0] sm:$0xff]
        %v910 = vld [vmem:[%s668 + $0x2f8] sm:$0xff]
        %v911 = vld [vmem:[%s668 + $0x300] sm:$0xff]
        %v912 = vld [vmem:[%s668 + $0x308] sm:$0xff]
        %v913 = vld [vmem:[%s668 + $0x310] sm:$0xff]
        %v914 = vld [vmem:[%s668 + $0x318] sm:$0xff]
        %v915 = vld [vmem:[%s668 + $0x320] sm:$0xff]
        %v916 = vld [vmem:[%s668 + $0x328] sm:$0xff]
        %v917 = vld [vmem:[%s668 + $0x330] sm:$0xff]
        %v918 = vld [vmem:[%s668 + $0x338] sm:$0xff]
        %v919 = vld [vmem:[%s668 + $0x340] sm:$0xff]
        %v920 = vld [vmem:[%s668 + $0x348] sm:$0xff]
        %v921 = vld [vmem:[%s668 + $0x350] sm:$0xff]
        %v922 = vld [vmem:[%s668 + $0x358] sm:$0xff]
        %v923 = vld [vmem:[%s668 + $0x360] sm:$0xff]
        %v924 = vld [vmem:[%s668 + $0x368] sm:$0xff]
        %v925 = vld [vmem:[%s668 + $0x370] sm:$0xff]
        %v926 = vld [vmem:[%s668 + $0x378] sm:$0xff]
        %v927 = vld [vmem:[%s668 + $0x380] sm:$0xff]
        %v928 = vld [vmem:[%s668 + $0x388] sm:$0xff]
        %v929 = vld [vmem:[%s668 + $0x390] sm:$0xff]
        %v930 = vld [vmem:[%s668 + $0x398] sm:$0xff]
        %v931 = vld [vmem:[%s668 + $0x3a0] sm:$0xff]
        %v932 = vld [vmem:[%s668 + $0x3a8] sm:$0xff]
        %v933 = vld [vmem:[%s668 + $0x3b0] sm:$0xff]
        %v934 = vld [vmem:[%s668 + $0x3b8] sm:$0xff]
        %v935 = vld [vmem:[%s668 + $0x3c0] sm:$0xff]
        %v936 = vld [vmem:[%s668 + $0x3c8] sm:$0xff]
        %v937 = vld [vmem:[%s668 + $0x3d0] sm:$0xff]
        %v938 = vld [vmem:[%s668 + $0x3d8] sm:$0xff]
        %v939 = vld [vmem:[%s668 + $0x3e0] sm:$0xff]
        %v940 = vld [vmem:[%s668 + $0x3e8] sm:$0xff]
        %v941 = vld [vmem:[%s668 + $0x3f0] sm:$0xff]
        %v942 = vld [vmem:[%s668 + $0x3f8] sm:$0xff]
        %v943 = vld [vmem:[%s668 + $0x400] sm:$0xff]
        %v944 = vld [vmem:[%s668 + $0x408] sm:$0xff]
        %v945 = vld [vmem:[%s668 + $0x410] sm:$0xff]
        %v946 = vld [vmem:[%s668 + $0x418] sm:$0xff]
        %v947 = vld [vmem:[%s668 + $0x420] sm:$0xff]
        %v948 = vld [vmem:[%s668 + $0x428] sm:$0xff]
        %v949 = vld [vmem:[%s668 + $0x430] sm:$0xff]
        %v950 = vld [vmem:[%s668 + $0x438] sm:$0xff]
        %v951 = vld [vmem:[%s668 + $0x440] sm:$0xff]
        %v952 = vld [vmem:[%s668 + $0x448] sm:$0xff]
        %v953 = vld [vmem:[%s668 + $0x450] sm:$0xff]
        %v954 = vld [vmem:[%s668 + $0x458] sm:$0xff]
        %v955 = vld [vmem:[%s668 + $0x460] sm:$0xff]
        %v956 = vld [vmem:[%s668 + $0x468] sm:$0xff]
        %v957 = vld [vmem:[%s668 + $0x470] sm:$0xff]
        %v958 = vld [vmem:[%s668 + $0x478] sm:$0xff]
        %v959 = vld [vmem:[%s668 + $0x480] sm:$0xff]
        %v960 = vld [vmem:[%s668 + $0x488] sm:$0xff]
        %v961 = vld [vmem:[%s668 + $0x490] sm:$0xff]
        %v962 = vld [vmem:[%s668 + $0x498] sm:$0xff]
        %v963 = vld [vmem:[%s668 + $0x4a0] sm:$0xff]
        %v964 = vld [vmem:[%s668 + $0x4a8] sm:$0xff]
        %v965 = vld [vmem:[%s668 + $0x4b0] sm:$0xff]
        %v966 = vld [vmem:[%s668 + $0x4b8] sm:$0xff]
        %v967 = vld [vmem:[%s668 + $0x4c0] sm:$0xff]
        %v968 = vld [vmem:[%s668 + $0x4c8] sm:$0xff]
        %v969 = vld [vmem:[%s668 + $0x4d0] sm:$0xff]
        %v970 = vld [vmem:[%s668 + $0x4d8] sm:$0xff]
        %v971 = vld [vmem:[%s668 + $0x4e0] sm:$0xff]
        %v972 = vld [vmem:[%s668 + $0x4e8] sm:$0xff]
        %v973 = vld [vmem:[%s668 + $0x4f0] sm:$0xff]
        %v974 = vld [vmem:[%s668 + $0x4f8] sm:$0xff]
        %v975 = vld [vmem:[%s668 + $0x500] sm:$0xff]
        %v976 = vld [vmem:[%s668 + $0x508] sm:$0xff]
        %v977 = vld [vmem:[%s668 + $0x510] sm:$0xff]
        %v978 = vld [vmem:[%s668 + $0x518] sm:$0xff]
        %v979 = vld [vmem:[%s668 + $0x520] sm:$0xff]
        %v980 = vld [vmem:[%s668 + $0x528] sm:$0xff]
        %v981 = vld [vmem:[%s668 + $0x530] sm:$0xff]
        %v982 = vld [vmem:[%s668 + $0x538] sm:$0xff]
        %v983 = vld [vmem:[%s668 + $0x540] sm:$0xff]
        %v984 = vld [vmem:[%s668 + $0x548] sm:$0xff]
        %v985 = vld [vmem:[%s668 + $0x550] sm:$0xff]
        %v986 = vld [vmem:[%s668 + $0x558] sm:$0xff]
        %v987 = vld [vmem:[%s668 + $0x560] sm:$0xff]
        %v988 = vld [vmem:[%s668 + $0x568] sm:$0xff]
        %v989 = vld [vmem:[%s668 + $0x570] sm:$0xff]
        %v990 = vld [vmem:[%s668 + $0x578] sm:$0xff]
        %v991 = vld [vmem:[%s668 + $0x580] sm:$0xff]
        %v992 = vld [vmem:[%s668 + $0x588] sm:$0xff]
        %v993 = vld [vmem:[%s668 + $0x590] sm:$0xff]
        %v994 = vld [vmem:[%s668 + $0x598] sm:$0xff]
        %v995 = vld [vmem:[%s668 + $0x5a0] sm:$0xff]
        %v996 = vld [vmem:[%s668 + $0x5a8] sm:$0xff]
        %v997 = vld [vmem:[%s668 + $0x5b0] sm:$0xff]
        %v998 = vld [vmem:[%s668 + $0x5b8] sm:$0xff]
        %v999 = vld [vmem:[%s668 + $0x5c0] sm:$0xff]
        %v1000 = vld [vmem:[%s668 + $0x5c8] sm:$0xff]
        %v1001 = vld [vmem:[%s668 + $0x5d0] sm:$0xff]
        %v1002 = vld [vmem:[%s668 + $0x5d8] sm:$0xff]
        %v1003 = vld [vmem:[%s668 + $0x5e0] sm:$0xff]
        %v1004 = vld [vmem:[%s668 + $0x5e8] sm:$0xff]
        %v1005 = vld [vmem:[%s668 + $0x5f0] sm:$0xff]
        %v1006 = vld [vmem:[%s668 + $0x5f8] sm:$0xff]
        %v1007 = vld [vmem:[%s678] sm:$0xf]
        %v1009 = vperm.slane %v1007, 0
        %v1010 = vperm.slane %v1007, 1
        %v1011 = vperm.slane %v1007, 2
        %v1012 = vperm.slane %v1007, 3
        %v1209 = vunpack.c.l.b16 %v815
        %v1210 = vunpack.c.h.b16 %v815
        %v1211 = vunpack.c.l.b16 %v816
        %v1212 = vunpack.c.h.b16 %v816
        %v1213 = vunpack.c.l.b16 %v817
        %v1214 = vunpack.c.h.b16 %v817
        %v1215 = vunpack.c.l.b16 %v818
        %v1216 = vunpack.c.h.b16 %v818
        %v1217 = vunpack.c.l.b16 %v819
        %v1218 = vunpack.c.h.b16 %v819
        %v1219 = vunpack.c.l.b16 %v820
        %v1220 = vunpack.c.h.b16 %v820
        %v1221 = vunpack.c.l.b16 %v821
        %v1222 = vunpack.c.h.b16 %v821
        %v1223 = vunpack.c.l.b16 %v822
        %v1224 = vunpack.c.h.b16 %v822
        %v1225 = vunpack.c.l.b16 %v823
        %v1226 = vunpack.c.h.b16 %v823
        %v1227 = vunpack.c.l.b16 %v824
        %v1228 = vunpack.c.h.b16 %v824
        %v1229 = vunpack.c.l.b16 %v825
        %v1230 = vunpack.c.h.b16 %v825
        %v1231 = vunpack.c.l.b16 %v826
        %v1232 = vunpack.c.h.b16 %v826
        %v1233 = vunpack.c.l.b16 %v827
        %v1234 = vunpack.c.h.b16 %v827
        %v1235 = vunpack.c.l.b16 %v828
        %v1236 = vunpack.c.h.b16 %v828
        %v1237 = vunpack.c.l.b16 %v829
        %v1238 = vunpack.c.h.b16 %v829
        %v1239 = vunpack.c.l.b16 %v830
        %v1240 = vunpack.c.h.b16 %v830
        %v1241 = vunpack.c.l.b16 %v831
        %v1242 = vunpack.c.h.b16 %v831
        %v1243 = vunpack.c.l.b16 %v832
        %v1244 = vunpack.c.h.b16 %v832
        %v1245 = vunpack.c.l.b16 %v833
        %v1246 = vunpack.c.h.b16 %v833
        %v1247 = vunpack.c.l.b16 %v834
        %v1248 = vunpack.c.h.b16 %v834
        %v1249 = vunpack.c.l.b16 %v835
        %v1250 = vunpack.c.h.b16 %v835
        %v1251 = vunpack.c.l.b16 %v836
        %v1252 = vunpack.c.h.b16 %v836
        %v1253 = vunpack.c.l.b16 %v837
        %v1254 = vunpack.c.h.b16 %v837
        %v1255 = vunpack.c.l.b16 %v838
        %v1256 = vunpack.c.h.b16 %v838
        %v1257 = vunpack.c.l.b16 %v839
        %v1258 = vunpack.c.h.b16 %v839
        %v1259 = vunpack.c.l.b16 %v840
        %v1260 = vunpack.c.h.b16 %v840
        %v1261 = vunpack.c.l.b16 %v841
        %v1262 = vunpack.c.h.b16 %v841
        %v1263 = vunpack.c.l.b16 %v842
        %v1264 = vunpack.c.h.b16 %v842
        %v1265 = vunpack.c.l.b16 %v843
        %v1266 = vunpack.c.h.b16 %v843
        %v1267 = vunpack.c.l.b16 %v844
        %v1268 = vunpack.c.h.b16 %v844
        %v1269 = vunpack.c.l.b16 %v845
        %v1270 = vunpack.c.h.b16 %v845
        %v1271 = vunpack.c.l.b16 %v846
        %v1272 = vunpack.c.h.b16 %v846
        %v1273 = vunpack.c.l.b16 %v847
        %v1274 = vunpack.c.h.b16 %v847
        %v1275 = vunpack.c.l.b16 %v848
        %v1276 = vunpack.c.h.b16 %v848
        %v1277 = vunpack.c.l.b16 %v849
        %v1278 = vunpack.c.h.b16 %v849
        %v1279 = vunpack.c.l.b16 %v850
        %v1280 = vunpack.c.h.b16 %v850
        %v1281 = vunpack.c.l.b16 %v851
        %v1282 = vunpack.c.h.b16 %v851
        %v1283 = vunpack.c.l.b16 %v852
        %v1284 = vunpack.c.h.b16 %v852
        %v1285 = vunpack.c.l.b16 %v853
        %v1286 = vunpack.c.h.b16 %v853
        %v1287 = vunpack.c.l.b16 %v854
        %v1288 = vunpack.c.h.b16 %v854
        %v1289 = vunpack.c.l.b16 %v855
        %v1290 = vunpack.c.h.b16 %v855
        %v1291 = vunpack.c.l.b16 %v856
        %v1292 = vunpack.c.h.b16 %v856
        %v1293 = vunpack.c.l.b16 %v857
        %v1294 = vunpack.c.h.b16 %v857
        %v1295 = vunpack.c.l.b16 %v858
        %v1296 = vunpack.c.h.b16 %v858
        %v1297 = vunpack.c.l.b16 %v859
        %v1298 = vunpack.c.h.b16 %v859
        %v1299 = vunpack.c.l.b16 %v860
        %v1300 = vunpack.c.h.b16 %v860
        %v1301 = vunpack.c.l.b16 %v861
        %v1302 = vunpack.c.h.b16 %v861
        %v1303 = vunpack.c.l.b16 %v862
        %v1304 = vunpack.c.h.b16 %v862
        %v1305 = vunpack.c.l.b16 %v863
        %v1306 = vunpack.c.h.b16 %v863
        %v1307 = vunpack.c.l.b16 %v864
        %v1308 = vunpack.c.h.b16 %v864
        %v1309 = vunpack.c.l.b16 %v865
        %v1310 = vunpack.c.h.b16 %v865
        %v1311 = vunpack.c.l.b16 %v866
        %v1312 = vunpack.c.h.b16 %v866
        %v1313 = vunpack.c.l.b16 %v867
        %v1314 = vunpack.c.h.b16 %v867
        %v1315 = vunpack.c.l.b16 %v868
        %v1316 = vunpack.c.h.b16 %v868
        %v1317 = vunpack.c.l.b16 %v869
        %v1318 = vunpack.c.h.b16 %v869
        %v1319 = vunpack.c.l.b16 %v870
        %v1320 = vunpack.c.h.b16 %v870
        %v1321 = vunpack.c.l.b16 %v871
        %v1322 = vunpack.c.h.b16 %v871
        %v1323 = vunpack.c.l.b16 %v872
        %v1324 = vunpack.c.h.b16 %v872
        %v1325 = vunpack.c.l.b16 %v873
        %v1326 = vunpack.c.h.b16 %v873
        %v1327 = vunpack.c.l.b16 %v874
        %v1328 = vunpack.c.h.b16 %v874
        %v1329 = vunpack.c.l.b16 %v875
        %v1330 = vunpack.c.h.b16 %v875
        %v1331 = vunpack.c.l.b16 %v876
        %v1332 = vunpack.c.h.b16 %v876
        %v1333 = vunpack.c.l.b16 %v877
        %v1334 = vunpack.c.h.b16 %v877
        %v1335 = vunpack.c.l.b16 %v878
        %v1336 = vunpack.c.h.b16 %v878
        %v1337 = vunpack.c.l.b16 %v879
        %v1338 = vunpack.c.h.b16 %v879
        %v1339 = vunpack.c.l.b16 %v880
        %v1340 = vunpack.c.h.b16 %v880
        %v1341 = vunpack.c.l.b16 %v881
        %v1342 = vunpack.c.h.b16 %v881
        %v1343 = vunpack.c.l.b16 %v882
        %v1344 = vunpack.c.h.b16 %v882
        %v1345 = vunpack.c.l.b16 %v883
        %v1346 = vunpack.c.h.b16 %v883
        %v1347 = vunpack.c.l.b16 %v884
        %v1348 = vunpack.c.h.b16 %v884
        %v1349 = vunpack.c.l.b16 %v885
        %v1350 = vunpack.c.h.b16 %v885
        %v1351 = vunpack.c.l.b16 %v886
        %v1352 = vunpack.c.h.b16 %v886
        %v1353 = vunpack.c.l.b16 %v887
        %v1354 = vunpack.c.h.b16 %v887
        %v1355 = vunpack.c.l.b16 %v888
        %v1356 = vunpack.c.h.b16 %v888
        %v1357 = vunpack.c.l.b16 %v889
        %v1358 = vunpack.c.h.b16 %v889
        %v1359 = vunpack.c.l.b16 %v890
        %v1360 = vunpack.c.h.b16 %v890
        %v1361 = vunpack.c.l.b16 %v891
        %v1362 = vunpack.c.h.b16 %v891
        %v1363 = vunpack.c.l.b16 %v892
        %v1364 = vunpack.c.h.b16 %v892
        %v1365 = vunpack.c.l.b16 %v893
        %v1366 = vunpack.c.h.b16 %v893
        %v1367 = vunpack.c.l.b16 %v894
        %v1368 = vunpack.c.h.b16 %v894
        %v1369 = vunpack.c.l.b16 %v895
        %v1370 = vunpack.c.h.b16 %v895
        %v1371 = vunpack.c.l.b16 %v896
        %v1372 = vunpack.c.h.b16 %v896
        %v1373 = vunpack.c.l.b16 %v897
        %v1374 = vunpack.c.h.b16 %v897
        %v1375 = vunpack.c.l.b16 %v898
        %v1376 = vunpack.c.h.b16 %v898
        %v1377 = vunpack.c.l.b16 %v899
        %v1378 = vunpack.c.h.b16 %v899
        %v1379 = vunpack.c.l.b16 %v900
        %v1380 = vunpack.c.h.b16 %v900
        %v1381 = vunpack.c.l.b16 %v901
        %v1382 = vunpack.c.h.b16 %v901
        %v1383 = vunpack.c.l.b16 %v902
        %v1384 = vunpack.c.h.b16 %v902
        %v1385 = vunpack.c.l.b16 %v903
        %v1386 = vunpack.c.h.b16 %v903
        %v1387 = vunpack.c.l.b16 %v904
        %v1388 = vunpack.c.h.b16 %v904
        %v1389 = vunpack.c.l.b16 %v905
        %v1390 = vunpack.c.h.b16 %v905
        %v1391 = vunpack.c.l.b16 %v906
        %v1392 = vunpack.c.h.b16 %v906
        %v1393 = vunpack.c.l.b16 %v907
        %v1394 = vunpack.c.h.b16 %v907
        %v1395 = vunpack.c.l.b16 %v908
        %v1396 = vunpack.c.h.b16 %v908
        %v1397 = vunpack.c.l.b16 %v909
        %v1398 = vunpack.c.h.b16 %v909
        %v1399 = vunpack.c.l.b16 %v910
        %v1400 = vunpack.c.h.b16 %v910
        %v1401 = vunpack.c.l.b16 %v911
        %v1402 = vunpack.c.h.b16 %v911
        %v1403 = vunpack.c.l.b16 %v912
        %v1404 = vunpack.c.h.b16 %v912
        %v1405 = vunpack.c.l.b16 %v913
        %v1406 = vunpack.c.h.b16 %v913
        %v1407 = vunpack.c.l.b16 %v914
        %v1408 = vunpack.c.h.b16 %v914
        %v1409 = vunpack.c.l.b16 %v915
        %v1410 = vunpack.c.h.b16 %v915
        %v1411 = vunpack.c.l.b16 %v916
        %v1412 = vunpack.c.h.b16 %v916
        %v1413 = vunpack.c.l.b16 %v917
        %v1414 = vunpack.c.h.b16 %v917
        %v1415 = vunpack.c.l.b16 %v918
        %v1416 = vunpack.c.h.b16 %v918
        %v1417 = vunpack.c.l.b16 %v919
        %v1418 = vunpack.c.h.b16 %v919
        %v1419 = vunpack.c.l.b16 %v920
        %v1420 = vunpack.c.h.b16 %v920
        %v1421 = vunpack.c.l.b16 %v921
        %v1422 = vunpack.c.h.b16 %v921
        %v1423 = vunpack.c.l.b16 %v922
        %v1424 = vunpack.c.h.b16 %v922
        %v1425 = vunpack.c.l.b16 %v923
        %v1426 = vunpack.c.h.b16 %v923
        %v1427 = vunpack.c.l.b16 %v924
        %v1428 = vunpack.c.h.b16 %v924
        %v1429 = vunpack.c.l.b16 %v925
        %v1430 = vunpack.c.h.b16 %v925
        %v1431 = vunpack.c.l.b16 %v926
        %v1432 = vunpack.c.h.b16 %v926
        %v1433 = vunpack.c.l.b16 %v927
        %v1434 = vunpack.c.h.b16 %v927
        %v1435 = vunpack.c.l.b16 %v928
        %v1436 = vunpack.c.h.b16 %v928
        %v1437 = vunpack.c.l.b16 %v929
        %v1438 = vunpack.c.h.b16 %v929
        %v1439 = vunpack.c.l.b16 %v930
        %v1440 = vunpack.c.h.b16 %v930
        %v1441 = vunpack.c.l.b16 %v931
        %v1442 = vunpack.c.h.b16 %v931
        %v1443 = vunpack.c.l.b16 %v932
        %v1444 = vunpack.c.h.b16 %v932
        %v1445 = vunpack.c.l.b16 %v933
        %v1446 = vunpack.c.h.b16 %v933
        %v1447 = vunpack.c.l.b16 %v934
        %v1448 = vunpack.c.h.b16 %v934
        %v1449 = vunpack.c.l.b16 %v935
        %v1450 = vunpack.c.h.b16 %v935
        %v1451 = vunpack.c.l.b16 %v936
        %v1452 = vunpack.c.h.b16 %v936
        %v1453 = vunpack.c.l.b16 %v937
        %v1454 = vunpack.c.h.b16 %v937
        %v1455 = vunpack.c.l.b16 %v938
        %v1456 = vunpack.c.h.b16 %v938
        %v1457 = vunpack.c.l.b16 %v939
        %v1458 = vunpack.c.h.b16 %v939
        %v1459 = vunpack.c.l.b16 %v940
        %v1460 = vunpack.c.h.b16 %v940
        %v1461 = vunpack.c.l.b16 %v941
        %v1462 = vunpack.c.h.b16 %v941
        %v1463 = vunpack.c.l.b16 %v942
        %v1464 = vunpack.c.h.b16 %v942
        %v1465 = vunpack.c.l.b16 %v943
        %v1466 = vunpack.c.h.b16 %v943
        %v1467 = vunpack.c.l.b16 %v944
        %v1468 = vunpack.c.h.b16 %v944
        %v1469 = vunpack.c.l.b16 %v945
        %v1470 = vunpack.c.h.b16 %v945
        %v1471 = vunpack.c.l.b16 %v946
        %v1472 = vunpack.c.h.b16 %v946
        %v1473 = vunpack.c.l.b16 %v947
        %v1474 = vunpack.c.h.b16 %v947
        %v1475 = vunpack.c.l.b16 %v948
        %v1476 = vunpack.c.h.b16 %v948
        %v1477 = vunpack.c.l.b16 %v949
        %v1478 = vunpack.c.h.b16 %v949
        %v1479 = vunpack.c.l.b16 %v950
        %v1480 = vunpack.c.h.b16 %v950
        %v1481 = vunpack.c.l.b16 %v951
        %v1482 = vunpack.c.h.b16 %v951
        %v1483 = vunpack.c.l.b16 %v952
        %v1484 = vunpack.c.h.b16 %v952
        %v1485 = vunpack.c.l.b16 %v953
        %v1486 = vunpack.c.h.b16 %v953
        %v1487 = vunpack.c.l.b16 %v954
        %v1488 = vunpack.c.h.b16 %v954
        %v1489 = vunpack.c.l.b16 %v955
        %v1490 = vunpack.c.h.b16 %v955
        %v1491 = vunpack.c.l.b16 %v956
        %v1492 = vunpack.c.h.b16 %v956
        %v1493 = vunpack.c.l.b16 %v957
        %v1494 = vunpack.c.h.b16 %v957
        %v1495 = vunpack.c.l.b16 %v958
        %v1496 = vunpack.c.h.b16 %v958
        %v1497 = vunpack.c.l.b16 %v959
        %v1498 = vunpack.c.h.b16 %v959
        %v1499 = vunpack.c.l.b16 %v960
        %v1500 = vunpack.c.h.b16 %v960
        %v1501 = vunpack.c.l.b16 %v961
        %v1502 = vunpack.c.h.b16 %v961
        %v1503 = vunpack.c.l.b16 %v962
        %v1504 = vunpack.c.h.b16 %v962
        %v1505 = vunpack.c.l.b16 %v963
        %v1506 = vunpack.c.h.b16 %v963
        %v1507 = vunpack.c.l.b16 %v964
        %v1508 = vunpack.c.h.b16 %v964
        %v1509 = vunpack.c.l.b16 %v965
        %v1510 = vunpack.c.h.b16 %v965
        %v1511 = vunpack.c.l.b16 %v966
        %v1512 = vunpack.c.h.b16 %v966
        %v1513 = vunpack.c.l.b16 %v967
        %v1514 = vunpack.c.h.b16 %v967
        %v1515 = vunpack.c.l.b16 %v968
        %v1516 = vunpack.c.h.b16 %v968
        %v1517 = vunpack.c.l.b16 %v969
        %v1518 = vunpack.c.h.b16 %v969
        %v1519 = vunpack.c.l.b16 %v970
        %v1520 = vunpack.c.h.b16 %v970
        %v1521 = vunpack.c.l.b16 %v971
        %v1522 = vunpack.c.h.b16 %v971
        %v1523 = vunpack.c.l.b16 %v972
        %v1524 = vunpack.c.h.b16 %v972
        %v1525 = vunpack.c.l.b16 %v973
        %v1526 = vunpack.c.h.b16 %v973
        %v1527 = vunpack.c.l.b16 %v974
        %v1528 = vunpack.c.h.b16 %v974
        %v1529 = vunpack.c.l.b16 %v975
        %v1530 = vunpack.c.h.b16 %v975
        %v1531 = vunpack.c.l.b16 %v976
        %v1532 = vunpack.c.h.b16 %v976
        %v1533 = vunpack.c.l.b16 %v977
        %v1534 = vunpack.c.h.b16 %v977
        %v1535 = vunpack.c.l.b16 %v978
        %v1536 = vunpack.c.h.b16 %v978
        %v1537 = vunpack.c.l.b16 %v979
        %v1538 = vunpack.c.h.b16 %v979
        %v1539 = vunpack.c.l.b16 %v980
        %v1540 = vunpack.c.h.b16 %v980
        %v1541 = vunpack.c.l.b16 %v981
        %v1542 = vunpack.c.h.b16 %v981
        %v1543 = vunpack.c.l.b16 %v982
        %v1544 = vunpack.c.h.b16 %v982
        %v1545 = vunpack.c.l.b16 %v983
        %v1546 = vunpack.c.h.b16 %v983
        %v1547 = vunpack.c.l.b16 %v984
        %v1548 = vunpack.c.h.b16 %v984
        %v1549 = vunpack.c.l.b16 %v985
        %v1550 = vunpack.c.h.b16 %v985
        %v1551 = vunpack.c.l.b16 %v986
        %v1552 = vunpack.c.h.b16 %v986
        %v1553 = vunpack.c.l.b16 %v987
        %v1554 = vunpack.c.h.b16 %v987
        %v1555 = vunpack.c.l.b16 %v988
        %v1556 = vunpack.c.h.b16 %v988
        %v1557 = vunpack.c.l.b16 %v989
        %v1558 = vunpack.c.h.b16 %v989
        %v1559 = vunpack.c.l.b16 %v990
        %v1560 = vunpack.c.h.b16 %v990
        %v1561 = vunpack.c.l.b16 %v991
        %v1562 = vunpack.c.h.b16 %v991
        %v1563 = vunpack.c.l.b16 %v992
        %v1564 = vunpack.c.h.b16 %v992
        %v1565 = vunpack.c.l.b16 %v993
        %v1566 = vunpack.c.h.b16 %v993
        %v1567 = vunpack.c.l.b16 %v994
        %v1568 = vunpack.c.h.b16 %v994
        %v1569 = vunpack.c.l.b16 %v995
        %v1570 = vunpack.c.h.b16 %v995
        %v1571 = vunpack.c.l.b16 %v996
        %v1572 = vunpack.c.h.b16 %v996
        %v1573 = vunpack.c.l.b16 %v997
        %v1574 = vunpack.c.h.b16 %v997
        %v1575 = vunpack.c.l.b16 %v998
        %v1576 = vunpack.c.h.b16 %v998
        %v1577 = vunpack.c.l.b16 %v999
        %v1578 = vunpack.c.h.b16 %v999
        %v1579 = vunpack.c.l.b16 %v1000
        %v1580 = vunpack.c.h.b16 %v1000
        %v1581 = vunpack.c.l.b16 %v1001
        %v1582 = vunpack.c.h.b16 %v1001
        %v1583 = vunpack.c.l.b16 %v1002
        %v1584 = vunpack.c.h.b16 %v1002
        %v1585 = vunpack.c.l.b16 %v1003
        %v1586 = vunpack.c.h.b16 %v1003
        %v1587 = vunpack.c.l.b16 %v1004
        %v1588 = vunpack.c.h.b16 %v1004
        %v1589 = vunpack.c.l.b16 %v1005
        %v1590 = vunpack.c.h.b16 %v1005
        %v1591 = vunpack.c.l.b16 %v1006
        %v1592 = vunpack.c.h.b16 %v1006
        %v1593 = vpack.c.b16 %v1213, %v1209
        %v1594 = vpack.c.b16 %v1214, %v1210
        %v1595 = vpack.c.b16 %v1215, %v1211
        %v1596 = vpack.c.b16 %v1216, %v1212
        %v1597 = vpack.c.b16 %v1221, %v1217
        %v1598 = vpack.c.b16 %v1222, %v1218
        %v1599 = vpack.c.b16 %v1223, %v1219
        %v1600 = vpack.c.b16 %v1224, %v1220
        %v1601 = vpack.c.b16 %v1229, %v1225
        %v1602 = vpack.c.b16 %v1230, %v1226
        %v1603 = vpack.c.b16 %v1231, %v1227
        %v1604 = vpack.c.b16 %v1232, %v1228
        %v1605 = vpack.c.b16 %v1237, %v1233
        %v1606 = vpack.c.b16 %v1238, %v1234
        %v1607 = vpack.c.b16 %v1239, %v1235
        %v1608 = vpack.c.b16 %v1240, %v1236
        %v1609 = vpack.c.b16 %v1245, %v1241
        %v1610 = vpack.c.b16 %v1246, %v1242
        %v1611 = vpack.c.b16 %v1247, %v1243
        %v1612 = vpack.c.b16 %v1248, %v1244
        %v1613 = vpack.c.b16 %v1253, %v1249
        %v1614 = vpack.c.b16 %v1254, %v1250
        %v1615 = vpack.c.b16 %v1255, %v1251
        %v1616 = vpack.c.b16 %v1256, %v1252
        %v1617 = vpack.c.b16 %v1261, %v1257
        %v1618 = vpack.c.b16 %v1262, %v1258
        %v1619 = vpack.c.b16 %v1263, %v1259
        %v1620 = vpack.c.b16 %v1264, %v1260
        %v1621 = vpack.c.b16 %v1269, %v1265
        %v1622 = vpack.c.b16 %v1270, %v1266
        %v1623 = vpack.c.b16 %v1271, %v1267
        %v1624 = vpack.c.b16 %v1272, %v1268
        %v1625 = vpack.c.b16 %v1277, %v1273
        %v1626 = vpack.c.b16 %v1278, %v1274
        %v1627 = vpack.c.b16 %v1279, %v1275
        %v1628 = vpack.c.b16 %v1280, %v1276
        %v1629 = vpack.c.b16 %v1285, %v1281
        %v1630 = vpack.c.b16 %v1286, %v1282
        %v1631 = vpack.c.b16 %v1287, %v1283
        %v1632 = vpack.c.b16 %v1288, %v1284
        %v1633 = vpack.c.b16 %v1293, %v1289
        %v1634 = vpack.c.b16 %v1294, %v1290
        %v1635 = vpack.c.b16 %v1295, %v1291
        %v1636 = vpack.c.b16 %v1296, %v1292
        %v1637 = vpack.c.b16 %v1301, %v1297
        %v1638 = vpack.c.b16 %v1302, %v1298
        %v1639 = vpack.c.b16 %v1303, %v1299
        %v1640 = vpack.c.b16 %v1304, %v1300
        %v1641 = vpack.c.b16 %v1309, %v1305
        %v1642 = vpack.c.b16 %v1310, %v1306
        %v1643 = vpack.c.b16 %v1311, %v1307
        %v1644 = vpack.c.b16 %v1312, %v1308
        %v1645 = vpack.c.b16 %v1317, %v1313
        %v1646 = vpack.c.b16 %v1318, %v1314
        %v1647 = vpack.c.b16 %v1319, %v1315
        %v1648 = vpack.c.b16 %v1320, %v1316
        %v1649 = vpack.c.b16 %v1325, %v1321
        %v1650 = vpack.c.b16 %v1326, %v1322
        %v1651 = vpack.c.b16 %v1327, %v1323
        %v1652 = vpack.c.b16 %v1328, %v1324
        %v1653 = vpack.c.b16 %v1333, %v1329
        %v1654 = vpack.c.b16 %v1334, %v1330
        %v1655 = vpack.c.b16 %v1335, %v1331
        %v1656 = vpack.c.b16 %v1336, %v1332
        %v1657 = vpack.c.b16 %v1341, %v1337
        %v1658 = vpack.c.b16 %v1342, %v1338
        %v1659 = vpack.c.b16 %v1343, %v1339
        %v1660 = vpack.c.b16 %v1344, %v1340
        %v1661 = vpack.c.b16 %v1349, %v1345
        %v1662 = vpack.c.b16 %v1350, %v1346
        %v1663 = vpack.c.b16 %v1351, %v1347
        %v1664 = vpack.c.b16 %v1352, %v1348
        %v1665 = vpack.c.b16 %v1357, %v1353
        %v1666 = vpack.c.b16 %v1358, %v1354
        %v1667 = vpack.c.b16 %v1359, %v1355
        %v1668 = vpack.c.b16 %v1360, %v1356
        %v1669 = vpack.c.b16 %v1365, %v1361
        %v1670 = vpack.c.b16 %v1366, %v1362
        %v1671 = vpack.c.b16 %v1367, %v1363
        %v1672 = vpack.c.b16 %v1368, %v1364
        %v1673 = vpack.c.b16 %v1373, %v1369
        %v1674 = vpack.c.b16 %v1374, %v1370
        %v1675 = vpack.c.b16 %v1375, %v1371
        %v1676 = vpack.c.b16 %v1376, %v1372
        %v1677 = vpack.c.b16 %v1381, %v1377
        %v1678 = vpack.c.b16 %v1382, %v1378
        %v1679 = vpack.c.b16 %v1383, %v1379
        %v1680 = vpack.c.b16 %v1384, %v1380
        %v1681 = vpack.c.b16 %v1389, %v1385
        %v1682 = vpack.c.b16 %v1390, %v1386
        %v1683 = vpack.c.b16 %v1391, %v1387
        %v1684 = vpack.c.b16 %v1392, %v1388
        %v1685 = vpack.c.b16 %v1397, %v1393
        %v1686 = vpack.c.b16 %v1398, %v1394
        %v1687 = vpack.c.b16 %v1399, %v1395
        %v1688 = vpack.c.b16 %v1400, %v1396
        %v1689 = vpack.c.b16 %v1405, %v1401
        %v1690 = vpack.c.b16 %v1406, %v1402
        %v1691 = vpack.c.b16 %v1407, %v1403
        %v1692 = vpack.c.b16 %v1408, %v1404
        %v1693 = vpack.c.b16 %v1413, %v1409
        %v1694 = vpack.c.b16 %v1414, %v1410
        %v1695 = vpack.c.b16 %v1415, %v1411
        %v1696 = vpack.c.b16 %v1416, %v1412
        %v1697 = vpack.c.b16 %v1421, %v1417
        %v1698 = vpack.c.b16 %v1422, %v1418
        %v1699 = vpack.c.b16 %v1423, %v1419
        %v1700 = vpack.c.b16 %v1424, %v1420
        %v1701 = vpack.c.b16 %v1429, %v1425
        %v1702 = vpack.c.b16 %v1430, %v1426
        %v1703 = vpack.c.b16 %v1431, %v1427
        %v1704 = vpack.c.b16 %v1432, %v1428
        %v1705 = vpack.c.b16 %v1437, %v1433
        %v1706 = vpack.c.b16 %v1438, %v1434
        %v1707 = vpack.c.b16 %v1439, %v1435
        %v1708 = vpack.c.b16 %v1440, %v1436
        %v1709 = vpack.c.b16 %v1445, %v1441
        %v1710 = vpack.c.b16 %v1446, %v1442
        %v1711 = vpack.c.b16 %v1447, %v1443
        %v1712 = vpack.c.b16 %v1448, %v1444
        %v1713 = vpack.c.b16 %v1453, %v1449
        %v1714 = vpack.c.b16 %v1454, %v1450
        %v1715 = vpack.c.b16 %v1455, %v1451
        %v1716 = vpack.c.b16 %v1456, %v1452
        %v1717 = vpack.c.b16 %v1461, %v1457
        %v1718 = vpack.c.b16 %v1462, %v1458
        %v1719 = vpack.c.b16 %v1463, %v1459
        %v1720 = vpack.c.b16 %v1464, %v1460
        %v1721 = vpack.c.b16 %v1469, %v1465
        %v1722 = vpack.c.b16 %v1470, %v1466
        %v1723 = vpack.c.b16 %v1471, %v1467
        %v1724 = vpack.c.b16 %v1472, %v1468
        %v1725 = vpack.c.b16 %v1477, %v1473
        %v1726 = vpack.c.b16 %v1478, %v1474
        %v1727 = vpack.c.b16 %v1479, %v1475
        %v1728 = vpack.c.b16 %v1480, %v1476
        %v1729 = vpack.c.b16 %v1485, %v1481
        %v1730 = vpack.c.b16 %v1486, %v1482
        %v1731 = vpack.c.b16 %v1487, %v1483
        %v1732 = vpack.c.b16 %v1488, %v1484
        %v1733 = vpack.c.b16 %v1493, %v1489
        %v1734 = vpack.c.b16 %v1494, %v1490
        %v1735 = vpack.c.b16 %v1495, %v1491
        %v1736 = vpack.c.b16 %v1496, %v1492
        %v1737 = vpack.c.b16 %v1501, %v1497
        %v1738 = vpack.c.b16 %v1502, %v1498
        %v1739 = vpack.c.b16 %v1503, %v1499
        %v1740 = vpack.c.b16 %v1504, %v1500
        %v1741 = vpack.c.b16 %v1509, %v1505
        %v1742 = vpack.c.b16 %v1510, %v1506
        %v1743 = vpack.c.b16 %v1511, %v1507
        %v1744 = vpack.c.b16 %v1512, %v1508
        %v1745 = vpack.c.b16 %v1517, %v1513
        %v1746 = vpack.c.b16 %v1518, %v1514
        %v1747 = vpack.c.b16 %v1519, %v1515
        %v1748 = vpack.c.b16 %v1520, %v1516
        %v1749 = vpack.c.b16 %v1525, %v1521
        %v1750 = vpack.c.b16 %v1526, %v1522
        %v1751 = vpack.c.b16 %v1527, %v1523
        %v1752 = vpack.c.b16 %v1528, %v1524
        %v1753 = vpack.c.b16 %v1533, %v1529
        %v1754 = vpack.c.b16 %v1534, %v1530
        %v1755 = vpack.c.b16 %v1535, %v1531
        %v1756 = vpack.c.b16 %v1536, %v1532
        %v1757 = vpack.c.b16 %v1541, %v1537
        %v1758 = vpack.c.b16 %v1542, %v1538
        %v1759 = vpack.c.b16 %v1543, %v1539
        %v1760 = vpack.c.b16 %v1544, %v1540
        %v1761 = vpack.c.b16 %v1549, %v1545
        %v1762 = vpack.c.b16 %v1550, %v1546
        %v1763 = vpack.c.b16 %v1551, %v1547
        %v1764 = vpack.c.b16 %v1552, %v1548
        %v1765 = vpack.c.b16 %v1557, %v1553
        %v1766 = vpack.c.b16 %v1558, %v1554
        %v1767 = vpack.c.b16 %v1559, %v1555
        %v1768 = vpack.c.b16 %v1560, %v1556
        %v1769 = vpack.c.b16 %v1565, %v1561
        %v1770 = vpack.c.b16 %v1566, %v1562
        %v1771 = vpack.c.b16 %v1567, %v1563
        %v1772 = vpack.c.b16 %v1568, %v1564
        %v1773 = vpack.c.b16 %v1573, %v1569
        %v1774 = vpack.c.b16 %v1574, %v1570
        %v1775 = vpack.c.b16 %v1575, %v1571
        %v1776 = vpack.c.b16 %v1576, %v1572
        %v1777 = vpack.c.b16 %v1581, %v1577
        %v1778 = vpack.c.b16 %v1582, %v1578
        %v1779 = vpack.c.b16 %v1583, %v1579
        %v1780 = vpack.c.b16 %v1584, %v1580
        %v1781 = vpack.c.b16 %v1589, %v1585
        %v1782 = vpack.c.b16 %v1590, %v1586
        %v1783 = vpack.c.b16 %v1591, %v1587
        %v1784 = vpack.c.b16 %v1592, %v1588
        %1977 = vmatpush.bf16.msra.mxu0 %v1621
        %1978 = vmatpush.bf16.msra.mxu0 %v1617
        %1979 = vmatpush.bf16.msra.mxu0 %v1613
        %1980 = vmatpush.bf16.msra.mxu0 %v1609
        %1981 = vmatpush.bf16.msra.mxu0 %v1605
        %1982 = vmatpush.bf16.msra.mxu0 %v1601
        %1983 = vmatpush.bf16.msra.mxu0 %v1597
        %1984 = vmatpush.bf16.msra.mxu0 %v1593
        %1985 = vmatmul.bf16.gmra.mxu0 %v809
        %v1986 = vpop.f32.mrf.mxu0
        %v1987 = vadd.f32 %v1009, %v1986
        %v1988 = vpop.f32.mrf.mxu0
        %1989 = vdwg.mxu0
        %1990 = vmatpush.bf16.msra.mxu0 %v1653
        %1991 = vmatpush.bf16.msra.mxu0 %v1649
        %1992 = vmatpush.bf16.msra.mxu0 %v1645
        %1993 = vmatpush.bf16.msra.mxu0 %v1641
        %1994 = vmatpush.bf16.msra.mxu0 %v1637
        %1995 = vmatpush.bf16.msra.mxu0 %v1633
        %1996 = vmatpush.bf16.msra.mxu0 %v1629
        %1997 = vmatpush.bf16.msra.mxu0 %v1625
        %1998 = vmatmul.bf16.gmra.mxu0 %v810
        %v1999 = vpop.f32.mrf.mxu0
        %v2000 = vadd.f32 %v1987, %v1999
        %v2001 = vpop.f32.mrf.mxu0
        %2002 = vdwg.mxu0
        %2003 = vmatpush.bf16.msra.mxu0 %v1685
        %2004 = vmatpush.bf16.msra.mxu0 %v1681
        %2005 = vmatpush.bf16.msra.mxu0 %v1677
        %2006 = vmatpush.bf16.msra.mxu0 %v1673
        %2007 = vmatpush.bf16.msra.mxu0 %v1669
        %2008 = vmatpush.bf16.msra.mxu0 %v1665
        %2009 = vmatpush.bf16.msra.mxu0 %v1661
        %2010 = vmatpush.bf16.msra.mxu0 %v1657
        %2011 = vmatmul.bf16.gmra.mxu0 %v811
        %v2012 = vpop.f32.mrf.mxu0
        %v2013 = vadd.f32 %v2000, %v2012
        %v2014 = vpop.f32.mrf.mxu0
        %2015 = vdwg.mxu0
        %2016 = vmatpush.bf16.msra.mxu0 %v1717
        %2017 = vmatpush.bf16.msra.mxu0 %v1713
        %2018 = vmatpush.bf16.msra.mxu0 %v1709
        %2019 = vmatpush.bf16.msra.mxu0 %v1705
        %2020 = vmatpush.bf16.msra.mxu0 %v1701
        %2021 = vmatpush.bf16.msra.mxu0 %v1697
        %2022 = vmatpush.bf16.msra.mxu0 %v1693
        %2023 = vmatpush.bf16.msra.mxu0 %v1689
        %2024 = vmatmul.bf16.gmra.mxu0 %v812
        %v2025 = vpop.f32.mrf.mxu0
        %v2026 = vadd.f32 %v2013, %v2025
        %v2027 = vpop.f32.mrf.mxu0
        %2028 = vdwg.mxu0
        %2029 = vmatpush.bf16.msra.mxu0 %v1749
        %2030 = vmatpush.bf16.msra.mxu0 %v1745
        %2031 = vmatpush.bf16.msra.mxu0 %v1741
        %2032 = vmatpush.bf16.msra.mxu0 %v1737
        %2033 = vmatpush.bf16.msra.mxu0 %v1733
        %2034 = vmatpush.bf16.msra.mxu0 %v1729
        %2035 = vmatpush.bf16.msra.mxu0 %v1725
        %2036 = vmatpush.bf16.msra.mxu0 %v1721
        %2037 = vmatmul.bf16.gmra.mxu0 %v813
        %v2038 = vpop.f32.mrf.mxu0
        %v2039 = vadd.f32 %v2026, %v2038
        %v2040 = vpop.f32.mrf.mxu0
        %2041 = vdwg.mxu0
        %2042 = vmatpush.bf16.msra.mxu0 %v1781
        %2043 = vmatpush.bf16.msra.mxu0 %v1777
        %2044 = vmatpush.bf16.msra.mxu0 %v1773
        %2045 = vmatpush.bf16.msra.mxu0 %v1769
        %2046 = vmatpush.bf16.msra.mxu0 %v1765
        %2047 = vmatpush.bf16.msra.mxu0 %v1761
        %2048 = vmatpush.bf16.msra.mxu0 %v1757
        %2049 = vmatpush.bf16.msra.mxu0 %v1753
        %2050 = vmatmul.bf16.gmra.mxu0 %v814
        %v2051 = vpop.f32.mrf.mxu0
        %v2052 = vadd.f32 %v2039, %v2051
        %v2053 = vpop.f32.mrf.mxu0
        %2054 = vdwg.mxu0
        %2055 = vmatpush.bf16.msra.mxu0 %v1622
        %2056 = vmatpush.bf16.msra.mxu0 %v1618
        %2057 = vmatpush.bf16.msra.mxu0 %v1614
        %2058 = vmatpush.bf16.msra.mxu0 %v1610
        %2059 = vmatpush.bf16.msra.mxu0 %v1606
        %2060 = vmatpush.bf16.msra.mxu0 %v1602
        %2061 = vmatpush.bf16.msra.mxu0 %v1598
        %2062 = vmatpush.bf16.msra.mxu0 %v1594
        %2063 = vmatmul.bf16.gmra.mxu0 %v809
        %v2064 = vpop.f32.mrf.mxu0
        %v2065 = vadd.f32 %v1010, %v2064
        %v2066 = vpop.f32.mrf.mxu0
        %2067 = vdwg.mxu0
        %2068 = vmatpush.bf16.msra.mxu0 %v1654
        %2069 = vmatpush.bf16.msra.mxu0 %v1650
        %2070 = vmatpush.bf16.msra.mxu0 %v1646
        %2071 = vmatpush.bf16.msra.mxu0 %v1642
        %2072 = vmatpush.bf16.msra.mxu0 %v1638
        %2073 = vmatpush.bf16.msra.mxu0 %v1634
        %2074 = vmatpush.bf16.msra.mxu0 %v1630
        %2075 = vmatpush.bf16.msra.mxu0 %v1626
        %2076 = vmatmul.bf16.gmra.mxu0 %v810
        %v2077 = vpop.f32.mrf.mxu0
        %v2078 = vadd.f32 %v2065, %v2077
        %v2079 = vpop.f32.mrf.mxu0
        %2080 = vdwg.mxu0
        %2081 = vmatpush.bf16.msra.mxu0 %v1686
        %2082 = vmatpush.bf16.msra.mxu0 %v1682
        %2083 = vmatpush.bf16.msra.mxu0 %v1678
        %2084 = vmatpush.bf16.msra.mxu0 %v1674
        %2085 = vmatpush.bf16.msra.mxu0 %v1670
        %2086 = vmatpush.bf16.msra.mxu0 %v1666
        %2087 = vmatpush.bf16.msra.mxu0 %v1662
        %2088 = vmatpush.bf16.msra.mxu0 %v1658
        %2089 = vmatmul.bf16.gmra.mxu0 %v811
        %v2090 = vpop.f32.mrf.mxu0
        %v2091 = vadd.f32 %v2078, %v2090
        %v2092 = vpop.f32.mrf.mxu0
        %2093 = vdwg.mxu0
        %2094 = vmatpush.bf16.msra.mxu0 %v1718
        %2095 = vmatpush.bf16.msra.mxu0 %v1714
        %2096 = vmatpush.bf16.msra.mxu0 %v1710
        %2097 = vmatpush.bf16.msra.mxu0 %v1706
        %2098 = vmatpush.bf16.msra.mxu0 %v1702
        %2099 = vmatpush.bf16.msra.mxu0 %v1698
        %2100 = vmatpush.bf16.msra.mxu0 %v1694
        %2101 = vmatpush.bf16.msra.mxu0 %v1690
        %2102 = vmatmul.bf16.gmra.mxu0 %v812
        %v2103 = vpop.f32.mrf.mxu0
        %v2104 = vadd.f32 %v2091, %v2103
        %v2105 = vpop.f32.mrf.mxu0
        %2106 = vdwg.mxu0
        %2107 = vmatpush.bf16.msra.mxu0 %v1750
        %2108 = vmatpush.bf16.msra.mxu0 %v1746
        %2109 = vmatpush.bf16.msra.mxu0 %v1742
        %2110 = vmatpush.bf16.msra.mxu0 %v1738
        %2111 = vmatpush.bf16.msra.mxu0 %v1734
        %2112 = vmatpush.bf16.msra.mxu0 %v1730
        %2113 = vmatpush.bf16.msra.mxu0 %v1726
        %2114 = vmatpush.bf16.msra.mxu0 %v1722
        %2115 = vmatmul.bf16.gmra.mxu0 %v813
        %v2116 = vpop.f32.mrf.mxu0
        %v2117 = vadd.f32 %v2104, %v2116
        %v2118 = vpop.f32.mrf.mxu0
        %2119 = vdwg.mxu0
        %2120 = vmatpush.bf16.msra.mxu0 %v1782
        %2121 = vmatpush.bf16.msra.mxu0 %v1778
        %2122 = vmatpush.bf16.msra.mxu0 %v1774
        %2123 = vmatpush.bf16.msra.mxu0 %v1770
        %2124 = vmatpush.bf16.msra.mxu0 %v1766
        %2125 = vmatpush.bf16.msra.mxu0 %v1762
        %2126 = vmatpush.bf16.msra.mxu0 %v1758
        %2127 = vmatpush.bf16.msra.mxu0 %v1754
        %2128 = vmatmul.bf16.gmra.mxu0 %v814
        %v2129 = vpop.f32.mrf.mxu0
        %v2130 = vadd.f32 %v2117, %v2129
        %v2131 = vpop.f32.mrf.mxu0
        %2132 = vdwg.mxu0
        %2133 = vmatpush.bf16.msra.mxu0 %v1623
        %2134 = vmatpush.bf16.msra.mxu0 %v1619
        %2135 = vmatpush.bf16.msra.mxu0 %v1615
        %2136 = vmatpush.bf16.msra.mxu0 %v1611
        %2137 = vmatpush.bf16.msra.mxu0 %v1607
        %2138 = vmatpush.bf16.msra.mxu0 %v1603
        %2139 = vmatpush.bf16.msra.mxu0 %v1599
        %2140 = vmatpush.bf16.msra.mxu0 %v1595
        %2141 = vmatmul.bf16.gmra.mxu0 %v809
        %v2142 = vpop.f32.mrf.mxu0
        %v2143 = vadd.f32 %v1011, %v2142
        %v2144 = vpop.f32.mrf.mxu0
        %2145 = vdwg.mxu0
        %2146 = vmatpush.bf16.msra.mxu0 %v1655
        %2147 = vmatpush.bf16.msra.mxu0 %v1651
        %2148 = vmatpush.bf16.msra.mxu0 %v1647
        %2149 = vmatpush.bf16.msra.mxu0 %v1643
        %2150 = vmatpush.bf16.msra.mxu0 %v1639
        %2151 = vmatpush.bf16.msra.mxu0 %v1635
        %2152 = vmatpush.bf16.msra.mxu0 %v1631
        %2153 = vmatpush.bf16.msra.mxu0 %v1627
        %2154 = vmatmul.bf16.gmra.mxu0 %v810
        %v2155 = vpop.f32.mrf.mxu0
        %v2156 = vadd.f32 %v2143, %v2155
        %v2157 = vpop.f32.mrf.mxu0
        %2158 = vdwg.mxu0
        %2159 = vmatpush.bf16.msra.mxu0 %v1687
        %2160 = vmatpush.bf16.msra.mxu0 %v1683
        %2161 = vmatpush.bf16.msra.mxu0 %v1679
        %2162 = vmatpush.bf16.msra.mxu0 %v1675
        %2163 = vmatpush.bf16.msra.mxu0 %v1671
        %2164 = vmatpush.bf16.msra.mxu0 %v1667
        %2165 = vmatpush.bf16.msra.mxu0 %v1663
        %2166 = vmatpush.bf16.msra.mxu0 %v1659
        %2167 = vmatmul.bf16.gmra.mxu0 %v811
        %v2168 = vpop.f32.mrf.mxu0
        %v2169 = vadd.f32 %v2156, %v2168
        %v2170 = vpop.f32.mrf.mxu0
        %2171 = vdwg.mxu0
        %2172 = vmatpush.bf16.msra.mxu0 %v1719
        %2173 = vmatpush.bf16.msra.mxu0 %v1715
        %2174 = vmatpush.bf16.msra.mxu0 %v1711
        %2175 = vmatpush.bf16.msra.mxu0 %v1707
        %2176 = vmatpush.bf16.msra.mxu0 %v1703
        %2177 = vmatpush.bf16.msra.mxu0 %v1699
        %2178 = vmatpush.bf16.msra.mxu0 %v1695
        %2179 = vmatpush.bf16.msra.mxu0 %v1691
        %2180 = vmatmul.bf16.gmra.mxu0 %v812
        %v2181 = vpop.f32.mrf.mxu0
        %v2182 = vadd.f32 %v2169, %v2181
        %v2183 = vpop.f32.mrf.mxu0
        %2184 = vdwg.mxu0
        %2185 = vmatpush.bf16.msra.mxu0 %v1751
        %2186 = vmatpush.bf16.msra.mxu0 %v1747
        %2187 = vmatpush.bf16.msra.mxu0 %v1743
        %2188 = vmatpush.bf16.msra.mxu0 %v1739
        %2189 = vmatpush.bf16.msra.mxu0 %v1735
        %2190 = vmatpush.bf16.msra.mxu0 %v1731
        %2191 = vmatpush.bf16.msra.mxu0 %v1727
        %2192 = vmatpush.bf16.msra.mxu0 %v1723
        %2193 = vmatmul.bf16.gmra.mxu0 %v813
        %v2194 = vpop.f32.mrf.mxu0
        %v2195 = vadd.f32 %v2182, %v2194
        %v2196 = vpop.f32.mrf.mxu0
        %2197 = vdwg.mxu0
        %2198 = vmatpush.bf16.msra.mxu0 %v1783
        %2199 = vmatpush.bf16.msra.mxu0 %v1779
        %2200 = vmatpush.bf16.msra.mxu0 %v1775
        %2201 = vmatpush.bf16.msra.mxu0 %v1771
        %2202 = vmatpush.bf16.msra.mxu0 %v1767
        %2203 = vmatpush.bf16.msra.mxu0 %v1763
        %2204 = vmatpush.bf16.msra.mxu0 %v1759
        %2205 = vmatpush.bf16.msra.mxu0 %v1755
        %2206 = vmatmul.bf16.gmra.mxu0 %v814
        %v2207 = vpop.f32.mrf.mxu0
        %v2208 = vadd.f32 %v2195, %v2207
        %v2209 = vpop.f32.mrf.mxu0
        %2210 = vdwg.mxu0
        %2211 = vmatpush.bf16.msra.mxu0 %v1624
        %2212 = vmatpush.bf16.msra.mxu0 %v1620
        %2213 = vmatpush.bf16.msra.mxu0 %v1616
        %2214 = vmatpush.bf16.msra.mxu0 %v1612
        %2215 = vmatpush.bf16.msra.mxu0 %v1608
        %2216 = vmatpush.bf16.msra.mxu0 %v1604
        %2217 = vmatpush.bf16.msra.mxu0 %v1600
        %2218 = vmatpush.bf16.msra.mxu0 %v1596
        %2219 = vmatmul.bf16.gmra.mxu0 %v809
        %v2220 = vpop.f32.mrf.mxu0
        %v2221 = vadd.f32 %v1012, %v2220
        %v2222 = vpop.f32.mrf.mxu0
        %2223 = vdwg.mxu0
        %2224 = vmatpush.bf16.msra.mxu0 %v1656
        %2225 = vmatpush.bf16.msra.mxu0 %v1652
        %2226 = vmatpush.bf16.msra.mxu0 %v1648
        %2227 = vmatpush.bf16.msra.mxu0 %v1644
        %2228 = vmatpush.bf16.msra.mxu0 %v1640
        %2229 = vmatpush.bf16.msra.mxu0 %v1636
        %2230 = vmatpush.bf16.msra.mxu0 %v1632
        %2231 = vmatpush.bf16.msra.mxu0 %v1628
        %2232 = vmatmul.bf16.gmra.mxu0 %v810
        %v2233 = vpop.f32.mrf.mxu0
        %v2234 = vadd.f32 %v2221, %v2233
        %v2235 = vpop.f32.mrf.mxu0
        %2236 = vdwg.mxu0
        %2237 = vmatpush.bf16.msra.mxu0 %v1688
        %2238 = vmatpush.bf16.msra.mxu0 %v1684
        %2239 = vmatpush.bf16.msra.mxu0 %v1680
        %2240 = vmatpush.bf16.msra.mxu0 %v1676
        %2241 = vmatpush.bf16.msra.mxu0 %v1672
        %2242 = vmatpush.bf16.msra.mxu0 %v1668
        %2243 = vmatpush.bf16.msra.mxu0 %v1664
        %2244 = vmatpush.bf16.msra.mxu0 %v1660
        %2245 = vmatmul.bf16.gmra.mxu0 %v811
        %v2246 = vpop.f32.mrf.mxu0
        %v2247 = vadd.f32 %v2234, %v2246
        %v2248 = vpop.f32.mrf.mxu0
        %2249 = vdwg.mxu0
        %2250 = vmatpush.bf16.msra.mxu0 %v1720
        %2251 = vmatpush.bf16.msra.mxu0 %v1716
        %2252 = vmatpush.bf16.msra.mxu0 %v1712
        %2253 = vmatpush.bf16.msra.mxu0 %v1708
        %2254 = vmatpush.bf16.msra.mxu0 %v1704
        %2255 = vmatpush.bf16.msra.mxu0 %v1700
        %2256 = vmatpush.bf16.msra.mxu0 %v1696
        %2257 = vmatpush.bf16.msra.mxu0 %v1692
        %2258 = vmatmul.bf16.gmra.mxu0 %v812
        %v2259 = vpop.f32.mrf.mxu0
        %v2260 = vadd.f32 %v2247, %v2259
        %v2261 = vpop.f32.mrf.mxu0
        %2262 = vdwg.mxu0
        %2263 = vmatpush.bf16.msra.mxu0 %v1752
        %2264 = vmatpush.bf16.msra.mxu0 %v1748
        %2265 = vmatpush.bf16.msra.mxu0 %v1744
        %2266 = vmatpush.bf16.msra.mxu0 %v1740
        %2267 = vmatpush.bf16.msra.mxu0 %v1736
        %2268 = vmatpush.bf16.msra.mxu0 %v1732
        %2269 = vmatpush.bf16.msra.mxu0 %v1728
        %2270 = vmatpush.bf16.msra.mxu0 %v1724
        %2271 = vmatmul.bf16.gmra.mxu0 %v813
        %v2272 = vpop.f32.mrf.mxu0
        %v2273 = vadd.f32 %v2260, %v2272
        %v2274 = vpop.f32.mrf.mxu0
        %2275 = vdwg.mxu0
        %2276 = vmatpush.bf16.msra.mxu0 %v1784
        %2277 = vmatpush.bf16.msra.mxu0 %v1780
        %2278 = vmatpush.bf16.msra.mxu0 %v1776
        %2279 = vmatpush.bf16.msra.mxu0 %v1772
        %2280 = vmatpush.bf16.msra.mxu0 %v1768
        %2281 = vmatpush.bf16.msra.mxu0 %v1764
        %2282 = vmatpush.bf16.msra.mxu0 %v1760
        %2283 = vmatpush.bf16.msra.mxu0 %v1756
        %2284 = vmatmul.bf16.gmra.mxu0 %v814
        %v2285 = vpop.f32.mrf.mxu0
        %v2286 = vadd.f32 %v2273, %v2285
        %v2287 = vpop.f32.mrf.mxu0
        %2288 = vdwg.mxu0
        %v2289 = vld [vmem:[#allocation2] sm:$0xff]
        %v2290 = vld [vmem:[#allocation2 + $0x8] sm:$0xff]
        %v2291 = vld [vmem:[#allocation2 + $0x10] sm:$0xff]
        %v2292 = vld [vmem:[#allocation2 + $0x18] sm:$0xff]
        %v2293 = vpack.c.bf16 %v2052, %v2052
        %v2294 = vpack.c.bf16 %v2130, %v2130
        %v2295 = vpack.c.bf16 %v2208, %v2208
        %v2296 = vpack.c.bf16 %v2286, %v2286
        %v2297 = vld [vmem:[%s688] sm:$0xff]
        %v2298 = vld [vmem:[%s688 + $0x8] sm:$0xff]
        %v2299 = vld [vmem:[%s688 + $0x10] sm:$0xff]
        %v2300 = vld [vmem:[%s688 + $0x18] sm:$0xff]
        %v2301 = vld [vmem:[%s688 + $0x20] sm:$0xff]
        %v2302 = vld [vmem:[%s688 + $0x28] sm:$0xff]
        %v2303 = vld [vmem:[%s688 + $0x30] sm:$0xff]
        %v2304 = vld [vmem:[%s688 + $0x38] sm:$0xff]
        %v2305 = vld [vmem:[%s688 + $0x40] sm:$0xff]
        %v2306 = vld [vmem:[%s688 + $0x48] sm:$0xff]
        %v2307 = vld [vmem:[%s688 + $0x50] sm:$0xff]
        %v2308 = vld [vmem:[%s688 + $0x58] sm:$0xff]
        %v2309 = vld [vmem:[%s688 + $0x60] sm:$0xff]
        %v2310 = vld [vmem:[%s688 + $0x68] sm:$0xff]
        %v2311 = vld [vmem:[%s688 + $0x70] sm:$0xff]
        %v2312 = vld [vmem:[%s688 + $0x78] sm:$0xff]
        %v2313 = vld [vmem:[%s688 + $0x80] sm:$0xff]
        %v2314 = vld [vmem:[%s688 + $0x88] sm:$0xff]
        %v2315 = vld [vmem:[%s688 + $0x90] sm:$0xff]
        %v2316 = vld [vmem:[%s688 + $0x98] sm:$0xff]
        %v2317 = vld [vmem:[%s688 + $0xa0] sm:$0xff]
        %v2318 = vld [vmem:[%s688 + $0xa8] sm:$0xff]
        %v2319 = vld [vmem:[%s688 + $0xb0] sm:$0xff]
        %v2320 = vld [vmem:[%s688 + $0xb8] sm:$0xff]
        %v2321 = vld [vmem:[%s688 + $0xc0] sm:$0xff]
        %v2322 = vld [vmem:[%s688 + $0xc8] sm:$0xff]
        %v2323 = vld [vmem:[%s688 + $0xd0] sm:$0xff]
        %v2324 = vld [vmem:[%s688 + $0xd8] sm:$0xff]
        %v2325 = vld [vmem:[%s688 + $0xe0] sm:$0xff]
        %v2326 = vld [vmem:[%s688 + $0xe8] sm:$0xff]
        %v2327 = vld [vmem:[%s688 + $0xf0] sm:$0xff]
        %v2328 = vld [vmem:[%s688 + $0xf8] sm:$0xff]
        %v2329 = vld [vmem:[%s688 + $0x100] sm:$0xff]
        %v2330 = vld [vmem:[%s688 + $0x108] sm:$0xff]
        %v2331 = vld [vmem:[%s688 + $0x110] sm:$0xff]
        %v2332 = vld [vmem:[%s688 + $0x118] sm:$0xff]
        %v2333 = vld [vmem:[%s688 + $0x120] sm:$0xff]
        %v2334 = vld [vmem:[%s688 + $0x128] sm:$0xff]
        %v2335 = vld [vmem:[%s688 + $0x130] sm:$0xff]
        %v2336 = vld [vmem:[%s688 + $0x138] sm:$0xff]
        %v2337 = vld [vmem:[%s688 + $0x140] sm:$0xff]
        %v2338 = vld [vmem:[%s688 + $0x148] sm:$0xff]
        %v2339 = vld [vmem:[%s688 + $0x150] sm:$0xff]
        %v2340 = vld [vmem:[%s688 + $0x158] sm:$0xff]
        %v2341 = vld [vmem:[%s688 + $0x160] sm:$0xff]
        %v2342 = vld [vmem:[%s688 + $0x168] sm:$0xff]
        %v2343 = vld [vmem:[%s688 + $0x170] sm:$0xff]
        %v2344 = vld [vmem:[%s688 + $0x178] sm:$0xff]
        %v2345 = vld [vmem:[%s688 + $0x180] sm:$0xff]
        %v2346 = vld [vmem:[%s688 + $0x188] sm:$0xff]
        %v2347 = vld [vmem:[%s688 + $0x190] sm:$0xff]
        %v2348 = vld [vmem:[%s688 + $0x198] sm:$0xff]
        %v2349 = vld [vmem:[%s688 + $0x1a0] sm:$0xff]
        %v2350 = vld [vmem:[%s688 + $0x1a8] sm:$0xff]
        %v2351 = vld [vmem:[%s688 + $0x1b0] sm:$0xff]
        %v2352 = vld [vmem:[%s688 + $0x1b8] sm:$0xff]
        %v2353 = vld [vmem:[%s688 + $0x1c0] sm:$0xff]
        %v2354 = vld [vmem:[%s688 + $0x1c8] sm:$0xff]
        %v2355 = vld [vmem:[%s688 + $0x1d0] sm:$0xff]
        %v2356 = vld [vmem:[%s688 + $0x1d8] sm:$0xff]
        %v2357 = vld [vmem:[%s688 + $0x1e0] sm:$0xff]
        %v2358 = vld [vmem:[%s688 + $0x1e8] sm:$0xff]
        %v2359 = vld [vmem:[%s688 + $0x1f0] sm:$0xff]
        %v2360 = vld [vmem:[%s688 + $0x1f8] sm:$0xff]
        %v2361 = vld [vmem:[%s688 + $0x200] sm:$0xff]
        %v2362 = vld [vmem:[%s688 + $0x208] sm:$0xff]
        %v2363 = vld [vmem:[%s688 + $0x210] sm:$0xff]
        %v2364 = vld [vmem:[%s688 + $0x218] sm:$0xff]
        %v2365 = vld [vmem:[%s688 + $0x220] sm:$0xff]
        %v2366 = vld [vmem:[%s688 + $0x228] sm:$0xff]
        %v2367 = vld [vmem:[%s688 + $0x230] sm:$0xff]
        %v2368 = vld [vmem:[%s688 + $0x238] sm:$0xff]
        %v2369 = vld [vmem:[%s688 + $0x240] sm:$0xff]
        %v2370 = vld [vmem:[%s688 + $0x248] sm:$0xff]
        %v2371 = vld [vmem:[%s688 + $0x250] sm:$0xff]
        %v2372 = vld [vmem:[%s688 + $0x258] sm:$0xff]
        %v2373 = vld [vmem:[%s688 + $0x260] sm:$0xff]
        %v2374 = vld [vmem:[%s688 + $0x268] sm:$0xff]
        %v2375 = vld [vmem:[%s688 + $0x270] sm:$0xff]
        %v2376 = vld [vmem:[%s688 + $0x278] sm:$0xff]
        %v2377 = vld [vmem:[%s688 + $0x280] sm:$0xff]
        %v2378 = vld [vmem:[%s688 + $0x288] sm:$0xff]
        %v2379 = vld [vmem:[%s688 + $0x290] sm:$0xff]
        %v2380 = vld [vmem:[%s688 + $0x298] sm:$0xff]
        %v2381 = vld [vmem:[%s688 + $0x2a0] sm:$0xff]
        %v2382 = vld [vmem:[%s688 + $0x2a8] sm:$0xff]
        %v2383 = vld [vmem:[%s688 + $0x2b0] sm:$0xff]
        %v2384 = vld [vmem:[%s688 + $0x2b8] sm:$0xff]
        %v2385 = vld [vmem:[%s688 + $0x2c0] sm:$0xff]
        %v2386 = vld [vmem:[%s688 + $0x2c8] sm:$0xff]
        %v2387 = vld [vmem:[%s688 + $0x2d0] sm:$0xff]
        %v2388 = vld [vmem:[%s688 + $0x2d8] sm:$0xff]
        %v2389 = vld [vmem:[%s688 + $0x2e0] sm:$0xff]
        %v2390 = vld [vmem:[%s688 + $0x2e8] sm:$0xff]
        %v2391 = vld [vmem:[%s688 + $0x2f0] sm:$0xff]
        %v2392 = vld [vmem:[%s688 + $0x2f8] sm:$0xff]
        %v2393 = vld [vmem:[%s688 + $0x300] sm:$0xff]
        %v2394 = vld [vmem:[%s688 + $0x308] sm:$0xff]
        %v2395 = vld [vmem:[%s688 + $0x310] sm:$0xff]
        %v2396 = vld [vmem:[%s688 + $0x318] sm:$0xff]
        %v2397 = vld [vmem:[%s688 + $0x320] sm:$0xff]
        %v2398 = vld [vmem:[%s688 + $0x328] sm:$0xff]
        %v2399 = vld [vmem:[%s688 + $0x330] sm:$0xff]
        %v2400 = vld [vmem:[%s688 + $0x338] sm:$0xff]
        %v2401 = vld [vmem:[%s688 + $0x340] sm:$0xff]
        %v2402 = vld [vmem:[%s688 + $0x348] sm:$0xff]
        %v2403 = vld [vmem:[%s688 + $0x350] sm:$0xff]
        %v2404 = vld [vmem:[%s688 + $0x358] sm:$0xff]
        %v2405 = vld [vmem:[%s688 + $0x360] sm:$0xff]
        %v2406 = vld [vmem:[%s688 + $0x368] sm:$0xff]
        %v2407 = vld [vmem:[%s688 + $0x370] sm:$0xff]
        %v2408 = vld [vmem:[%s688 + $0x378] sm:$0xff]
        %v2409 = vld [vmem:[%s688 + $0x380] sm:$0xff]
        %v2410 = vld [vmem:[%s688 + $0x388] sm:$0xff]
        %v2411 = vld [vmem:[%s688 + $0x390] sm:$0xff]
        %v2412 = vld [vmem:[%s688 + $0x398] sm:$0xff]
        %v2413 = vld [vmem:[%s688 + $0x3a0] sm:$0xff]
        %v2414 = vld [vmem:[%s688 + $0x3a8] sm:$0xff]
        %v2415 = vld [vmem:[%s688 + $0x3b0] sm:$0xff]
        %v2416 = vld [vmem:[%s688 + $0x3b8] sm:$0xff]
        %v2417 = vld [vmem:[%s688 + $0x3c0] sm:$0xff]
        %v2418 = vld [vmem:[%s688 + $0x3c8] sm:$0xff]
        %v2419 = vld [vmem:[%s688 + $0x3d0] sm:$0xff]
        %v2420 = vld [vmem:[%s688 + $0x3d8] sm:$0xff]
        %v2421 = vld [vmem:[%s688 + $0x3e0] sm:$0xff]
        %v2422 = vld [vmem:[%s688 + $0x3e8] sm:$0xff]
        %v2423 = vld [vmem:[%s688 + $0x3f0] sm:$0xff]
        %v2424 = vld [vmem:[%s688 + $0x3f8] sm:$0xff]
        %v2553 = vunpack.c.l.b16 %v2297
        %v2554 = vunpack.c.h.b16 %v2297
        %v2555 = vunpack.c.l.b16 %v2298
        %v2556 = vunpack.c.h.b16 %v2298
        %v2557 = vunpack.c.l.b16 %v2299
        %v2558 = vunpack.c.h.b16 %v2299
        %v2559 = vunpack.c.l.b16 %v2300
        %v2560 = vunpack.c.h.b16 %v2300
        %v2561 = vunpack.c.l.b16 %v2301
        %v2562 = vunpack.c.h.b16 %v2301
        %v2563 = vunpack.c.l.b16 %v2302
        %v2564 = vunpack.c.h.b16 %v2302
        %v2565 = vunpack.c.l.b16 %v2303
        %v2566 = vunpack.c.h.b16 %v2303
        %v2567 = vunpack.c.l.b16 %v2304
        %v2568 = vunpack.c.h.b16 %v2304
        %v2569 = vunpack.c.l.b16 %v2305
        %v2570 = vunpack.c.h.b16 %v2305
        %v2571 = vunpack.c.l.b16 %v2306
        %v2572 = vunpack.c.h.b16 %v2306
        %v2573 = vunpack.c.l.b16 %v2307
        %v2574 = vunpack.c.h.b16 %v2307
        %v2575 = vunpack.c.l.b16 %v2308
        %v2576 = vunpack.c.h.b16 %v2308
        %v2577 = vunpack.c.l.b16 %v2309
        %v2578 = vunpack.c.h.b16 %v2309
        %v2579 = vunpack.c.l.b16 %v2310
        %v2580 = vunpack.c.h.b16 %v2310
        %v2581 = vunpack.c.l.b16 %v2311
        %v2582 = vunpack.c.h.b16 %v2311
        %v2583 = vunpack.c.l.b16 %v2312
        %v2584 = vunpack.c.h.b16 %v2312
        %v2585 = vunpack.c.l.b16 %v2313
        %v2586 = vunpack.c.h.b16 %v2313
        %v2587 = vunpack.c.l.b16 %v2314
        %v2588 = vunpack.c.h.b16 %v2314
        %v2589 = vunpack.c.l.b16 %v2315
        %v2590 = vunpack.c.h.b16 %v2315
        %v2591 = vunpack.c.l.b16 %v2316
        %v2592 = vunpack.c.h.b16 %v2316
        %v2593 = vunpack.c.l.b16 %v2317
        %v2594 = vunpack.c.h.b16 %v2317
        %v2595 = vunpack.c.l.b16 %v2318
        %v2596 = vunpack.c.h.b16 %v2318
        %v2597 = vunpack.c.l.b16 %v2319
        %v2598 = vunpack.c.h.b16 %v2319
        %v2599 = vunpack.c.l.b16 %v2320
        %v2600 = vunpack.c.h.b16 %v2320
        %v2601 = vunpack.c.l.b16 %v2321
        %v2602 = vunpack.c.h.b16 %v2321
        %v2603 = vunpack.c.l.b16 %v2322
        %v2604 = vunpack.c.h.b16 %v2322
        %v2605 = vunpack.c.l.b16 %v2323
        %v2606 = vunpack.c.h.b16 %v2323
        %v2607 = vunpack.c.l.b16 %v2324
        %v2608 = vunpack.c.h.b16 %v2324
        %v2609 = vunpack.c.l.b16 %v2325
        %v2610 = vunpack.c.h.b16 %v2325
        %v2611 = vunpack.c.l.b16 %v2326
        %v2612 = vunpack.c.h.b16 %v2326
        %v2613 = vunpack.c.l.b16 %v2327
        %v2614 = vunpack.c.h.b16 %v2327
        %v2615 = vunpack.c.l.b16 %v2328
        %v2616 = vunpack.c.h.b16 %v2328
        %v2617 = vunpack.c.l.b16 %v2329
        %v2618 = vunpack.c.h.b16 %v2329
        %v2619 = vunpack.c.l.b16 %v2330
        %v2620 = vunpack.c.h.b16 %v2330
        %v2621 = vunpack.c.l.b16 %v2331
        %v2622 = vunpack.c.h.b16 %v2331
        %v2623 = vunpack.c.l.b16 %v2332
        %v2624 = vunpack.c.h.b16 %v2332
        %v2625 = vunpack.c.l.b16 %v2333
        %v2626 = vunpack.c.h.b16 %v2333
        %v2627 = vunpack.c.l.b16 %v2334
        %v2628 = vunpack.c.h.b16 %v2334
        %v2629 = vunpack.c.l.b16 %v2335
        %v2630 = vunpack.c.h.b16 %v2335
        %v2631 = vunpack.c.l.b16 %v2336
        %v2632 = vunpack.c.h.b16 %v2336
        %v2633 = vunpack.c.l.b16 %v2337
        %v2634 = vunpack.c.h.b16 %v2337
        %v2635 = vunpack.c.l.b16 %v2338
        %v2636 = vunpack.c.h.b16 %v2338
        %v2637 = vunpack.c.l.b16 %v2339
        %v2638 = vunpack.c.h.b16 %v2339
        %v2639 = vunpack.c.l.b16 %v2340
        %v2640 = vunpack.c.h.b16 %v2340
        %v2641 = vunpack.c.l.b16 %v2341
        %v2642 = vunpack.c.h.b16 %v2341
        %v2643 = vunpack.c.l.b16 %v2342
        %v2644 = vunpack.c.h.b16 %v2342
        %v2645 = vunpack.c.l.b16 %v2343
        %v2646 = vunpack.c.h.b16 %v2343
        %v2647 = vunpack.c.l.b16 %v2344
        %v2648 = vunpack.c.h.b16 %v2344
        %v2649 = vunpack.c.l.b16 %v2345
        %v2650 = vunpack.c.h.b16 %v2345
        %v2651 = vunpack.c.l.b16 %v2346
        %v2652 = vunpack.c.h.b16 %v2346
        %v2653 = vunpack.c.l.b16 %v2347
        %v2654 = vunpack.c.h.b16 %v2347
        %v2655 = vunpack.c.l.b16 %v2348
        %v2656 = vunpack.c.h.b16 %v2348
        %v2657 = vunpack.c.l.b16 %v2349
        %v2658 = vunpack.c.h.b16 %v2349
        %v2659 = vunpack.c.l.b16 %v2350
        %v2660 = vunpack.c.h.b16 %v2350
        %v2661 = vunpack.c.l.b16 %v2351
        %v2662 = vunpack.c.h.b16 %v2351
        %v2663 = vunpack.c.l.b16 %v2352
        %v2664 = vunpack.c.h.b16 %v2352
        %v2665 = vunpack.c.l.b16 %v2353
        %v2666 = vunpack.c.h.b16 %v2353
        %v2667 = vunpack.c.l.b16 %v2354
        %v2668 = vunpack.c.h.b16 %v2354
        %v2669 = vunpack.c.l.b16 %v2355
        %v2670 = vunpack.c.h.b16 %v2355
        %v2671 = vunpack.c.l.b16 %v2356
        %v2672 = vunpack.c.h.b16 %v2356
        %v2673 = vunpack.c.l.b16 %v2357
        %v2674 = vunpack.c.h.b16 %v2357
        %v2675 = vunpack.c.l.b16 %v2358
        %v2676 = vunpack.c.h.b16 %v2358
        %v2677 = vunpack.c.l.b16 %v2359
        %v2678 = vunpack.c.h.b16 %v2359
        %v2679 = vunpack.c.l.b16 %v2360
        %v2680 = vunpack.c.h.b16 %v2360
        %v2681 = vunpack.c.l.b16 %v2361
        %v2682 = vunpack.c.h.b16 %v2361
        %v2683 = vunpack.c.l.b16 %v2362
        %v2684 = vunpack.c.h.b16 %v2362
        %v2685 = vunpack.c.l.b16 %v2363
        %v2686 = vunpack.c.h.b16 %v2363
        %v2687 = vunpack.c.l.b16 %v2364
        %v2688 = vunpack.c.h.b16 %v2364
        %v2689 = vunpack.c.l.b16 %v2365
        %v2690 = vunpack.c.h.b16 %v2365
        %v2691 = vunpack.c.l.b16 %v2366
        %v2692 = vunpack.c.h.b16 %v2366
        %v2693 = vunpack.c.l.b16 %v2367
        %v2694 = vunpack.c.h.b16 %v2367
        %v2695 = vunpack.c.l.b16 %v2368
        %v2696 = vunpack.c.h.b16 %v2368
        %v2697 = vunpack.c.l.b16 %v2369
        %v2698 = vunpack.c.h.b16 %v2369
        %v2699 = vunpack.c.l.b16 %v2370
        %v2700 = vunpack.c.h.b16 %v2370
        %v2701 = vunpack.c.l.b16 %v2371
        %v2702 = vunpack.c.h.b16 %v2371
        %v2703 = vunpack.c.l.b16 %v2372
        %v2704 = vunpack.c.h.b16 %v2372
        %v2705 = vunpack.c.l.b16 %v2373
        %v2706 = vunpack.c.h.b16 %v2373
        %v2707 = vunpack.c.l.b16 %v2374
        %v2708 = vunpack.c.h.b16 %v2374
        %v2709 = vunpack.c.l.b16 %v2375
        %v2710 = vunpack.c.h.b16 %v2375
        %v2711 = vunpack.c.l.b16 %v2376
        %v2712 = vunpack.c.h.b16 %v2376
        %v2713 = vunpack.c.l.b16 %v2377
        %v2714 = vunpack.c.h.b16 %v2377
        %v2715 = vunpack.c.l.b16 %v2378
        %v2716 = vunpack.c.h.b16 %v2378
        %v2717 = vunpack.c.l.b16 %v2379
        %v2718 = vunpack.c.h.b16 %v2379
        %v2719 = vunpack.c.l.b16 %v2380
        %v2720 = vunpack.c.h.b16 %v2380
        %v2721 = vunpack.c.l.b16 %v2381
        %v2722 = vunpack.c.h.b16 %v2381
        %v2723 = vunpack.c.l.b16 %v2382
        %v2724 = vunpack.c.h.b16 %v2382
        %v2725 = vunpack.c.l.b16 %v2383
        %v2726 = vunpack.c.h.b16 %v2383
        %v2727 = vunpack.c.l.b16 %v2384
        %v2728 = vunpack.c.h.b16 %v2384
        %v2729 = vunpack.c.l.b16 %v2385
        %v2730 = vunpack.c.h.b16 %v2385
        %v2731 = vunpack.c.l.b16 %v2386
        %v2732 = vunpack.c.h.b16 %v2386
        %v2733 = vunpack.c.l.b16 %v2387
        %v2734 = vunpack.c.h.b16 %v2387
        %v2735 = vunpack.c.l.b16 %v2388
        %v2736 = vunpack.c.h.b16 %v2388
        %v2737 = vunpack.c.l.b16 %v2389
        %v2738 = vunpack.c.h.b16 %v2389
        %v2739 = vunpack.c.l.b16 %v2390
        %v2740 = vunpack.c.h.b16 %v2390
        %v2741 = vunpack.c.l.b16 %v2391
        %v2742 = vunpack.c.h.b16 %v2391
        %v2743 = vunpack.c.l.b16 %v2392
        %v2744 = vunpack.c.h.b16 %v2392
        %v2745 = vunpack.c.l.b16 %v2393
        %v2746 = vunpack.c.h.b16 %v2393
        %v2747 = vunpack.c.l.b16 %v2394
        %v2748 = vunpack.c.h.b16 %v2394
        %v2749 = vunpack.c.l.b16 %v2395
        %v2750 = vunpack.c.h.b16 %v2395
        %v2751 = vunpack.c.l.b16 %v2396
        %v2752 = vunpack.c.h.b16 %v2396
        %v2753 = vunpack.c.l.b16 %v2397
        %v2754 = vunpack.c.h.b16 %v2397
        %v2755 = vunpack.c.l.b16 %v2398
        %v2756 = vunpack.c.h.b16 %v2398
        %v2757 = vunpack.c.l.b16 %v2399
        %v2758 = vunpack.c.h.b16 %v2399
        %v2759 = vunpack.c.l.b16 %v2400
        %v2760 = vunpack.c.h.b16 %v2400
        %v2761 = vunpack.c.l.b16 %v2401
        %v2762 = vunpack.c.h.b16 %v2401
        %v2763 = vunpack.c.l.b16 %v2402
        %v2764 = vunpack.c.h.b16 %v2402
        %v2765 = vunpack.c.l.b16 %v2403
        %v2766 = vunpack.c.h.b16 %v2403
        %v2767 = vunpack.c.l.b16 %v2404
        %v2768 = vunpack.c.h.b16 %v2404
        %v2769 = vunpack.c.l.b16 %v2405
        %v2770 = vunpack.c.h.b16 %v2405
        %v2771 = vunpack.c.l.b16 %v2406
        %v2772 = vunpack.c.h.b16 %v2406
        %v2773 = vunpack.c.l.b16 %v2407
        %v2774 = vunpack.c.h.b16 %v2407
        %v2775 = vunpack.c.l.b16 %v2408
        %v2776 = vunpack.c.h.b16 %v2408
        %v2777 = vunpack.c.l.b16 %v2409
        %v2778 = vunpack.c.h.b16 %v2409
        %v2779 = vunpack.c.l.b16 %v2410
        %v2780 = vunpack.c.h.b16 %v2410
        %v2781 = vunpack.c.l.b16 %v2411
        %v2782 = vunpack.c.h.b16 %v2411
        %v2783 = vunpack.c.l.b16 %v2412
        %v2784 = vunpack.c.h.b16 %v2412
        %v2785 = vunpack.c.l.b16 %v2413
        %v2786 = vunpack.c.h.b16 %v2413
        %v2787 = vunpack.c.l.b16 %v2414
        %v2788 = vunpack.c.h.b16 %v2414
        %v2789 = vunpack.c.l.b16 %v2415
        %v2790 = vunpack.c.h.b16 %v2415
        %v2791 = vunpack.c.l.b16 %v2416
        %v2792 = vunpack.c.h.b16 %v2416
        %v2793 = vunpack.c.l.b16 %v2417
        %v2794 = vunpack.c.h.b16 %v2417
        %v2795 = vunpack.c.l.b16 %v2418
        %v2796 = vunpack.c.h.b16 %v2418
        %v2797 = vunpack.c.l.b16 %v2419
        %v2798 = vunpack.c.h.b16 %v2419
        %v2799 = vunpack.c.l.b16 %v2420
        %v2800 = vunpack.c.h.b16 %v2420
        %v2801 = vunpack.c.l.b16 %v2421
        %v2802 = vunpack.c.h.b16 %v2421
        %v2803 = vunpack.c.l.b16 %v2422
        %v2804 = vunpack.c.h.b16 %v2422
        %v2805 = vunpack.c.l.b16 %v2423
        %v2806 = vunpack.c.h.b16 %v2423
        %v2807 = vunpack.c.l.b16 %v2424
        %v2808 = vunpack.c.h.b16 %v2424
        %v2809 = vpack.c.b16 %v2557, %v2553
        %v2810 = vpack.c.b16 %v2558, %v2554
        %v2811 = vpack.c.b16 %v2559, %v2555
        %v2812 = vpack.c.b16 %v2560, %v2556
        %v2813 = vpack.c.b16 %v2565, %v2561
        %v2814 = vpack.c.b16 %v2566, %v2562
        %v2815 = vpack.c.b16 %v2567, %v2563
        %v2816 = vpack.c.b16 %v2568, %v2564
        %v2817 = vpack.c.b16 %v2573, %v2569
        %v2818 = vpack.c.b16 %v2574, %v2570
        %v2819 = vpack.c.b16 %v2575, %v2571
        %v2820 = vpack.c.b16 %v2576, %v2572
        %v2821 = vpack.c.b16 %v2581, %v2577
        %v2822 = vpack.c.b16 %v2582, %v2578
        %v2823 = vpack.c.b16 %v2583, %v2579
        %v2824 = vpack.c.b16 %v2584, %v2580
        %v2825 = vpack.c.b16 %v2589, %v2585
        %v2826 = vpack.c.b16 %v2590, %v2586
        %v2827 = vpack.c.b16 %v2591, %v2587
        %v2828 = vpack.c.b16 %v2592, %v2588
        %v2829 = vpack.c.b16 %v2597, %v2593
        %v2830 = vpack.c.b16 %v2598, %v2594
        %v2831 = vpack.c.b16 %v2599, %v2595
        %v2832 = vpack.c.b16 %v2600, %v2596
        %v2833 = vpack.c.b16 %v2605, %v2601
        %v2834 = vpack.c.b16 %v2606, %v2602
        %v2835 = vpack.c.b16 %v2607, %v2603
        %v2836 = vpack.c.b16 %v2608, %v2604
        %v2837 = vpack.c.b16 %v2613, %v2609
        %v2838 = vpack.c.b16 %v2614, %v2610
        %v2839 = vpack.c.b16 %v2615, %v2611
        %v2840 = vpack.c.b16 %v2616, %v2612
        %v2841 = vpack.c.b16 %v2621, %v2617
        %v2842 = vpack.c.b16 %v2622, %v2618
        %v2843 = vpack.c.b16 %v2623, %v2619
        %v2844 = vpack.c.b16 %v2624, %v2620
        %v2845 = vpack.c.b16 %v2629, %v2625
        %v2846 = vpack.c.b16 %v2630, %v2626
        %v2847 = vpack.c.b16 %v2631, %v2627
        %v2848 = vpack.c.b16 %v2632, %v2628
        %v2849 = vpack.c.b16 %v2637, %v2633
        %v2850 = vpack.c.b16 %v2638, %v2634
        %v2851 = vpack.c.b16 %v2639, %v2635
        %v2852 = vpack.c.b16 %v2640, %v2636
        %v2853 = vpack.c.b16 %v2645, %v2641
        %v2854 = vpack.c.b16 %v2646, %v2642
        %v2855 = vpack.c.b16 %v2647, %v2643
        %v2856 = vpack.c.b16 %v2648, %v2644
        %v2857 = vpack.c.b16 %v2653, %v2649
        %v2858 = vpack.c.b16 %v2654, %v2650
        %v2859 = vpack.c.b16 %v2655, %v2651
        %v2860 = vpack.c.b16 %v2656, %v2652
        %v2861 = vpack.c.b16 %v2661, %v2657
        %v2862 = vpack.c.b16 %v2662, %v2658
        %v2863 = vpack.c.b16 %v2663, %v2659
        %v2864 = vpack.c.b16 %v2664, %v2660
        %v2865 = vpack.c.b16 %v2669, %v2665
        %v2866 = vpack.c.b16 %v2670, %v2666
        %v2867 = vpack.c.b16 %v2671, %v2667
        %v2868 = vpack.c.b16 %v2672, %v2668
        %v2869 = vpack.c.b16 %v2677, %v2673
        %v2870 = vpack.c.b16 %v2678, %v2674
        %v2871 = vpack.c.b16 %v2679, %v2675
        %v2872 = vpack.c.b16 %v2680, %v2676
        %v2873 = vpack.c.b16 %v2685, %v2681
        %v2874 = vpack.c.b16 %v2686, %v2682
        %v2875 = vpack.c.b16 %v2687, %v2683
        %v2876 = vpack.c.b16 %v2688, %v2684
        %v2877 = vpack.c.b16 %v2693, %v2689
        %v2878 = vpack.c.b16 %v2694, %v2690
        %v2879 = vpack.c.b16 %v2695, %v2691
        %v2880 = vpack.c.b16 %v2696, %v2692
        %v2881 = vpack.c.b16 %v2701, %v2697
        %v2882 = vpack.c.b16 %v2702, %v2698
        %v2883 = vpack.c.b16 %v2703, %v2699
        %v2884 = vpack.c.b16 %v2704, %v2700
        %v2885 = vpack.c.b16 %v2709, %v2705
        %v2886 = vpack.c.b16 %v2710, %v2706
        %v2887 = vpack.c.b16 %v2711, %v2707
        %v2888 = vpack.c.b16 %v2712, %v2708
        %v2889 = vpack.c.b16 %v2717, %v2713
        %v2890 = vpack.c.b16 %v2718, %v2714
        %v2891 = vpack.c.b16 %v2719, %v2715
        %v2892 = vpack.c.b16 %v2720, %v2716
        %v2893 = vpack.c.b16 %v2725, %v2721
        %v2894 = vpack.c.b16 %v2726, %v2722
        %v2895 = vpack.c.b16 %v2727, %v2723
        %v2896 = vpack.c.b16 %v2728, %v2724
        %v2897 = vpack.c.b16 %v2733, %v2729
        %v2898 = vpack.c.b16 %v2734, %v2730
        %v2899 = vpack.c.b16 %v2735, %v2731
        %v2900 = vpack.c.b16 %v2736, %v2732
        %v2901 = vpack.c.b16 %v2741, %v2737
        %v2902 = vpack.c.b16 %v2742, %v2738
        %v2903 = vpack.c.b16 %v2743, %v2739
        %v2904 = vpack.c.b16 %v2744, %v2740
        %v2905 = vpack.c.b16 %v2749, %v2745
        %v2906 = vpack.c.b16 %v2750, %v2746
        %v2907 = vpack.c.b16 %v2751, %v2747
        %v2908 = vpack.c.b16 %v2752, %v2748
        %v2909 = vpack.c.b16 %v2757, %v2753
        %v2910 = vpack.c.b16 %v2758, %v2754
        %v2911 = vpack.c.b16 %v2759, %v2755
        %v2912 = vpack.c.b16 %v2760, %v2756
        %v2913 = vpack.c.b16 %v2765, %v2761
        %v2914 = vpack.c.b16 %v2766, %v2762
        %v2915 = vpack.c.b16 %v2767, %v2763
        %v2916 = vpack.c.b16 %v2768, %v2764
        %v2917 = vpack.c.b16 %v2773, %v2769
        %v2918 = vpack.c.b16 %v2774, %v2770
        %v2919 = vpack.c.b16 %v2775, %v2771
        %v2920 = vpack.c.b16 %v2776, %v2772
        %v2921 = vpack.c.b16 %v2781, %v2777
        %v2922 = vpack.c.b16 %v2782, %v2778
        %v2923 = vpack.c.b16 %v2783, %v2779
        %v2924 = vpack.c.b16 %v2784, %v2780
        %v2925 = vpack.c.b16 %v2789, %v2785
        %v2926 = vpack.c.b16 %v2790, %v2786
        %v2927 = vpack.c.b16 %v2791, %v2787
        %v2928 = vpack.c.b16 %v2792, %v2788
        %v2929 = vpack.c.b16 %v2797, %v2793
        %v2930 = vpack.c.b16 %v2798, %v2794
        %v2931 = vpack.c.b16 %v2799, %v2795
        %v2932 = vpack.c.b16 %v2800, %v2796
        %v2933 = vpack.c.b16 %v2805, %v2801
        %v2934 = vpack.c.b16 %v2806, %v2802
        %v2935 = vpack.c.b16 %v2807, %v2803
        %v2936 = vpack.c.b16 %v2808, %v2804
        %3065 = vmatpush.bf16.msra.mxu0 %v2837
        %3066 = vmatpush.bf16.msra.mxu0 %v2833
        %3067 = vmatpush.bf16.msra.mxu0 %v2829
        %3068 = vmatpush.bf16.msra.mxu0 %v2825
        %3069 = vmatpush.bf16.msra.mxu0 %v2821
        %3070 = vmatpush.bf16.msra.mxu0 %v2817
        %3071 = vmatpush.bf16.msra.mxu0 %v2813
        %3072 = vmatpush.bf16.msra.mxu0 %v2809
        %3073 = vmatmul.bf16.gmra.mxu0 %v2293
        %v3074 = vpop.f32.mrf.mxu0
        %v3075 = vadd.f32 0.0, %v3074
        %v3076 = vpop.f32.mrf.mxu0
        %3077 = vdwg.mxu0
        %3078 = vmatpush.bf16.msra.mxu0 %v2869
        %3079 = vmatpush.bf16.msra.mxu0 %v2865
        %3080 = vmatpush.bf16.msra.mxu0 %v2861
        %3081 = vmatpush.bf16.msra.mxu0 %v2857
        %3082 = vmatpush.bf16.msra.mxu0 %v2853
        %3083 = vmatpush.bf16.msra.mxu0 %v2849
        %3084 = vmatpush.bf16.msra.mxu0 %v2845
        %3085 = vmatpush.bf16.msra.mxu0 %v2841
        %3086 = vmatmul.bf16.gmra.mxu0 %v2294
        %v3087 = vpop.f32.mrf.mxu0
        %v3088 = vadd.f32 %v3075, %v3087
        %v3089 = vpop.f32.mrf.mxu0
        %3090 = vdwg.mxu0
        %3091 = vmatpush.bf16.msra.mxu0 %v2901
        %3092 = vmatpush.bf16.msra.mxu0 %v2897
        %3093 = vmatpush.bf16.msra.mxu0 %v2893
        %3094 = vmatpush.bf16.msra.mxu0 %v2889
        %3095 = vmatpush.bf16.msra.mxu0 %v2885
        %3096 = vmatpush.bf16.msra.mxu0 %v2881
        %3097 = vmatpush.bf16.msra.mxu0 %v2877
        %3098 = vmatpush.bf16.msra.mxu0 %v2873
        %3099 = vmatmul.bf16.gmra.mxu0 %v2295
        %v3100 = vpop.f32.mrf.mxu0
        %v3101 = vadd.f32 %v3088, %v3100
        %v3102 = vpop.f32.mrf.mxu0
        %3103 = vdwg.mxu0
        %3104 = vmatpush.bf16.msra.mxu0 %v2933
        %3105 = vmatpush.bf16.msra.mxu0 %v2929
        %3106 = vmatpush.bf16.msra.mxu0 %v2925
        %3107 = vmatpush.bf16.msra.mxu0 %v2921
        %3108 = vmatpush.bf16.msra.mxu0 %v2917
        %3109 = vmatpush.bf16.msra.mxu0 %v2913
        %3110 = vmatpush.bf16.msra.mxu0 %v2909
        %3111 = vmatpush.bf16.msra.mxu0 %v2905
        %3112 = vmatmul.bf16.gmra.mxu0 %v2296
        %v3113 = vpop.f32.mrf.mxu0
        %v3114 = vadd.f32 %v3101, %v3113
        %v3115 = vpop.f32.mrf.mxu0
        %3116 = vdwg.mxu0
        %3117 = vmatpush.bf16.msra.mxu0 %v2838
        %3118 = vmatpush.bf16.msra.mxu0 %v2834
        %3119 = vmatpush.bf16.msra.mxu0 %v2830
        %3120 = vmatpush.bf16.msra.mxu0 %v2826
        %3121 = vmatpush.bf16.msra.mxu0 %v2822
        %3122 = vmatpush.bf16.msra.mxu0 %v2818
        %3123 = vmatpush.bf16.msra.mxu0 %v2814
        %3124 = vmatpush.bf16.msra.mxu0 %v2810
        %3125 = vmatmul.bf16.gmra.mxu0 %v2293
        %v3126 = vpop.f32.mrf.mxu0
        %v3127 = vadd.f32 0.0, %v3126
        %v3128 = vpop.f32.mrf.mxu0
        %3129 = vdwg.mxu0
        %3130 = vmatpush.bf16.msra.mxu0 %v2870
        %3131 = vmatpush.bf16.msra.mxu0 %v2866
        %3132 = vmatpush.bf16.msra.mxu0 %v2862
        %3133 = vmatpush.bf16.msra.mxu0 %v2858
        %3134 = vmatpush.bf16.msra.mxu0 %v2854
        %3135 = vmatpush.bf16.msra.mxu0 %v2850
        %3136 = vmatpush.bf16.msra.mxu0 %v2846
        %3137 = vmatpush.bf16.msra.mxu0 %v2842
        %3138 = vmatmul.bf16.gmra.mxu0 %v2294
        %v3139 = vpop.f32.mrf.mxu0
        %v3140 = vadd.f32 %v3127, %v3139
        %v3141 = vpop.f32.mrf.mxu0
        %3142 = vdwg.mxu0
        %3143 = vmatpush.bf16.msra.mxu0 %v2902
        %3144 = vmatpush.bf16.msra.mxu0 %v2898
        %3145 = vmatpush.bf16.msra.mxu0 %v2894
        %3146 = vmatpush.bf16.msra.mxu0 %v2890
        %3147 = vmatpush.bf16.msra.mxu0 %v2886
        %3148 = vmatpush.bf16.msra.mxu0 %v2882
        %3149 = vmatpush.bf16.msra.mxu0 %v2878
        %3150 = vmatpush.bf16.msra.mxu0 %v2874
        %3151 = vmatmul.bf16.gmra.mxu0 %v2295
        %v3152 = vpop.f32.mrf.mxu0
        %v3153 = vadd.f32 %v3140, %v3152
        %v3154 = vpop.f32.mrf.mxu0
        %3155 = vdwg.mxu0
        %3156 = vmatpush.bf16.msra.mxu0 %v2934
        %3157 = vmatpush.bf16.msra.mxu0 %v2930
        %3158 = vmatpush.bf16.msra.mxu0 %v2926
        %3159 = vmatpush.bf16.msra.mxu0 %v2922
        %3160 = vmatpush.bf16.msra.mxu0 %v2918
        %3161 = vmatpush.bf16.msra.mxu0 %v2914
        %3162 = vmatpush.bf16.msra.mxu0 %v2910
        %3163 = vmatpush.bf16.msra.mxu0 %v2906
        %3164 = vmatmul.bf16.gmra.mxu0 %v2296
        %v3165 = vpop.f32.mrf.mxu0
        %v3166 = vadd.f32 %v3153, %v3165
        %v3167 = vpop.f32.mrf.mxu0
        %3168 = vdwg.mxu0
        %3169 = vmatpush.bf16.msra.mxu0 %v2839
        %3170 = vmatpush.bf16.msra.mxu0 %v2835
        %3171 = vmatpush.bf16.msra.mxu0 %v2831
        %3172 = vmatpush.bf16.msra.mxu0 %v2827
        %3173 = vmatpush.bf16.msra.mxu0 %v2823
        %3174 = vmatpush.bf16.msra.mxu0 %v2819
        %3175 = vmatpush.bf16.msra.mxu0 %v2815
        %3176 = vmatpush.bf16.msra.mxu0 %v2811
        %3177 = vmatmul.bf16.gmra.mxu0 %v2293
        %v3178 = vpop.f32.mrf.mxu0
        %v3179 = vadd.f32 0.0, %v3178
        %v3180 = vpop.f32.mrf.mxu0
        %3181 = vdwg.mxu0
        %3182 = vmatpush.bf16.msra.mxu0 %v2871
        %3183 = vmatpush.bf16.msra.mxu0 %v2867
        %3184 = vmatpush.bf16.msra.mxu0 %v2863
        %3185 = vmatpush.bf16.msra.mxu0 %v2859
        %3186 = vmatpush.bf16.msra.mxu0 %v2855
        %3187 = vmatpush.bf16.msra.mxu0 %v2851
        %3188 = vmatpush.bf16.msra.mxu0 %v2847
        %3189 = vmatpush.bf16.msra.mxu0 %v2843
        %3190 = vmatmul.bf16.gmra.mxu0 %v2294
        %v3191 = vpop.f32.mrf.mxu0
        %v3192 = vadd.f32 %v3179, %v3191
        %v3193 = vpop.f32.mrf.mxu0
        %3194 = vdwg.mxu0
        %3195 = vmatpush.bf16.msra.mxu0 %v2903
        %3196 = vmatpush.bf16.msra.mxu0 %v2899
        %3197 = vmatpush.bf16.msra.mxu0 %v2895
        %3198 = vmatpush.bf16.msra.mxu0 %v2891
        %3199 = vmatpush.bf16.msra.mxu0 %v2887
        %3200 = vmatpush.bf16.msra.mxu0 %v2883
        %3201 = vmatpush.bf16.msra.mxu0 %v2879
        %3202 = vmatpush.bf16.msra.mxu0 %v2875
        %3203 = vmatmul.bf16.gmra.mxu0 %v2295
        %v3204 = vpop.f32.mrf.mxu0
        %v3205 = vadd.f32 %v3192, %v3204
        %v3206 = vpop.f32.mrf.mxu0
        %3207 = vdwg.mxu0
        %3208 = vmatpush.bf16.msra.mxu0 %v2935
        %3209 = vmatpush.bf16.msra.mxu0 %v2931
        %3210 = vmatpush.bf16.msra.mxu0 %v2927
        %3211 = vmatpush.bf16.msra.mxu0 %v2923
        %3212 = vmatpush.bf16.msra.mxu0 %v2919
        %3213 = vmatpush.bf16.msra.mxu0 %v2915
        %3214 = vmatpush.bf16.msra.mxu0 %v2911
        %3215 = vmatpush.bf16.msra.mxu0 %v2907
        %3216 = vmatmul.bf16.gmra.mxu0 %v2296
        %v3217 = vpop.f32.mrf.mxu0
        %v3218 = vadd.f32 %v3205, %v3217
        %v3219 = vpop.f32.mrf.mxu0
        %3220 = vdwg.mxu0
        %3221 = vmatpush.bf16.msra.mxu0 %v2840
        %3222 = vmatpush.bf16.msra.mxu0 %v2836
        %3223 = vmatpush.bf16.msra.mxu0 %v2832
        %3224 = vmatpush.bf16.msra.mxu0 %v2828
        %3225 = vmatpush.bf16.msra.mxu0 %v2824
        %3226 = vmatpush.bf16.msra.mxu0 %v2820
        %3227 = vmatpush.bf16.msra.mxu0 %v2816
        %3228 = vmatpush.bf16.msra.mxu0 %v2812
        %3229 = vmatmul.bf16.gmra.mxu0 %v2293
        %v3230 = vpop.f32.mrf.mxu0
        %v3231 = vadd.f32 0.0, %v3230
        %v3232 = vpop.f32.mrf.mxu0
        %3233 = vdwg.mxu0
        %3234 = vmatpush.bf16.msra.mxu0 %v2872
        %3235 = vmatpush.bf16.msra.mxu0 %v2868
        %3236 = vmatpush.bf16.msra.mxu0 %v2864
        %3237 = vmatpush.bf16.msra.mxu0 %v2860
        %3238 = vmatpush.bf16.msra.mxu0 %v2856
        %3239 = vmatpush.bf16.msra.mxu0 %v2852
        %3240 = vmatpush.bf16.msra.mxu0 %v2848
        %3241 = vmatpush.bf16.msra.mxu0 %v2844
        %3242 = vmatmul.bf16.gmra.mxu0 %v2294
        %v3243 = vpop.f32.mrf.mxu0
        %v3244 = vadd.f32 %v3231, %v3243
        %v3245 = vpop.f32.mrf.mxu0
        %3246 = vdwg.mxu0
        %3247 = vmatpush.bf16.msra.mxu0 %v2904
        %3248 = vmatpush.bf16.msra.mxu0 %v2900
        %3249 = vmatpush.bf16.msra.mxu0 %v2896
        %3250 = vmatpush.bf16.msra.mxu0 %v2892
        %3251 = vmatpush.bf16.msra.mxu0 %v2888
        %3252 = vmatpush.bf16.msra.mxu0 %v2884
        %3253 = vmatpush.bf16.msra.mxu0 %v2880
        %3254 = vmatpush.bf16.msra.mxu0 %v2876
        %3255 = vmatmul.bf16.gmra.mxu0 %v2295
        %v3256 = vpop.f32.mrf.mxu0
        %v3257 = vadd.f32 %v3244, %v3256
        %v3258 = vpop.f32.mrf.mxu0
        %3259 = vdwg.mxu0
        %3260 = vmatpush.bf16.msra.mxu0 %v2936
        %3261 = vmatpush.bf16.msra.mxu0 %v2932
        %3262 = vmatpush.bf16.msra.mxu0 %v2928
        %3263 = vmatpush.bf16.msra.mxu0 %v2924
        %3264 = vmatpush.bf16.msra.mxu0 %v2920
        %3265 = vmatpush.bf16.msra.mxu0 %v2916
        %3266 = vmatpush.bf16.msra.mxu0 %v2912
        %3267 = vmatpush.bf16.msra.mxu0 %v2908
        %3268 = vmatmul.bf16.gmra.mxu0 %v2296
        %v3269 = vpop.f32.mrf.mxu0
        %v3270 = vadd.f32 %v3257, %v3269
        %v3271 = vpop.f32.mrf.mxu0
        %3272 = vdwg.mxu0
        %v3273 = vadd.f32 %v2289, %v3114
        %v3274 = vadd.f32 %v2290, %v3166
        %v3275 = vadd.f32 %v2291, %v3218
        %v3276 = vadd.f32 %v2292, %v3270
        %3277 = vst [vmem:[#allocation2] sm:$0xff] %v3273
        %3278 = vst [vmem:[#allocation2 + $0x8] sm:$0xff] %v3274
        %3279 = vst [vmem:[#allocation2 + $0x10] sm:$0xff] %v3275
        %3280 = vst [vmem:[#allocation2 + $0x18] sm:$0xff] %v3276
        %p3281 = scmp.eq.s32.totalorder %s39, 3
        // Predicated region
        $region145: #{tpu_custom_call.1} parent=79 // pred_check
          %p3282 = pneg %p3281
        $region146: #{tpu_custom_call.1} parent=79 // pred_check_branch
          %3284 = sbr.rel (%p3282) target = $region148
        $region147: #{tpu_custom_call.1} parent=79 // pred_region
          %v3285 = vld [vmem:[#allocation2] sm:$0xff]
          %v3286 = vld [vmem:[#allocation2 + $0x8] sm:$0xff]
          %v3287 = vld [vmem:[#allocation2 + $0x10] sm:$0xff]
          %v3288 = vld [vmem:[#allocation2 + $0x18] sm:$0xff]
          %v3289 = vld [vmem:[#allocation11] sm:$0xf]
          %v3291 = vperm.slane %v3289, 0
          %v3292 = vperm.slane %v3289, 1
          %v3293 = vperm.slane %v3289, 2
          %v3294 = vperm.slane %v3289, 3
          %v3299 = vadd.f32 %v3285, %v3291
          %v3300 = vadd.f32 %v3286, %v3292
          %v3301 = vadd.f32 %v3287, %v3293
          %v3302 = vadd.f32 %v3288, %v3294
          %v3303 = vmax.f32 %v3299, 0.0
          %v3304 = vmax.f32 %v3300, 0.0
          %v3305 = vmax.f32 %v3301, 0.0
          %v3306 = vmax.f32 %v3302, 0.0
          %v3307 = vld [vmem:[#allocation6] sm:$0xff]
          %v3308 = vpack.c.bf16 %v3307, %v3307
          %v3309 = vld [vmem:[#allocation12] sm:$0xff]
          %v3310 = vld [vmem:[#allocation14] sm:$0x3]
          %v3312 = vperm.slane %v3310, 0
          %v3313 = vperm.slane %v3310, 1
          %v3317 = vunpack.c.l.b16 %v3309
          %v3318 = vunpack.c.h.b16 %v3309
          %v3319 = vpack.c.b16 %v3317, %v3317
          %v3320 = vpack.c.b16 %v3318, %v3318
          %vm3321 = vcmask 64512
          %v3323 = vsel %vm3321, %v3308, 0
          %vm3325 = vcmask 1043456
          %v3327 = vsel %vm3325, %v3319, 0
          %v3330 = vsel %vm3325, %v3320, 0
          %3332 = vmatpush.bf16.msra.mxu0 0
          %3333 = vmatpush.bf16.msra.mxu0 0
          %3334 = vmatpush.bf16.msra.mxu0 0
          %3335 = vmatpush.bf16.msra.mxu0 0
          %3336 = vmatpush.bf16.msra.mxu0 0
          %3337 = vmatpush.bf16.msra.mxu0 0
          %3338 = vmatpush.bf16.msra.mxu0 0
          %3339 = vmatpush.bf16.msra.mxu0 %v3327
          %3340 = vmatmul.bf16.gmra.mxu0 %v3323
          %v3341 = vpop.f32.mrf.mxu0
          %v3342 = vadd.f32 %v3312, %v3341
          %v3343 = vpop.f32.mrf.mxu0
          %3344 = vdwg.mxu0
          %3345 = vmatpush.bf16.msra.mxu0 0
          %3346 = vmatpush.bf16.msra.mxu0 0
          %3347 = vmatpush.bf16.msra.mxu0 0
          %3348 = vmatpush.bf16.msra.mxu0 0
          %3349 = vmatpush.bf16.msra.mxu0 0
          %3350 = vmatpush.bf16.msra.mxu0 0
          %3351 = vmatpush.bf16.msra.mxu0 0
          %3352 = vmatpush.bf16.msra.mxu0 %v3330
          %3353 = vmatmul.bf16.gmra.mxu0 %v3323
          %v3354 = vpop.f32.mrf.mxu0
          %v3355 = vadd.f32 %v3313, %v3354
          %v3356 = vpop.f32.mrf.mxu0
          %3357 = vdwg.mxu0
          %v3358 = vmax.f32 %v3342, 0.0
          %v3359 = vmax.f32 %v3355, 0.0
          %v3360 = vpack.c.bf16 %v3358, %v3358
          %v3361 = vpack.c.bf16 %v3359, %v3359
          %v3362 = vld [vmem:[#allocation15] sm:$0xff]
          %v3363 = vld [vmem:[#allocation15 + $0x8] sm:$0xff]
          %v3364 = vld [vmem:[#allocation15 + $0x10] sm:$0xff]
          %v3365 = vld [vmem:[#allocation15 + $0x18] sm:$0xff]
          %v3366 = vld [vmem:[#allocation15 + $0x20] sm:$0xff]
          %v3367 = vld [vmem:[#allocation15 + $0x28] sm:$0xff]
          %v3368 = vld [vmem:[#allocation15 + $0x30] sm:$0xff]
          %v3369 = vld [vmem:[#allocation15 + $0x38] sm:$0xff]
          %v3370 = vld [vmem:[#allocation15 + $0x40] sm:$0xff]
          %v3371 = vld [vmem:[#allocation15 + $0x48] sm:$0xff]
          %v3372 = vld [vmem:[#allocation15 + $0x50] sm:$0xff]
          %v3373 = vld [vmem:[#allocation15 + $0x58] sm:$0xff]
          %v3374 = vld [vmem:[#allocation15 + $0x60] sm:$0xff]
          %v3375 = vld [vmem:[#allocation15 + $0x68] sm:$0xff]
          %v3376 = vld [vmem:[#allocation15 + $0x70] sm:$0xff]
          %v3377 = vld [vmem:[#allocation15 + $0x78] sm:$0xff]
          %v3378 = vld [vmem:[#allocation15 + $0x80] sm:$0xff]
          %v3379 = vld [vmem:[#allocation15 + $0x88] sm:$0xff]
          %v3380 = vld [vmem:[#allocation15 + $0x90] sm:$0xff]
          %v3381 = vld [vmem:[#allocation15 + $0x98] sm:$0xff]
          %v3382 = vld [vmem:[#allocation15 + $0xa0] sm:$0xff]
          %v3383 = vld [vmem:[#allocation15 + $0xa8] sm:$0xff]
          %v3384 = vld [vmem:[#allocation15 + $0xb0] sm:$0xff]
          %v3385 = vld [vmem:[#allocation15 + $0xb8] sm:$0xff]
          %v3386 = vld [vmem:[#allocation15 + $0xc0] sm:$0xff]
          %v3387 = vld [vmem:[#allocation15 + $0xc8] sm:$0xff]
          %v3388 = vld [vmem:[#allocation15 + $0xd0] sm:$0xff]
          %v3389 = vld [vmem:[#allocation15 + $0xd8] sm:$0xff]
          %v3390 = vld [vmem:[#allocation15 + $0xe0] sm:$0xff]
          %v3391 = vld [vmem:[#allocation15 + $0xe8] sm:$0xff]
          %v3392 = vld [vmem:[#allocation15 + $0xf0] sm:$0xff]
          %v3393 = vld [vmem:[#allocation15 + $0xf8] sm:$0xff]
          %v3394 = vld [vmem:[#allocation15 + $0x100] sm:$0xff]
          %v3395 = vld [vmem:[#allocation15 + $0x108] sm:$0xff]
          %v3396 = vld [vmem:[#allocation15 + $0x110] sm:$0xff]
          %v3397 = vld [vmem:[#allocation15 + $0x118] sm:$0xff]
          %v3398 = vld [vmem:[#allocation15 + $0x120] sm:$0xff]
          %v3399 = vld [vmem:[#allocation15 + $0x128] sm:$0xff]
          %v3400 = vld [vmem:[#allocation15 + $0x130] sm:$0xff]
          %v3401 = vld [vmem:[#allocation15 + $0x138] sm:$0xff]
          %v3402 = vld [vmem:[#allocation15 + $0x140] sm:$0xff]
          %v3403 = vld [vmem:[#allocation15 + $0x148] sm:$0xff]
          %v3404 = vld [vmem:[#allocation15 + $0x150] sm:$0xff]
          %v3405 = vld [vmem:[#allocation15 + $0x158] sm:$0xff]
          %v3406 = vld [vmem:[#allocation15 + $0x160] sm:$0xff]
          %v3407 = vld [vmem:[#allocation15 + $0x168] sm:$0xff]
          %v3408 = vld [vmem:[#allocation15 + $0x170] sm:$0xff]
          %v3409 = vld [vmem:[#allocation15 + $0x178] sm:$0xff]
          %v3410 = vld [vmem:[#allocation15 + $0x180] sm:$0xff]
          %v3411 = vld [vmem:[#allocation15 + $0x188] sm:$0xff]
          %v3412 = vld [vmem:[#allocation15 + $0x190] sm:$0xff]
          %v3413 = vld [vmem:[#allocation15 + $0x198] sm:$0xff]
          %v3414 = vld [vmem:[#allocation15 + $0x1a0] sm:$0xff]
          %v3415 = vld [vmem:[#allocation15 + $0x1a8] sm:$0xff]
          %v3416 = vld [vmem:[#allocation15 + $0x1b0] sm:$0xff]
          %v3417 = vld [vmem:[#allocation15 + $0x1b8] sm:$0xff]
          %v3418 = vld [vmem:[#allocation15 + $0x1c0] sm:$0xff]
          %v3419 = vld [vmem:[#allocation15 + $0x1c8] sm:$0xff]
          %v3420 = vld [vmem:[#allocation15 + $0x1d0] sm:$0xff]
          %v3421 = vld [vmem:[#allocation15 + $0x1d8] sm:$0xff]
          %v3422 = vld [vmem:[#allocation15 + $0x1e0] sm:$0xff]
          %v3423 = vld [vmem:[#allocation15 + $0x1e8] sm:$0xff]
          %v3424 = vld [vmem:[#allocation15 + $0x1f0] sm:$0xff]
          %v3425 = vld [vmem:[#allocation15 + $0x1f8] sm:$0xff]
          %v3426 = vld [vmem:[#allocation17] sm:$0xf]
          %v3428 = vperm.slane %v3426, 0
          %v3429 = vperm.slane %v3426, 1
          %v3430 = vperm.slane %v3426, 2
          %v3431 = vperm.slane %v3426, 3
          %v3500 = vunpack.c.l.b16 %v3362
          %v3501 = vunpack.c.h.b16 %v3362
          %v3502 = vunpack.c.l.b16 %v3363
          %v3503 = vunpack.c.h.b16 %v3363
          %v3504 = vunpack.c.l.b16 %v3364
          %v3505 = vunpack.c.h.b16 %v3364
          %v3506 = vunpack.c.l.b16 %v3365
          %v3507 = vunpack.c.h.b16 %v3365
          %v3508 = vunpack.c.l.b16 %v3366
          %v3509 = vunpack.c.h.b16 %v3366
          %v3510 = vunpack.c.l.b16 %v3367
          %v3511 = vunpack.c.h.b16 %v3367
          %v3512 = vunpack.c.l.b16 %v3368
          %v3513 = vunpack.c.h.b16 %v3368
          %v3514 = vunpack.c.l.b16 %v3369
          %v3515 = vunpack.c.h.b16 %v3369
          %v3516 = vunpack.c.l.b16 %v3370
          %v3517 = vunpack.c.h.b16 %v3370
          %v3518 = vunpack.c.l.b16 %v3371
          %v3519 = vunpack.c.h.b16 %v3371
          %v3520 = vunpack.c.l.b16 %v3372
          %v3521 = vunpack.c.h.b16 %v3372
          %v3522 = vunpack.c.l.b16 %v3373
          %v3523 = vunpack.c.h.b16 %v3373
          %v3524 = vunpack.c.l.b16 %v3374
          %v3525 = vunpack.c.h.b16 %v3374
          %v3526 = vunpack.c.l.b16 %v3375
          %v3527 = vunpack.c.h.b16 %v3375
          %v3528 = vunpack.c.l.b16 %v3376
          %v3529 = vunpack.c.h.b16 %v3376
          %v3530 = vunpack.c.l.b16 %v3377
          %v3531 = vunpack.c.h.b16 %v3377
          %v3532 = vunpack.c.l.b16 %v3378
          %v3533 = vunpack.c.h.b16 %v3378
          %v3534 = vunpack.c.l.b16 %v3379
          %v3535 = vunpack.c.h.b16 %v3379
          %v3536 = vunpack.c.l.b16 %v3380
          %v3537 = vunpack.c.h.b16 %v3380
          %v3538 = vunpack.c.l.b16 %v3381
          %v3539 = vunpack.c.h.b16 %v3381
          %v3540 = vunpack.c.l.b16 %v3382
          %v3541 = vunpack.c.h.b16 %v3382
          %v3542 = vunpack.c.l.b16 %v3383
          %v3543 = vunpack.c.h.b16 %v3383
          %v3544 = vunpack.c.l.b16 %v3384
          %v3545 = vunpack.c.h.b16 %v3384
          %v3546 = vunpack.c.l.b16 %v3385
          %v3547 = vunpack.c.h.b16 %v3385
          %v3548 = vunpack.c.l.b16 %v3386
          %v3549 = vunpack.c.h.b16 %v3386
          %v3550 = vunpack.c.l.b16 %v3387
          %v3551 = vunpack.c.h.b16 %v3387
          %v3552 = vunpack.c.l.b16 %v3388
          %v3553 = vunpack.c.h.b16 %v3388
          %v3554 = vunpack.c.l.b16 %v3389
          %v3555 = vunpack.c.h.b16 %v3389
          %v3556 = vunpack.c.l.b16 %v3390
          %v3557 = vunpack.c.h.b16 %v3390
          %v3558 = vunpack.c.l.b16 %v3391
          %v3559 = vunpack.c.h.b16 %v3391
          %v3560 = vunpack.c.l.b16 %v3392
          %v3561 = vunpack.c.h.b16 %v3392
          %v3562 = vunpack.c.l.b16 %v3393
          %v3563 = vunpack.c.h.b16 %v3393
          %v3564 = vunpack.c.l.b16 %v3394
          %v3565 = vunpack.c.h.b16 %v3394
          %v3566 = vunpack.c.l.b16 %v3395
          %v3567 = vunpack.c.h.b16 %v3395
          %v3568 = vunpack.c.l.b16 %v3396
          %v3569 = vunpack.c.h.b16 %v3396
          %v3570 = vunpack.c.l.b16 %v3397
          %v3571 = vunpack.c.h.b16 %v3397
          %v3572 = vunpack.c.l.b16 %v3398
          %v3573 = vunpack.c.h.b16 %v3398
          %v3574 = vunpack.c.l.b16 %v3399
          %v3575 = vunpack.c.h.b16 %v3399
          %v3576 = vunpack.c.l.b16 %v3400
          %v3577 = vunpack.c.h.b16 %v3400
          %v3578 = vunpack.c.l.b16 %v3401
          %v3579 = vunpack.c.h.b16 %v3401
          %v3580 = vunpack.c.l.b16 %v3402
          %v3581 = vunpack.c.h.b16 %v3402
          %v3582 = vunpack.c.l.b16 %v3403
          %v3583 = vunpack.c.h.b16 %v3403
          %v3584 = vunpack.c.l.b16 %v3404
          %v3585 = vunpack.c.h.b16 %v3404
          %v3586 = vunpack.c.l.b16 %v3405
          %v3587 = vunpack.c.h.b16 %v3405
          %v3588 = vunpack.c.l.b16 %v3406
          %v3589 = vunpack.c.h.b16 %v3406
          %v3590 = vunpack.c.l.b16 %v3407
          %v3591 = vunpack.c.h.b16 %v3407
          %v3592 = vunpack.c.l.b16 %v3408
          %v3593 = vunpack.c.h.b16 %v3408
          %v3594 = vunpack.c.l.b16 %v3409
          %v3595 = vunpack.c.h.b16 %v3409
          %v3596 = vunpack.c.l.b16 %v3410
          %v3597 = vunpack.c.h.b16 %v3410
          %v3598 = vunpack.c.l.b16 %v3411
          %v3599 = vunpack.c.h.b16 %v3411
          %v3600 = vunpack.c.l.b16 %v3412
          %v3601 = vunpack.c.h.b16 %v3412
          %v3602 = vunpack.c.l.b16 %v3413
          %v3603 = vunpack.c.h.b16 %v3413
          %v3604 = vunpack.c.l.b16 %v3414
          %v3605 = vunpack.c.h.b16 %v3414
          %v3606 = vunpack.c.l.b16 %v3415
          %v3607 = vunpack.c.h.b16 %v3415
          %v3608 = vunpack.c.l.b16 %v3416
          %v3609 = vunpack.c.h.b16 %v3416
          %v3610 = vunpack.c.l.b16 %v3417
          %v3611 = vunpack.c.h.b16 %v3417
          %v3612 = vunpack.c.l.b16 %v3418
          %v3613 = vunpack.c.h.b16 %v3418
          %v3614 = vunpack.c.l.b16 %v3419
          %v3615 = vunpack.c.h.b16 %v3419
          %v3616 = vunpack.c.l.b16 %v3420
          %v3617 = vunpack.c.h.b16 %v3420
          %v3618 = vunpack.c.l.b16 %v3421
          %v3619 = vunpack.c.h.b16 %v3421
          %v3620 = vunpack.c.l.b16 %v3422
          %v3621 = vunpack.c.h.b16 %v3422
          %v3622 = vunpack.c.l.b16 %v3423
          %v3623 = vunpack.c.h.b16 %v3423
          %v3624 = vunpack.c.l.b16 %v3424
          %v3625 = vunpack.c.h.b16 %v3424
          %v3626 = vunpack.c.l.b16 %v3425
          %v3627 = vunpack.c.h.b16 %v3425
          %v3628 = vpack.c.b16 %v3504, %v3500
          %v3629 = vpack.c.b16 %v3505, %v3501
          %v3630 = vpack.c.b16 %v3506, %v3502
          %v3631 = vpack.c.b16 %v3507, %v3503
          %v3632 = vpack.c.b16 %v3512, %v3508
          %v3633 = vpack.c.b16 %v3513, %v3509
          %v3634 = vpack.c.b16 %v3514, %v3510
          %v3635 = vpack.c.b16 %v3515, %v3511
          %v3636 = vpack.c.b16 %v3520, %v3516
          %v3637 = vpack.c.b16 %v3521, %v3517
          %v3638 = vpack.c.b16 %v3522, %v3518
          %v3639 = vpack.c.b16 %v3523, %v3519
          %v3640 = vpack.c.b16 %v3528, %v3524
          %v3641 = vpack.c.b16 %v3529, %v3525
          %v3642 = vpack.c.b16 %v3530, %v3526
          %v3643 = vpack.c.b16 %v3531, %v3527
          %v3644 = vpack.c.b16 %v3536, %v3532
          %v3645 = vpack.c.b16 %v3537, %v3533
          %v3646 = vpack.c.b16 %v3538, %v3534
          %v3647 = vpack.c.b16 %v3539, %v3535
          %v3648 = vpack.c.b16 %v3544, %v3540
          %v3649 = vpack.c.b16 %v3545, %v3541
          %v3650 = vpack.c.b16 %v3546, %v3542
          %v3651 = vpack.c.b16 %v3547, %v3543
          %v3652 = vpack.c.b16 %v3552, %v3548
          %v3653 = vpack.c.b16 %v3553, %v3549
          %v3654 = vpack.c.b16 %v3554, %v3550
          %v3655 = vpack.c.b16 %v3555, %v3551
          %v3656 = vpack.c.b16 %v3560, %v3556
          %v3657 = vpack.c.b16 %v3561, %v3557
          %v3658 = vpack.c.b16 %v3562, %v3558
          %v3659 = vpack.c.b16 %v3563, %v3559
          %v3660 = vpack.c.b16 %v3568, %v3564
          %v3661 = vpack.c.b16 %v3569, %v3565
          %v3662 = vpack.c.b16 %v3570, %v3566
          %v3663 = vpack.c.b16 %v3571, %v3567
          %v3664 = vpack.c.b16 %v3576, %v3572
          %v3665 = vpack.c.b16 %v3577, %v3573
          %v3666 = vpack.c.b16 %v3578, %v3574
          %v3667 = vpack.c.b16 %v3579, %v3575
          %v3668 = vpack.c.b16 %v3584, %v3580
          %v3669 = vpack.c.b16 %v3585, %v3581
          %v3670 = vpack.c.b16 %v3586, %v3582
          %v3671 = vpack.c.b16 %v3587, %v3583
          %v3672 = vpack.c.b16 %v3592, %v3588
          %v3673 = vpack.c.b16 %v3593, %v3589
          %v3674 = vpack.c.b16 %v3594, %v3590
          %v3675 = vpack.c.b16 %v3595, %v3591
          %v3676 = vpack.c.b16 %v3600, %v3596
          %v3677 = vpack.c.b16 %v3601, %v3597
          %v3678 = vpack.c.b16 %v3602, %v3598
          %v3679 = vpack.c.b16 %v3603, %v3599
          %v3680 = vpack.c.b16 %v3608, %v3604
          %v3681 = vpack.c.b16 %v3609, %v3605
          %v3682 = vpack.c.b16 %v3610, %v3606
          %v3683 = vpack.c.b16 %v3611, %v3607
          %v3684 = vpack.c.b16 %v3616, %v3612
          %v3685 = vpack.c.b16 %v3617, %v3613
          %v3686 = vpack.c.b16 %v3618, %v3614
          %v3687 = vpack.c.b16 %v3619, %v3615
          %v3688 = vpack.c.b16 %v3624, %v3620
          %v3689 = vpack.c.b16 %v3625, %v3621
          %v3690 = vpack.c.b16 %v3626, %v3622
          %v3691 = vpack.c.b16 %v3627, %v3623
          %3756 = vmatpush.bf16.msra.mxu0 %v3656
          %3757 = vmatpush.bf16.msra.mxu0 %v3652
          %3758 = vmatpush.bf16.msra.mxu0 %v3648
          %3759 = vmatpush.bf16.msra.mxu0 %v3644
          %3760 = vmatpush.bf16.msra.mxu0 %v3640
          %3761 = vmatpush.bf16.msra.mxu0 %v3636
          %3762 = vmatpush.bf16.msra.mxu0 %v3632
          %3763 = vmatpush.bf16.msra.mxu0 %v3628
          %3764 = vmatmul.bf16.gmra.mxu0 %v3360
          %v3765 = vpop.f32.mrf.mxu0
          %v3766 = vadd.f32 %v3428, %v3765
          %v3767 = vpop.f32.mrf.mxu0
          %3768 = vdwg.mxu0
          %3769 = vmatpush.bf16.msra.mxu0 %v3688
          %3770 = vmatpush.bf16.msra.mxu0 %v3684
          %3771 = vmatpush.bf16.msra.mxu0 %v3680
          %3772 = vmatpush.bf16.msra.mxu0 %v3676
          %3773 = vmatpush.bf16.msra.mxu0 %v3672
          %3774 = vmatpush.bf16.msra.mxu0 %v3668
          %3775 = vmatpush.bf16.msra.mxu0 %v3664
          %3776 = vmatpush.bf16.msra.mxu0 %v3660
          %3777 = vmatmul.bf16.gmra.mxu0 %v3361
          %v3778 = vpop.f32.mrf.mxu0
          %v3779 = vadd.f32 %v3766, %v3778
          %v3780 = vpop.f32.mrf.mxu0
          %3781 = vdwg.mxu0
          %3782 = vmatpush.bf16.msra.mxu0 %v3657
          %3783 = vmatpush.bf16.msra.mxu0 %v3653
          %3784 = vmatpush.bf16.msra.mxu0 %v3649
          %3785 = vmatpush.bf16.msra.mxu0 %v3645
          %3786 = vmatpush.bf16.msra.mxu0 %v3641
          %3787 = vmatpush.bf16.msra.mxu0 %v3637
          %3788 = vmatpush.bf16.msra.mxu0 %v3633
          %3789 = vmatpush.bf16.msra.mxu0 %v3629
          %3790 = vmatmul.bf16.gmra.mxu0 %v3360
          %v3791 = vpop.f32.mrf.mxu0
          %v3792 = vadd.f32 %v3429, %v3791
          %v3793 = vpop.f32.mrf.mxu0
          %3794 = vdwg.mxu0
          %3795 = vmatpush.bf16.msra.mxu0 %v3689
          %3796 = vmatpush.bf16.msra.mxu0 %v3685
          %3797 = vmatpush.bf16.msra.mxu0 %v3681
          %3798 = vmatpush.bf16.msra.mxu0 %v3677
          %3799 = vmatpush.bf16.msra.mxu0 %v3673
          %3800 = vmatpush.bf16.msra.mxu0 %v3669
          %3801 = vmatpush.bf16.msra.mxu0 %v3665
          %3802 = vmatpush.bf16.msra.mxu0 %v3661
          %3803 = vmatmul.bf16.gmra.mxu0 %v3361
          %v3804 = vpop.f32.mrf.mxu0
          %v3805 = vadd.f32 %v3792, %v3804
          %v3806 = vpop.f32.mrf.mxu0
          %3807 = vdwg.mxu0
          %3808 = vmatpush.bf16.msra.mxu0 %v3658
          %3809 = vmatpush.bf16.msra.mxu0 %v3654
          %3810 = vmatpush.bf16.msra.mxu0 %v3650
          %3811 = vmatpush.bf16.msra.mxu0 %v3646
          %3812 = vmatpush.bf16.msra.mxu0 %v3642
          %3813 = vmatpush.bf16.msra.mxu0 %v3638
          %3814 = vmatpush.bf16.msra.mxu0 %v3634
          %3815 = vmatpush.bf16.msra.mxu0 %v3630
          %3816 = vmatmul.bf16.gmra.mxu0 %v3360
          %v3817 = vpop.f32.mrf.mxu0
          %v3818 = vadd.f32 %v3430, %v3817
          %v3819 = vpop.f32.mrf.mxu0
          %3820 = vdwg.mxu0
          %3821 = vmatpush.bf16.msra.mxu0 %v3690
          %3822 = vmatpush.bf16.msra.mxu0 %v3686
          %3823 = vmatpush.bf16.msra.mxu0 %v3682
          %3824 = vmatpush.bf16.msra.mxu0 %v3678
          %3825 = vmatpush.bf16.msra.mxu0 %v3674
          %3826 = vmatpush.bf16.msra.mxu0 %v3670
          %3827 = vmatpush.bf16.msra.mxu0 %v3666
          %3828 = vmatpush.bf16.msra.mxu0 %v3662
          %3829 = vmatmul.bf16.gmra.mxu0 %v3361
          %v3830 = vpop.f32.mrf.mxu0
          %v3831 = vadd.f32 %v3818, %v3830
          %v3832 = vpop.f32.mrf.mxu0
          %3833 = vdwg.mxu0
          %3834 = vmatpush.bf16.msra.mxu0 %v3659
          %3835 = vmatpush.bf16.msra.mxu0 %v3655
          %3836 = vmatpush.bf16.msra.mxu0 %v3651
          %3837 = vmatpush.bf16.msra.mxu0 %v3647
          %3838 = vmatpush.bf16.msra.mxu0 %v3643
          %3839 = vmatpush.bf16.msra.mxu0 %v3639
          %3840 = vmatpush.bf16.msra.mxu0 %v3635
          %3841 = vmatpush.bf16.msra.mxu0 %v3631
          %3842 = vmatmul.bf16.gmra.mxu0 %v3360
          %v3843 = vpop.f32.mrf.mxu0
          %v3844 = vadd.f32 %v3431, %v3843
          %v3845 = vpop.f32.mrf.mxu0
          %3846 = vdwg.mxu0
          %3847 = vmatpush.bf16.msra.mxu0 %v3691
          %3848 = vmatpush.bf16.msra.mxu0 %v3687
          %3849 = vmatpush.bf16.msra.mxu0 %v3683
          %3850 = vmatpush.bf16.msra.mxu0 %v3679
          %3851 = vmatpush.bf16.msra.mxu0 %v3675
          %3852 = vmatpush.bf16.msra.mxu0 %v3671
          %3853 = vmatpush.bf16.msra.mxu0 %v3667
          %3854 = vmatpush.bf16.msra.mxu0 %v3663
          %3855 = vmatmul.bf16.gmra.mxu0 %v3361
          %v3856 = vpop.f32.mrf.mxu0
          %v3857 = vadd.f32 %v3844, %v3856
          %v3858 = vpop.f32.mrf.mxu0
          %3859 = vdwg.mxu0
          %v3860 = vmul.f32 %v3303, %v3303
          %v3861 = vmul.f32 %v3304, %v3304
          %v3862 = vmul.f32 %v3305, %v3305
          %v3863 = vmul.f32 %v3306, %v3306
          %v3864 = vadd.f32 %v3860, %v3861
          %v3865 = vadd.f32 %v3864, %v3862
          %v3866 = vadd.f32 %v3865, %v3863
          %3867 = vadd.xlane.f32.xlu0 %v3866
          %v3868 = vpop.xlane.xlu0 %3867
          %v3869 = vmax.f32 %v3868, 1e-24
          %v3870 = vrsqrt.pop %v3869
          %v3871 = vmul.f32 %v3870, %v3869
          %v3872 = vmul.f32 %v3871, %v3870
          %v3873 = vmul.f32 0.5, %v3872
          %v3874 = vsub.f32 1.5, %v3873
          %v3875 = vmul.f32 %v3870, %v3874
          %vm3876 = vweird.f32 %v3869
          %vm3877 = vweird.f32 %v3870
          %vm3878 = vmor %vm3876, %vm3877
          %v3879 = vsel %vm3878, %v3870, %v3875
          %v3880 = vmul.f32 %v3779, %v3779
          %v3881 = vmul.f32 %v3805, %v3805
          %v3882 = vmul.f32 %v3831, %v3831
          %v3883 = vmul.f32 %v3857, %v3857
          %v3884 = vadd.f32 %v3880, %v3881
          %v3885 = vadd.f32 %v3884, %v3882
          %v3886 = vadd.f32 %v3885, %v3883
          %3887 = vadd.xlane.f32.xlu0 %v3886
          %v3888 = vpop.xlane.xlu0 %3887
          %v3889 = vmax.f32 %v3888, 1e-24
          %v3890 = vrsqrt.pop %v3889
          %v3891 = vmul.f32 %v3890, %v3889
          %v3892 = vmul.f32 %v3891, %v3890
          %v3893 = vmul.f32 0.5, %v3892
          %v3894 = vsub.f32 1.5, %v3893
          %v3895 = vmul.f32 %v3890, %v3894
          %vm3896 = vweird.f32 %v3889
          %vm3897 = vweird.f32 %v3890
          %vm3898 = vmor %vm3896, %vm3897
          %v3899 = vsel %vm3898, %v3890, %v3895
          %v3900 = vmul.f32 %v3303, %v3879
          %v3901 = vmul.f32 %v3304, %v3879
          %v3902 = vmul.f32 %v3305, %v3879
          %v3903 = vmul.f32 %v3306, %v3879
          %v3904 = vmul.f32 %v3779, %v3899
          %v3905 = vmul.f32 %v3805, %v3899
          %v3906 = vmul.f32 %v3831, %v3899
          %v3907 = vmul.f32 %v3857, %v3899
          %v3908 = vpack.c.bf16 %v3900, %v3900
          %v3909 = vpack.c.bf16 %v3901, %v3901
          %v3910 = vpack.c.bf16 %v3902, %v3902
          %v3911 = vpack.c.bf16 %v3903, %v3903
          %v3912 = vld [vmem:[#allocation18] sm:$0xff]
          %v3913 = vld [vmem:[#allocation18 + $0x8] sm:$0xff]
          %v3914 = vld [vmem:[#allocation18 + $0x10] sm:$0xff]
          %v3915 = vld [vmem:[#allocation18 + $0x18] sm:$0xff]
          %v3916 = vld [vmem:[#allocation18 + $0x20] sm:$0xff]
          %v3917 = vld [vmem:[#allocation18 + $0x28] sm:$0xff]
          %v3918 = vld [vmem:[#allocation18 + $0x30] sm:$0xff]
          %v3919 = vld [vmem:[#allocation18 + $0x38] sm:$0xff]
          %v3920 = vld [vmem:[#allocation18 + $0x40] sm:$0xff]
          %v3921 = vld [vmem:[#allocation18 + $0x48] sm:$0xff]
          %v3922 = vld [vmem:[#allocation18 + $0x50] sm:$0xff]
          %v3923 = vld [vmem:[#allocation18 + $0x58] sm:$0xff]
          %v3924 = vld [vmem:[#allocation18 + $0x60] sm:$0xff]
          %v3925 = vld [vmem:[#allocation18 + $0x68] sm:$0xff]
          %v3926 = vld [vmem:[#allocation18 + $0x70] sm:$0xff]
          %v3927 = vld [vmem:[#allocation18 + $0x78] sm:$0xff]
          %v3928 = vld [vmem:[#allocation18 + $0x80] sm:$0xff]
          %v3929 = vld [vmem:[#allocation18 + $0x88] sm:$0xff]
          %v3930 = vld [vmem:[#allocation18 + $0x90] sm:$0xff]
          %v3931 = vld [vmem:[#allocation18 + $0x98] sm:$0xff]
          %v3932 = vld [vmem:[#allocation18 + $0xa0] sm:$0xff]
          %v3933 = vld [vmem:[#allocation18 + $0xa8] sm:$0xff]
          %v3934 = vld [vmem:[#allocation18 + $0xb0] sm:$0xff]
          %v3935 = vld [vmem:[#allocation18 + $0xb8] sm:$0xff]
          %v3936 = vld [vmem:[#allocation18 + $0xc0] sm:$0xff]
          %v3937 = vld [vmem:[#allocation18 + $0xc8] sm:$0xff]
          %v3938 = vld [vmem:[#allocation18 + $0xd0] sm:$0xff]
          %v3939 = vld [vmem:[#allocation18 + $0xd8] sm:$0xff]
          %v3940 = vld [vmem:[#allocation18 + $0xe0] sm:$0xff]
          %v3941 = vld [vmem:[#allocation18 + $0xe8] sm:$0xff]
          %v3942 = vld [vmem:[#allocation18 + $0xf0] sm:$0xff]
          %v3943 = vld [vmem:[#allocation18 + $0xf8] sm:$0xff]
          %v3944 = vld [vmem:[#allocation18 + $0x100] sm:$0xff]
          %v3945 = vld [vmem:[#allocation18 + $0x108] sm:$0xff]
          %v3946 = vld [vmem:[#allocation18 + $0x110] sm:$0xff]
          %v3947 = vld [vmem:[#allocation18 + $0x118] sm:$0xff]
          %v3948 = vld [vmem:[#allocation18 + $0x120] sm:$0xff]
          %v3949 = vld [vmem:[#allocation18 + $0x128] sm:$0xff]
          %v3950 = vld [vmem:[#allocation18 + $0x130] sm:$0xff]
          %v3951 = vld [vmem:[#allocation18 + $0x138] sm:$0xff]
          %v3952 = vld [vmem:[#allocation18 + $0x140] sm:$0xff]
          %v3953 = vld [vmem:[#allocation18 + $0x148] sm:$0xff]
          %v3954 = vld [vmem:[#allocation18 + $0x150] sm:$0xff]
          %v3955 = vld [vmem:[#allocation18 + $0x158] sm:$0xff]
          %v3956 = vld [vmem:[#allocation18 + $0x160] sm:$0xff]
          %v3957 = vld [vmem:[#allocation18 + $0x168] sm:$0xff]
          %v3958 = vld [vmem:[#allocation18 + $0x170] sm:$0xff]
          %v3959 = vld [vmem:[#allocation18 + $0x178] sm:$0xff]
          %v3960 = vld [vmem:[#allocation18 + $0x180] sm:$0xff]
          %v3961 = vld [vmem:[#allocation18 + $0x188] sm:$0xff]
          %v3962 = vld [vmem:[#allocation18 + $0x190] sm:$0xff]
          %v3963 = vld [vmem:[#allocation18 + $0x198] sm:$0xff]
          %v3964 = vld [vmem:[#allocation18 + $0x1a0] sm:$0xff]
          %v3965 = vld [vmem:[#allocation18 + $0x1a8] sm:$0xff]
          %v3966 = vld [vmem:[#allocation18 + $0x1b0] sm:$0xff]
          %v3967 = vld [vmem:[#allocation18 + $0x1b8] sm:$0xff]
          %v3968 = vld [vmem:[#allocation18 + $0x1c0] sm:$0xff]
          %v3969 = vld [vmem:[#allocation18 + $0x1c8] sm:$0xff]
          %v3970 = vld [vmem:[#allocation18 + $0x1d0] sm:$0xff]
          %v3971 = vld [vmem:[#allocation18 + $0x1d8] sm:$0xff]
          %v3972 = vld [vmem:[#allocation18 + $0x1e0] sm:$0xff]
          %v3973 = vld [vmem:[#allocation18 + $0x1e8] sm:$0xff]
          %v3974 = vld [vmem:[#allocation18 + $0x1f0] sm:$0xff]
          %v3975 = vld [vmem:[#allocation18 + $0x1f8] sm:$0xff]
          %v3976 = vld [vmem:[#allocation18 + $0x200] sm:$0xff]
          %v3977 = vld [vmem:[#allocation18 + $0x208] sm:$0xff]
          %v3978 = vld [vmem:[#allocation18 + $0x210] sm:$0xff]
          %v3979 = vld [vmem:[#allocation18 + $0x218] sm:$0xff]
          %v3980 = vld [vmem:[#allocation18 + $0x220] sm:$0xff]
          %v3981 = vld [vmem:[#allocation18 + $0x228] sm:$0xff]
          %v3982 = vld [vmem:[#allocation18 + $0x230] sm:$0xff]
          %v3983 = vld [vmem:[#allocation18 + $0x238] sm:$0xff]
          %v3984 = vld [vmem:[#allocation18 + $0x240] sm:$0xff]
          %v3985 = vld [vmem:[#allocation18 + $0x248] sm:$0xff]
          %v3986 = vld [vmem:[#allocation18 + $0x250] sm:$0xff]
          %v3987 = vld [vmem:[#allocation18 + $0x258] sm:$0xff]
          %v3988 = vld [vmem:[#allocation18 + $0x260] sm:$0xff]
          %v3989 = vld [vmem:[#allocation18 + $0x268] sm:$0xff]
          %v3990 = vld [vmem:[#allocation18 + $0x270] sm:$0xff]
          %v3991 = vld [vmem:[#allocation18 + $0x278] sm:$0xff]
          %v3992 = vld [vmem:[#allocation18 + $0x280] sm:$0xff]
          %v3993 = vld [vmem:[#allocation18 + $0x288] sm:$0xff]
          %v3994 = vld [vmem:[#allocation18 + $0x290] sm:$0xff]
          %v3995 = vld [vmem:[#allocation18 + $0x298] sm:$0xff]
          %v3996 = vld [vmem:[#allocation18 + $0x2a0] sm:$0xff]
          %v3997 = vld [vmem:[#allocation18 + $0x2a8] sm:$0xff]
          %v3998 = vld [vmem:[#allocation18 + $0x2b0] sm:$0xff]
          %v3999 = vld [vmem:[#allocation18 + $0x2b8] sm:$0xff]
          %v4000 = vld [vmem:[#allocation18 + $0x2c0] sm:$0xff]
          %v4001 = vld [vmem:[#allocation18 + $0x2c8] sm:$0xff]
          %v4002 = vld [vmem:[#allocation18 + $0x2d0] sm:$0xff]
          %v4003 = vld [vmem:[#allocation18 + $0x2d8] sm:$0xff]
          %v4004 = vld [vmem:[#allocation18 + $0x2e0] sm:$0xff]
          %v4005 = vld [vmem:[#allocation18 + $0x2e8] sm:$0xff]
          %v4006 = vld [vmem:[#allocation18 + $0x2f0] sm:$0xff]
          %v4007 = vld [vmem:[#allocation18 + $0x2f8] sm:$0xff]
          %v4008 = vld [vmem:[#allocation18 + $0x300] sm:$0xff]
          %v4009 = vld [vmem:[#allocation18 + $0x308] sm:$0xff]
          %v4010 = vld [vmem:[#allocation18 + $0x310] sm:$0xff]
          %v4011 = vld [vmem:[#allocation18 + $0x318] sm:$0xff]
          %v4012 = vld [vmem:[#allocation18 + $0x320] sm:$0xff]
          %v4013 = vld [vmem:[#allocation18 + $0x328] sm:$0xff]
          %v4014 = vld [vmem:[#allocation18 + $0x330] sm:$0xff]
          %v4015 = vld [vmem:[#allocation18 + $0x338] sm:$0xff]
          %v4016 = vld [vmem:[#allocation18 + $0x340] sm:$0xff]
          %v4017 = vld [vmem:[#allocation18 + $0x348] sm:$0xff]
          %v4018 = vld [vmem:[#allocation18 + $0x350] sm:$0xff]
          %v4019 = vld [vmem:[#allocation18 + $0x358] sm:$0xff]
          %v4020 = vld [vmem:[#allocation18 + $0x360] sm:$0xff]
          %v4021 = vld [vmem:[#allocation18 + $0x368] sm:$0xff]
          %v4022 = vld [vmem:[#allocation18 + $0x370] sm:$0xff]
          %v4023 = vld [vmem:[#allocation18 + $0x378] sm:$0xff]
          %v4024 = vld [vmem:[#allocation18 + $0x380] sm:$0xff]
          %v4025 = vld [vmem:[#allocation18 + $0x388] sm:$0xff]
          %v4026 = vld [vmem:[#allocation18 + $0x390] sm:$0xff]
          %v4027 = vld [vmem:[#allocation18 + $0x398] sm:$0xff]
          %v4028 = vld [vmem:[#allocation18 + $0x3a0] sm:$0xff]
          %v4029 = vld [vmem:[#allocation18 + $0x3a8] sm:$0xff]
          %v4030 = vld [vmem:[#allocation18 + $0x3b0] sm:$0xff]
          %v4031 = vld [vmem:[#allocation18 + $0x3b8] sm:$0xff]
          %v4032 = vld [vmem:[#allocation18 + $0x3c0] sm:$0xff]
          %v4033 = vld [vmem:[#allocation18 + $0x3c8] sm:$0xff]
          %v4034 = vld [vmem:[#allocation18 + $0x3d0] sm:$0xff]
          %v4035 = vld [vmem:[#allocation18 + $0x3d8] sm:$0xff]
          %v4036 = vld [vmem:[#allocation18 + $0x3e0] sm:$0xff]
          %v4037 = vld [vmem:[#allocation18 + $0x3e8] sm:$0xff]
          %v4038 = vld [vmem:[#allocation18 + $0x3f0] sm:$0xff]
          %v4039 = vld [vmem:[#allocation18 + $0x3f8] sm:$0xff]
          %v4040 = vpack.c.bf16 %v3904, %v3904
          %v4041 = vpack.c.bf16 %v3905, %v3905
          %v4042 = vpack.c.bf16 %v3906, %v3906
          %v4043 = vpack.c.bf16 %v3907, %v3907
          %v4044 = vld [vmem:[#allocation20] sm:$0xff]
          %v4045 = vld [vmem:[#allocation20 + $0x8] sm:$0xff]
          %v4046 = vld [vmem:[#allocation20 + $0x10] sm:$0xff]
          %v4047 = vld [vmem:[#allocation20 + $0x18] sm:$0xff]
          %v4048 = vld [vmem:[#allocation20 + $0x20] sm:$0xff]
          %v4049 = vld [vmem:[#allocation20 + $0x28] sm:$0xff]
          %v4050 = vld [vmem:[#allocation20 + $0x30] sm:$0xff]
          %v4051 = vld [vmem:[#allocation20 + $0x38] sm:$0xff]
          %v4052 = vld [vmem:[#allocation20 + $0x40] sm:$0xff]
          %v4053 = vld [vmem:[#allocation20 + $0x48] sm:$0xff]
          %v4054 = vld [vmem:[#allocation20 + $0x50] sm:$0xff]
          %v4055 = vld [vmem:[#allocation20 + $0x58] sm:$0xff]
          %v4056 = vld [vmem:[#allocation20 + $0x60] sm:$0xff]
          %v4057 = vld [vmem:[#allocation20 + $0x68] sm:$0xff]
          %v4058 = vld [vmem:[#allocation20 + $0x70] sm:$0xff]
          %v4059 = vld [vmem:[#allocation20 + $0x78] sm:$0xff]
          %v4060 = vld [vmem:[#allocation20 + $0x80] sm:$0xff]
          %v4061 = vld [vmem:[#allocation20 + $0x88] sm:$0xff]
          %v4062 = vld [vmem:[#allocation20 + $0x90] sm:$0xff]
          %v4063 = vld [vmem:[#allocation20 + $0x98] sm:$0xff]
          %v4064 = vld [vmem:[#allocation20 + $0xa0] sm:$0xff]
          %v4065 = vld [vmem:[#allocation20 + $0xa8] sm:$0xff]
          %v4066 = vld [vmem:[#allocation20 + $0xb0] sm:$0xff]
          %v4067 = vld [vmem:[#allocation20 + $0xb8] sm:$0xff]
          %v4068 = vld [vmem:[#allocation20 + $0xc0] sm:$0xff]
          %v4069 = vld [vmem:[#allocation20 + $0xc8] sm:$0xff]
          %v4070 = vld [vmem:[#allocation20 + $0xd0] sm:$0xff]
          %v4071 = vld [vmem:[#allocation20 + $0xd8] sm:$0xff]
          %v4072 = vld [vmem:[#allocation20 + $0xe0] sm:$0xff]
          %v4073 = vld [vmem:[#allocation20 + $0xe8] sm:$0xff]
          %v4074 = vld [vmem:[#allocation20 + $0xf0] sm:$0xff]
          %v4075 = vld [vmem:[#allocation20 + $0xf8] sm:$0xff]
          %v4076 = vld [vmem:[#allocation20 + $0x100] sm:$0xff]
          %v4077 = vld [vmem:[#allocation20 + $0x108] sm:$0xff]
          %v4078 = vld [vmem:[#allocation20 + $0x110] sm:$0xff]
          %v4079 = vld [vmem:[#allocation20 + $0x118] sm:$0xff]
          %v4080 = vld [vmem:[#allocation20 + $0x120] sm:$0xff]
          %v4081 = vld [vmem:[#allocation20 + $0x128] sm:$0xff]
          %v4082 = vld [vmem:[#allocation20 + $0x130] sm:$0xff]
          %v4083 = vld [vmem:[#allocation20 + $0x138] sm:$0xff]
          %v4084 = vld [vmem:[#allocation20 + $0x140] sm:$0xff]
          %v4085 = vld [vmem:[#allocation20 + $0x148] sm:$0xff]
          %v4086 = vld [vmem:[#allocation20 + $0x150] sm:$0xff]
          %v4087 = vld [vmem:[#allocation20 + $0x158] sm:$0xff]
          %v4088 = vld [vmem:[#allocation20 + $0x160] sm:$0xff]
          %v4089 = vld [vmem:[#allocation20 + $0x168] sm:$0xff]
          %v4090 = vld [vmem:[#allocation20 + $0x170] sm:$0xff]
          %v4091 = vld [vmem:[#allocation20 + $0x178] sm:$0xff]
          %v4092 = vld [vmem:[#allocation20 + $0x180] sm:$0xff]
          %v4093 = vld [vmem:[#allocation20 + $0x188] sm:$0xff]
          %v4094 = vld [vmem:[#allocation20 + $0x190] sm:$0xff]
          %v4095 = vld [vmem:[#allocation20 + $0x198] sm:$0xff]
          %v4096 = vld [vmem:[#allocation20 + $0x1a0] sm:$0xff]
          %v4097 = vld [vmem:[#allocation20 + $0x1a8] sm:$0xff]
          %v4098 = vld [vmem:[#allocation20 + $0x1b0] sm:$0xff]
          %v4099 = vld [vmem:[#allocation20 + $0x1b8] sm:$0xff]
          %v4100 = vld [vmem:[#allocation20 + $0x1c0] sm:$0xff]
          %v4101 = vld [vmem:[#allocation20 + $0x1c8] sm:$0xff]
          %v4102 = vld [vmem:[#allocation20 + $0x1d0] sm:$0xff]
          %v4103 = vld [vmem:[#allocation20 + $0x1d8] sm:$0xff]
          %v4104 = vld [vmem:[#allocation20 + $0x1e0] sm:$0xff]
          %v4105 = vld [vmem:[#allocation20 + $0x1e8] sm:$0xff]
          %v4106 = vld [vmem:[#allocation20 + $0x1f0] sm:$0xff]
          %v4107 = vld [vmem:[#allocation20 + $0x1f8] sm:$0xff]
          %v4108 = vld [vmem:[#allocation20 + $0x200] sm:$0xff]
          %v4109 = vld [vmem:[#allocation20 + $0x208] sm:$0xff]
          %v4110 = vld [vmem:[#allocation20 + $0x210] sm:$0xff]
          %v4111 = vld [vmem:[#allocation20 + $0x218] sm:$0xff]
          %v4112 = vld [vmem:[#allocation20 + $0x220] sm:$0xff]
          %v4113 = vld [vmem:[#allocation20 + $0x228] sm:$0xff]
          %v4114 = vld [vmem:[#allocation20 + $0x230] sm:$0xff]
          %v4115 = vld [vmem:[#allocation20 + $0x238] sm:$0xff]
          %v4116 = vld [vmem:[#allocation20 + $0x240] sm:$0xff]
          %v4117 = vld [vmem:[#allocation20 + $0x248] sm:$0xff]
          %v4118 = vld [vmem:[#allocation20 + $0x250] sm:$0xff]
          %v4119 = vld [vmem:[#allocation20 + $0x258] sm:$0xff]
          %v4120 = vld [vmem:[#allocation20 + $0x260] sm:$0xff]
          %v4121 = vld [vmem:[#allocation20 + $0x268] sm:$0xff]
          %v4122 = vld [vmem:[#allocation20 + $0x270] sm:$0xff]
          %v4123 = vld [vmem:[#allocation20 + $0x278] sm:$0xff]
          %v4124 = vld [vmem:[#allocation20 + $0x280] sm:$0xff]
          %v4125 = vld [vmem:[#allocation20 + $0x288] sm:$0xff]
          %v4126 = vld [vmem:[#allocation20 + $0x290] sm:$0xff]
          %v4127 = vld [vmem:[#allocation20 + $0x298] sm:$0xff]
          %v4128 = vld [vmem:[#allocation20 + $0x2a0] sm:$0xff]
          %v4129 = vld [vmem:[#allocation20 + $0x2a8] sm:$0xff]
          %v4130 = vld [vmem:[#allocation20 + $0x2b0] sm:$0xff]
          %v4131 = vld [vmem:[#allocation20 + $0x2b8] sm:$0xff]
          %v4132 = vld [vmem:[#allocation20 + $0x2c0] sm:$0xff]
          %v4133 = vld [vmem:[#allocation20 + $0x2c8] sm:$0xff]
          %v4134 = vld [vmem:[#allocation20 + $0x2d0] sm:$0xff]
          %v4135 = vld [vmem:[#allocation20 + $0x2d8] sm:$0xff]
          %v4136 = vld [vmem:[#allocation20 + $0x2e0] sm:$0xff]
          %v4137 = vld [vmem:[#allocation20 + $0x2e8] sm:$0xff]
          %v4138 = vld [vmem:[#allocation20 + $0x2f0] sm:$0xff]
          %v4139 = vld [vmem:[#allocation20 + $0x2f8] sm:$0xff]
          %v4140 = vld [vmem:[#allocation20 + $0x300] sm:$0xff]
          %v4141 = vld [vmem:[#allocation20 + $0x308] sm:$0xff]
          %v4142 = vld [vmem:[#allocation20 + $0x310] sm:$0xff]
          %v4143 = vld [vmem:[#allocation20 + $0x318] sm:$0xff]
          %v4144 = vld [vmem:[#allocation20 + $0x320] sm:$0xff]
          %v4145 = vld [vmem:[#allocation20 + $0x328] sm:$0xff]
          %v4146 = vld [vmem:[#allocation20 + $0x330] sm:$0xff]
          %v4147 = vld [vmem:[#allocation20 + $0x338] sm:$0xff]
          %v4148 = vld [vmem:[#allocation20 + $0x340] sm:$0xff]
          %v4149 = vld [vmem:[#allocation20 + $0x348] sm:$0xff]
          %v4150 = vld [vmem:[#allocation20 + $0x350] sm:$0xff]
          %v4151 = vld [vmem:[#allocation20 + $0x358] sm:$0xff]
          %v4152 = vld [vmem:[#allocation20 + $0x360] sm:$0xff]
          %v4153 = vld [vmem:[#allocation20 + $0x368] sm:$0xff]
          %v4154 = vld [vmem:[#allocation20 + $0x370] sm:$0xff]
          %v4155 = vld [vmem:[#allocation20 + $0x378] sm:$0xff]
          %v4156 = vld [vmem:[#allocation20 + $0x380] sm:$0xff]
          %v4157 = vld [vmem:[#allocation20 + $0x388] sm:$0xff]
          %v4158 = vld [vmem:[#allocation20 + $0x390] sm:$0xff]
          %v4159 = vld [vmem:[#allocation20 + $0x398] sm:$0xff]
          %v4160 = vld [vmem:[#allocation20 + $0x3a0] sm:$0xff]
          %v4161 = vld [vmem:[#allocation20 + $0x3a8] sm:$0xff]
          %v4162 = vld [vmem:[#allocation20 + $0x3b0] sm:$0xff]
          %v4163 = vld [vmem:[#allocation20 + $0x3b8] sm:$0xff]
          %v4164 = vld [vmem:[#allocation20 + $0x3c0] sm:$0xff]
          %v4165 = vld [vmem:[#allocation20 + $0x3c8] sm:$0xff]
          %v4166 = vld [vmem:[#allocation20 + $0x3d0] sm:$0xff]
          %v4167 = vld [vmem:[#allocation20 + $0x3d8] sm:$0xff]
          %v4168 = vld [vmem:[#allocation20 + $0x3e0] sm:$0xff]
          %v4169 = vld [vmem:[#allocation20 + $0x3e8] sm:$0xff]
          %v4170 = vld [vmem:[#allocation20 + $0x3f0] sm:$0xff]
          %v4171 = vld [vmem:[#allocation20 + $0x3f8] sm:$0xff]
          %v4300 = vunpack.c.l.b16 %v4044
          %v4301 = vunpack.c.h.b16 %v4044
          %v4302 = vunpack.c.l.b16 %v4045
          %v4303 = vunpack.c.h.b16 %v4045
          %v4304 = vunpack.c.l.b16 %v4046
          %v4305 = vunpack.c.h.b16 %v4046
          %v4306 = vunpack.c.l.b16 %v4047
          %v4307 = vunpack.c.h.b16 %v4047
          %v4308 = vunpack.c.l.b16 %v4048
          %v4309 = vunpack.c.h.b16 %v4048
          %v4310 = vunpack.c.l.b16 %v4049
          %v4311 = vunpack.c.h.b16 %v4049
          %v4312 = vunpack.c.l.b16 %v4050
          %v4313 = vunpack.c.h.b16 %v4050
          %v4314 = vunpack.c.l.b16 %v4051
          %v4315 = vunpack.c.h.b16 %v4051
          %v4316 = vunpack.c.l.b16 %v4052
          %v4317 = vunpack.c.h.b16 %v4052
          %v4318 = vunpack.c.l.b16 %v4053
          %v4319 = vunpack.c.h.b16 %v4053
          %v4320 = vunpack.c.l.b16 %v4054
          %v4321 = vunpack.c.h.b16 %v4054
          %v4322 = vunpack.c.l.b16 %v4055
          %v4323 = vunpack.c.h.b16 %v4055
          %v4324 = vunpack.c.l.b16 %v4056
          %v4325 = vunpack.c.h.b16 %v4056
          %v4326 = vunpack.c.l.b16 %v4057
          %v4327 = vunpack.c.h.b16 %v4057
          %v4328 = vunpack.c.l.b16 %v4058
          %v4329 = vunpack.c.h.b16 %v4058
          %v4330 = vunpack.c.l.b16 %v4059
          %v4331 = vunpack.c.h.b16 %v4059
          %v4332 = vunpack.c.l.b16 %v4060
          %v4333 = vunpack.c.h.b16 %v4060
          %v4334 = vunpack.c.l.b16 %v4061
          %v4335 = vunpack.c.h.b16 %v4061
          %v4336 = vunpack.c.l.b16 %v4062
          %v4337 = vunpack.c.h.b16 %v4062
          %v4338 = vunpack.c.l.b16 %v4063
          %v4339 = vunpack.c.h.b16 %v4063
          %v4340 = vunpack.c.l.b16 %v4064
          %v4341 = vunpack.c.h.b16 %v4064
          %v4342 = vunpack.c.l.b16 %v4065
          %v4343 = vunpack.c.h.b16 %v4065
          %v4344 = vunpack.c.l.b16 %v4066
          %v4345 = vunpack.c.h.b16 %v4066
          %v4346 = vunpack.c.l.b16 %v4067
          %v4347 = vunpack.c.h.b16 %v4067
          %v4348 = vunpack.c.l.b16 %v4068
          %v4349 = vunpack.c.h.b16 %v4068
          %v4350 = vunpack.c.l.b16 %v4069
          %v4351 = vunpack.c.h.b16 %v4069
          %v4352 = vunpack.c.l.b16 %v4070
          %v4353 = vunpack.c.h.b16 %v4070
          %v4354 = vunpack.c.l.b16 %v4071
          %v4355 = vunpack.c.h.b16 %v4071
          %v4356 = vunpack.c.l.b16 %v4072
          %v4357 = vunpack.c.h.b16 %v4072
          %v4358 = vunpack.c.l.b16 %v4073
          %v4359 = vunpack.c.h.b16 %v4073
          %v4360 = vunpack.c.l.b16 %v4074
          %v4361 = vunpack.c.h.b16 %v4074
          %v4362 = vunpack.c.l.b16 %v4075
          %v4363 = vunpack.c.h.b16 %v4075
          %v4364 = vunpack.c.l.b16 %v4076
          %v4365 = vunpack.c.h.b16 %v4076
          %v4366 = vunpack.c.l.b16 %v4077
          %v4367 = vunpack.c.h.b16 %v4077
          %v4368 = vunpack.c.l.b16 %v4078
          %v4369 = vunpack.c.h.b16 %v4078
          %v4370 = vunpack.c.l.b16 %v4079
          %v4371 = vunpack.c.h.b16 %v4079
          %v4372 = vunpack.c.l.b16 %v4080
          %v4373 = vunpack.c.h.b16 %v4080
          %v4374 = vunpack.c.l.b16 %v4081
          %v4375 = vunpack.c.h.b16 %v4081
          %v4376 = vunpack.c.l.b16 %v4082
          %v4377 = vunpack.c.h.b16 %v4082
          %v4378 = vunpack.c.l.b16 %v4083
          %v4379 = vunpack.c.h.b16 %v4083
          %v4380 = vunpack.c.l.b16 %v4084
          %v4381 = vunpack.c.h.b16 %v4084
          %v4382 = vunpack.c.l.b16 %v4085
          %v4383 = vunpack.c.h.b16 %v4085
          %v4384 = vunpack.c.l.b16 %v4086
          %v4385 = vunpack.c.h.b16 %v4086
          %v4386 = vunpack.c.l.b16 %v4087
          %v4387 = vunpack.c.h.b16 %v4087
          %v4388 = vunpack.c.l.b16 %v4088
          %v4389 = vunpack.c.h.b16 %v4088
          %v4390 = vunpack.c.l.b16 %v4089
          %v4391 = vunpack.c.h.b16 %v4089
          %v4392 = vunpack.c.l.b16 %v4090
          %v4393 = vunpack.c.h.b16 %v4090
          %v4394 = vunpack.c.l.b16 %v4091
          %v4395 = vunpack.c.h.b16 %v4091
          %v4396 = vunpack.c.l.b16 %v4092
          %v4397 = vunpack.c.h.b16 %v4092
          %v4398 = vunpack.c.l.b16 %v4093
          %v4399 = vunpack.c.h.b16 %v4093
          %v4400 = vunpack.c.l.b16 %v4094
          %v4401 = vunpack.c.h.b16 %v4094
          %v4402 = vunpack.c.l.b16 %v4095
          %v4403 = vunpack.c.h.b16 %v4095
          %v4404 = vunpack.c.l.b16 %v4096
          %v4405 = vunpack.c.h.b16 %v4096
          %v4406 = vunpack.c.l.b16 %v4097
          %v4407 = vunpack.c.h.b16 %v4097
          %v4408 = vunpack.c.l.b16 %v4098
          %v4409 = vunpack.c.h.b16 %v4098
          %v4410 = vunpack.c.l.b16 %v4099
          %v4411 = vunpack.c.h.b16 %v4099
          %v4412 = vunpack.c.l.b16 %v4100
          %v4413 = vunpack.c.h.b16 %v4100
          %v4414 = vunpack.c.l.b16 %v4101
          %v4415 = vunpack.c.h.b16 %v4101
          %v4416 = vunpack.c.l.b16 %v4102
          %v4417 = vunpack.c.h.b16 %v4102
          %v4418 = vunpack.c.l.b16 %v4103
          %v4419 = vunpack.c.h.b16 %v4103
          %v4420 = vunpack.c.l.b16 %v4104
          %v4421 = vunpack.c.h.b16 %v4104
          %v4422 = vunpack.c.l.b16 %v4105
          %v4423 = vunpack.c.h.b16 %v4105
          %v4424 = vunpack.c.l.b16 %v4106
          %v4425 = vunpack.c.h.b16 %v4106
          %v4426 = vunpack.c.l.b16 %v4107
          %v4427 = vunpack.c.h.b16 %v4107
          %v4428 = vunpack.c.l.b16 %v4108
          %v4429 = vunpack.c.h.b16 %v4108
          %v4430 = vunpack.c.l.b16 %v4109
          %v4431 = vunpack.c.h.b16 %v4109
          %v4432 = vunpack.c.l.b16 %v4110
          %v4433 = vunpack.c.h.b16 %v4110
          %v4434 = vunpack.c.l.b16 %v4111
          %v4435 = vunpack.c.h.b16 %v4111
          %v4436 = vunpack.c.l.b16 %v4112
          %v4437 = vunpack.c.h.b16 %v4112
          %v4438 = vunpack.c.l.b16 %v4113
          %v4439 = vunpack.c.h.b16 %v4113
          %v4440 = vunpack.c.l.b16 %v4114
          %v4441 = vunpack.c.h.b16 %v4114
          %v4442 = vunpack.c.l.b16 %v4115
          %v4443 = vunpack.c.h.b16 %v4115
          %v4444 = vunpack.c.l.b16 %v4116
          %v4445 = vunpack.c.h.b16 %v4116
          %v4446 = vunpack.c.l.b16 %v4117
          %v4447 = vunpack.c.h.b16 %v4117
          %v4448 = vunpack.c.l.b16 %v4118
          %v4449 = vunpack.c.h.b16 %v4118
          %v4450 = vunpack.c.l.b16 %v4119
          %v4451 = vunpack.c.h.b16 %v4119
          %v4452 = vunpack.c.l.b16 %v4120
          %v4453 = vunpack.c.h.b16 %v4120
          %v4454 = vunpack.c.l.b16 %v4121
          %v4455 = vunpack.c.h.b16 %v4121
          %v4456 = vunpack.c.l.b16 %v4122
          %v4457 = vunpack.c.h.b16 %v4122
          %v4458 = vunpack.c.l.b16 %v4123
          %v4459 = vunpack.c.h.b16 %v4123
          %v4460 = vunpack.c.l.b16 %v4124
          %v4461 = vunpack.c.h.b16 %v4124
          %v4462 = vunpack.c.l.b16 %v4125
          %v4463 = vunpack.c.h.b16 %v4125
          %v4464 = vunpack.c.l.b16 %v4126
          %v4465 = vunpack.c.h.b16 %v4126
          %v4466 = vunpack.c.l.b16 %v4127
          %v4467 = vunpack.c.h.b16 %v4127
          %v4468 = vunpack.c.l.b16 %v4128
          %v4469 = vunpack.c.h.b16 %v4128
          %v4470 = vunpack.c.l.b16 %v4129
          %v4471 = vunpack.c.h.b16 %v4129
          %v4472 = vunpack.c.l.b16 %v4130
          %v4473 = vunpack.c.h.b16 %v4130
          %v4474 = vunpack.c.l.b16 %v4131
          %v4475 = vunpack.c.h.b16 %v4131
          %v4476 = vunpack.c.l.b16 %v4132
          %v4477 = vunpack.c.h.b16 %v4132
          %v4478 = vunpack.c.l.b16 %v4133
          %v4479 = vunpack.c.h.b16 %v4133
          %v4480 = vunpack.c.l.b16 %v4134
          %v4481 = vunpack.c.h.b16 %v4134
          %v4482 = vunpack.c.l.b16 %v4135
          %v4483 = vunpack.c.h.b16 %v4135
          %v4484 = vunpack.c.l.b16 %v4136
          %v4485 = vunpack.c.h.b16 %v4136
          %v4486 = vunpack.c.l.b16 %v4137
          %v4487 = vunpack.c.h.b16 %v4137
          %v4488 = vunpack.c.l.b16 %v4138
          %v4489 = vunpack.c.h.b16 %v4138
          %v4490 = vunpack.c.l.b16 %v4139
          %v4491 = vunpack.c.h.b16 %v4139
          %v4492 = vunpack.c.l.b16 %v4140
          %v4493 = vunpack.c.h.b16 %v4140
          %v4494 = vunpack.c.l.b16 %v4141
          %v4495 = vunpack.c.h.b16 %v4141
          %v4496 = vunpack.c.l.b16 %v4142
          %v4497 = vunpack.c.h.b16 %v4142
          %v4498 = vunpack.c.l.b16 %v4143
          %v4499 = vunpack.c.h.b16 %v4143
          %v4500 = vunpack.c.l.b16 %v4144
          %v4501 = vunpack.c.h.b16 %v4144
          %v4502 = vunpack.c.l.b16 %v4145
          %v4503 = vunpack.c.h.b16 %v4145
          %v4504 = vunpack.c.l.b16 %v4146
          %v4505 = vunpack.c.h.b16 %v4146
          %v4506 = vunpack.c.l.b16 %v4147
          %v4507 = vunpack.c.h.b16 %v4147
          %v4508 = vunpack.c.l.b16 %v4148
          %v4509 = vunpack.c.h.b16 %v4148
          %v4510 = vunpack.c.l.b16 %v4149
          %v4511 = vunpack.c.h.b16 %v4149
          %v4512 = vunpack.c.l.b16 %v4150
          %v4513 = vunpack.c.h.b16 %v4150
          %v4514 = vunpack.c.l.b16 %v4151
          %v4515 = vunpack.c.h.b16 %v4151
          %v4516 = vunpack.c.l.b16 %v4152
          %v4517 = vunpack.c.h.b16 %v4152
          %v4518 = vunpack.c.l.b16 %v4153
          %v4519 = vunpack.c.h.b16 %v4153
          %v4520 = vunpack.c.l.b16 %v4154
          %v4521 = vunpack.c.h.b16 %v4154
          %v4522 = vunpack.c.l.b16 %v4155
          %v4523 = vunpack.c.h.b16 %v4155
          %v4524 = vunpack.c.l.b16 %v4156
          %v4525 = vunpack.c.h.b16 %v4156
          %v4526 = vunpack.c.l.b16 %v4157
          %v4527 = vunpack.c.h.b16 %v4157
          %v4528 = vunpack.c.l.b16 %v4158
          %v4529 = vunpack.c.h.b16 %v4158
          %v4530 = vunpack.c.l.b16 %v4159
          %v4531 = vunpack.c.h.b16 %v4159
          %v4532 = vunpack.c.l.b16 %v4160
          %v4533 = vunpack.c.h.b16 %v4160
          %v4534 = vunpack.c.l.b16 %v4161
          %v4535 = vunpack.c.h.b16 %v4161
          %v4536 = vunpack.c.l.b16 %v4162
          %v4537 = vunpack.c.h.b16 %v4162
          %v4538 = vunpack.c.l.b16 %v4163
          %v4539 = vunpack.c.h.b16 %v4163
          %v4540 = vunpack.c.l.b16 %v4164
          %v4541 = vunpack.c.h.b16 %v4164
          %v4542 = vunpack.c.l.b16 %v4165
          %v4543 = vunpack.c.h.b16 %v4165
          %v4544 = vunpack.c.l.b16 %v4166
          %v4545 = vunpack.c.h.b16 %v4166
          %v4546 = vunpack.c.l.b16 %v4167
          %v4547 = vunpack.c.h.b16 %v4167
          %v4548 = vunpack.c.l.b16 %v4168
          %v4549 = vunpack.c.h.b16 %v4168
          %v4550 = vunpack.c.l.b16 %v4169
          %v4551 = vunpack.c.h.b16 %v4169
          %v4552 = vunpack.c.l.b16 %v4170
          %v4553 = vunpack.c.h.b16 %v4170
          %v4554 = vunpack.c.l.b16 %v4171
          %v4555 = vunpack.c.h.b16 %v4171
          %v4556 = vpack.c.b16 %v4304, %v4300
          %v4557 = vpack.c.b16 %v4305, %v4301
          %v4558 = vpack.c.b16 %v4306, %v4302
          %v4559 = vpack.c.b16 %v4307, %v4303
          %v4560 = vpack.c.b16 %v4312, %v4308
          %v4561 = vpack.c.b16 %v4313, %v4309
          %v4562 = vpack.c.b16 %v4314, %v4310
          %v4563 = vpack.c.b16 %v4315, %v4311
          %v4564 = vpack.c.b16 %v4320, %v4316
          %v4565 = vpack.c.b16 %v4321, %v4317
          %v4566 = vpack.c.b16 %v4322, %v4318
          %v4567 = vpack.c.b16 %v4323, %v4319
          %v4568 = vpack.c.b16 %v4328, %v4324
          %v4569 = vpack.c.b16 %v4329, %v4325
          %v4570 = vpack.c.b16 %v4330, %v4326
          %v4571 = vpack.c.b16 %v4331, %v4327
          %v4572 = vpack.c.b16 %v4336, %v4332
          %v4573 = vpack.c.b16 %v4337, %v4333
          %v4574 = vpack.c.b16 %v4338, %v4334
          %v4575 = vpack.c.b16 %v4339, %v4335
          %v4576 = vpack.c.b16 %v4344, %v4340
          %v4577 = vpack.c.b16 %v4345, %v4341
          %v4578 = vpack.c.b16 %v4346, %v4342
          %v4579 = vpack.c.b16 %v4347, %v4343
          %v4580 = vpack.c.b16 %v4352, %v4348
          %v4581 = vpack.c.b16 %v4353, %v4349
          %v4582 = vpack.c.b16 %v4354, %v4350
          %v4583 = vpack.c.b16 %v4355, %v4351
          %v4584 = vpack.c.b16 %v4360, %v4356
          %v4585 = vpack.c.b16 %v4361, %v4357
          %v4586 = vpack.c.b16 %v4362, %v4358
          %v4587 = vpack.c.b16 %v4363, %v4359
          %v4588 = vpack.c.b16 %v4368, %v4364
          %v4589 = vpack.c.b16 %v4369, %v4365
          %v4590 = vpack.c.b16 %v4370, %v4366
          %v4591 = vpack.c.b16 %v4371, %v4367
          %v4592 = vpack.c.b16 %v4376, %v4372
          %v4593 = vpack.c.b16 %v4377, %v4373
          %v4594 = vpack.c.b16 %v4378, %v4374
          %v4595 = vpack.c.b16 %v4379, %v4375
          %v4596 = vpack.c.b16 %v4384, %v4380
          %v4597 = vpack.c.b16 %v4385, %v4381
          %v4598 = vpack.c.b16 %v4386, %v4382
          %v4599 = vpack.c.b16 %v4387, %v4383
          %v4600 = vpack.c.b16 %v4392, %v4388
          %v4601 = vpack.c.b16 %v4393, %v4389
          %v4602 = vpack.c.b16 %v4394, %v4390
          %v4603 = vpack.c.b16 %v4395, %v4391
          %v4604 = vpack.c.b16 %v4400, %v4396
          %v4605 = vpack.c.b16 %v4401, %v4397
          %v4606 = vpack.c.b16 %v4402, %v4398
          %v4607 = vpack.c.b16 %v4403, %v4399
          %v4608 = vpack.c.b16 %v4408, %v4404
          %v4609 = vpack.c.b16 %v4409, %v4405
          %v4610 = vpack.c.b16 %v4410, %v4406
          %v4611 = vpack.c.b16 %v4411, %v4407
          %v4612 = vpack.c.b16 %v4416, %v4412
          %v4613 = vpack.c.b16 %v4417, %v4413
          %v4614 = vpack.c.b16 %v4418, %v4414
          %v4615 = vpack.c.b16 %v4419, %v4415
          %v4616 = vpack.c.b16 %v4424, %v4420
          %v4617 = vpack.c.b16 %v4425, %v4421
          %v4618 = vpack.c.b16 %v4426, %v4422
          %v4619 = vpack.c.b16 %v4427, %v4423
          %v4620 = vpack.c.b16 %v4432, %v4428
          %v4621 = vpack.c.b16 %v4433, %v4429
          %v4622 = vpack.c.b16 %v4434, %v4430
          %v4623 = vpack.c.b16 %v4435, %v4431
          %v4624 = vpack.c.b16 %v4440, %v4436
          %v4625 = vpack.c.b16 %v4441, %v4437
          %v4626 = vpack.c.b16 %v4442, %v4438
          %v4627 = vpack.c.b16 %v4443, %v4439
          %v4628 = vpack.c.b16 %v4448, %v4444
          %v4629 = vpack.c.b16 %v4449, %v4445
          %v4630 = vpack.c.b16 %v4450, %v4446
          %v4631 = vpack.c.b16 %v4451, %v4447
          %v4632 = vpack.c.b16 %v4456, %v4452
          %v4633 = vpack.c.b16 %v4457, %v4453
          %v4634 = vpack.c.b16 %v4458, %v4454
          %v4635 = vpack.c.b16 %v4459, %v4455
          %v4636 = vpack.c.b16 %v4464, %v4460
          %v4637 = vpack.c.b16 %v4465, %v4461
          %v4638 = vpack.c.b16 %v4466, %v4462
          %v4639 = vpack.c.b16 %v4467, %v4463
          %v4640 = vpack.c.b16 %v4472, %v4468
          %v4641 = vpack.c.b16 %v4473, %v4469
          %v4642 = vpack.c.b16 %v4474, %v4470
          %v4643 = vpack.c.b16 %v4475, %v4471
          %v4644 = vpack.c.b16 %v4480, %v4476
          %v4645 = vpack.c.b16 %v4481, %v4477
          %v4646 = vpack.c.b16 %v4482, %v4478
          %v4647 = vpack.c.b16 %v4483, %v4479
          %v4648 = vpack.c.b16 %v4488, %v4484
          %v4649 = vpack.c.b16 %v4489, %v4485
          %v4650 = vpack.c.b16 %v4490, %v4486
          %v4651 = vpack.c.b16 %v4491, %v4487
          %v4652 = vpack.c.b16 %v4496, %v4492
          %v4653 = vpack.c.b16 %v4497, %v4493
          %v4654 = vpack.c.b16 %v4498, %v4494
          %v4655 = vpack.c.b16 %v4499, %v4495
          %v4656 = vpack.c.b16 %v4504, %v4500
          %v4657 = vpack.c.b16 %v4505, %v4501
          %v4658 = vpack.c.b16 %v4506, %v4502
          %v4659 = vpack.c.b16 %v4507, %v4503
          %v4660 = vpack.c.b16 %v4512, %v4508
          %v4661 = vpack.c.b16 %v4513, %v4509
          %v4662 = vpack.c.b16 %v4514, %v4510
          %v4663 = vpack.c.b16 %v4515, %v4511
          %v4664 = vpack.c.b16 %v4520, %v4516
          %v4665 = vpack.c.b16 %v4521, %v4517
          %v4666 = vpack.c.b16 %v4522, %v4518
          %v4667 = vpack.c.b16 %v4523, %v4519
          %v4668 = vpack.c.b16 %v4528, %v4524
          %v4669 = vpack.c.b16 %v4529, %v4525
          %v4670 = vpack.c.b16 %v4530, %v4526
          %v4671 = vpack.c.b16 %v4531, %v4527
          %v4672 = vpack.c.b16 %v4536, %v4532
          %v4673 = vpack.c.b16 %v4537, %v4533
          %v4674 = vpack.c.b16 %v4538, %v4534
          %v4675 = vpack.c.b16 %v4539, %v4535
          %v4676 = vpack.c.b16 %v4544, %v4540
          %v4677 = vpack.c.b16 %v4545, %v4541
          %v4678 = vpack.c.b16 %v4546, %v4542
          %v4679 = vpack.c.b16 %v4547, %v4543
          %v4680 = vpack.c.b16 %v4552, %v4548
          %v4681 = vpack.c.b16 %v4553, %v4549
          %v4682 = vpack.c.b16 %v4554, %v4550
          %v4683 = vpack.c.b16 %v4555, %v4551
          %4812 = vmatpush.bf16.msra.mxu0 %v4584
          %4813 = vmatpush.bf16.msra.mxu0 %v4580
          %4814 = vmatpush.bf16.msra.mxu0 %v4576
          %4815 = vmatpush.bf16.msra.mxu0 %v4572
          %4816 = vmatpush.bf16.msra.mxu0 %v4568
          %4817 = vmatpush.bf16.msra.mxu0 %v4564
          %4818 = vmatpush.bf16.msra.mxu0 %v4560
          %4819 = vmatpush.bf16.msra.mxu0 %v4556
          %4820 = vmatmul.bf16.gmra.mxu0 %v4040
          %v4821 = vpop.f32.mrf.mxu0
          %v4822 = vadd.f32 0.0, %v4821
          %v4823 = vpop.f32.mrf.mxu0
          %4824 = vdwg.mxu0
          %4825 = vmatpush.bf16.msra.mxu0 %v4616
          %4826 = vmatpush.bf16.msra.mxu0 %v4612
          %4827 = vmatpush.bf16.msra.mxu0 %v4608
          %4828 = vmatpush.bf16.msra.mxu0 %v4604
          %4829 = vmatpush.bf16.msra.mxu0 %v4600
          %4830 = vmatpush.bf16.msra.mxu0 %v4596
          %4831 = vmatpush.bf16.msra.mxu0 %v4592
          %4832 = vmatpush.bf16.msra.mxu0 %v4588
          %4833 = vmatmul.bf16.gmra.mxu0 %v4041
          %v4834 = vpop.f32.mrf.mxu0
          %v4835 = vadd.f32 %v4822, %v4834
          %v4836 = vpop.f32.mrf.mxu0
          %4837 = vdwg.mxu0
          %4838 = vmatpush.bf16.msra.mxu0 %v4648
          %4839 = vmatpush.bf16.msra.mxu0 %v4644
          %4840 = vmatpush.bf16.msra.mxu0 %v4640
          %4841 = vmatpush.bf16.msra.mxu0 %v4636
          %4842 = vmatpush.bf16.msra.mxu0 %v4632
          %4843 = vmatpush.bf16.msra.mxu0 %v4628
          %4844 = vmatpush.bf16.msra.mxu0 %v4624
          %4845 = vmatpush.bf16.msra.mxu0 %v4620
          %4846 = vmatmul.bf16.gmra.mxu0 %v4042
          %v4847 = vpop.f32.mrf.mxu0
          %v4848 = vadd.f32 %v4835, %v4847
          %v4849 = vpop.f32.mrf.mxu0
          %4850 = vdwg.mxu0
          %4851 = vmatpush.bf16.msra.mxu0 %v4680
          %4852 = vmatpush.bf16.msra.mxu0 %v4676
          %4853 = vmatpush.bf16.msra.mxu0 %v4672
          %4854 = vmatpush.bf16.msra.mxu0 %v4668
          %4855 = vmatpush.bf16.msra.mxu0 %v4664
          %4856 = vmatpush.bf16.msra.mxu0 %v4660
          %4857 = vmatpush.bf16.msra.mxu0 %v4656
          %4858 = vmatpush.bf16.msra.mxu0 %v4652
          %4859 = vmatmul.bf16.gmra.mxu0 %v4043
          %v4860 = vpop.f32.mrf.mxu0
          %v4861 = vadd.f32 %v4848, %v4860
          %v4862 = vpop.f32.mrf.mxu0
          %4863 = vdwg.mxu0
          %4864 = vmatpush.bf16.msra.mxu0 %v4585
          %4865 = vmatpush.bf16.msra.mxu0 %v4581
          %4866 = vmatpush.bf16.msra.mxu0 %v4577
          %4867 = vmatpush.bf16.msra.mxu0 %v4573
          %4868 = vmatpush.bf16.msra.mxu0 %v4569
          %4869 = vmatpush.bf16.msra.mxu0 %v4565
          %4870 = vmatpush.bf16.msra.mxu0 %v4561
          %4871 = vmatpush.bf16.msra.mxu0 %v4557
          %4872 = vmatmul.bf16.gmra.mxu0 %v4040
          %v4873 = vpop.f32.mrf.mxu0
          %v4874 = vadd.f32 0.0, %v4873
          %v4875 = vpop.f32.mrf.mxu0
          %4876 = vdwg.mxu0
          %4877 = vmatpush.bf16.msra.mxu0 %v4617
          %4878 = vmatpush.bf16.msra.mxu0 %v4613
          %4879 = vmatpush.bf16.msra.mxu0 %v4609
          %4880 = vmatpush.bf16.msra.mxu0 %v4605
          %4881 = vmatpush.bf16.msra.mxu0 %v4601
          %4882 = vmatpush.bf16.msra.mxu0 %v4597
          %4883 = vmatpush.bf16.msra.mxu0 %v4593
          %4884 = vmatpush.bf16.msra.mxu0 %v4589
          %4885 = vmatmul.bf16.gmra.mxu0 %v4041
          %v4886 = vpop.f32.mrf.mxu0
          %v4887 = vadd.f32 %v4874, %v4886
          %v4888 = vpop.f32.mrf.mxu0
          %4889 = vdwg.mxu0
          %4890 = vmatpush.bf16.msra.mxu0 %v4649
          %4891 = vmatpush.bf16.msra.mxu0 %v4645
          %4892 = vmatpush.bf16.msra.mxu0 %v4641
          %4893 = vmatpush.bf16.msra.mxu0 %v4637
          %4894 = vmatpush.bf16.msra.mxu0 %v4633
          %4895 = vmatpush.bf16.msra.mxu0 %v4629
          %4896 = vmatpush.bf16.msra.mxu0 %v4625
          %4897 = vmatpush.bf16.msra.mxu0 %v4621
          %4898 = vmatmul.bf16.gmra.mxu0 %v4042
          %v4899 = vpop.f32.mrf.mxu0
          %v4900 = vadd.f32 %v4887, %v4899
          %v4901 = vpop.f32.mrf.mxu0
          %4902 = vdwg.mxu0
          %4903 = vmatpush.bf16.msra.mxu0 %v4681
          %4904 = vmatpush.bf16.msra.mxu0 %v4677
          %4905 = vmatpush.bf16.msra.mxu0 %v4673
          %4906 = vmatpush.bf16.msra.mxu0 %v4669
          %4907 = vmatpush.bf16.msra.mxu0 %v4665
          %4908 = vmatpush.bf16.msra.mxu0 %v4661
          %4909 = vmatpush.bf16.msra.mxu0 %v4657
          %4910 = vmatpush.bf16.msra.mxu0 %v4653
          %4911 = vmatmul.bf16.gmra.mxu0 %v4043
          %v4912 = vpop.f32.mrf.mxu0
          %v4913 = vadd.f32 %v4900, %v4912
          %v4914 = vpop.f32.mrf.mxu0
          %4915 = vdwg.mxu0
          %4916 = vmatpush.bf16.msra.mxu0 %v4586
          %4917 = vmatpush.bf16.msra.mxu0 %v4582
          %4918 = vmatpush.bf16.msra.mxu0 %v4578
          %4919 = vmatpush.bf16.msra.mxu0 %v4574
          %4920 = vmatpush.bf16.msra.mxu0 %v4570
          %4921 = vmatpush.bf16.msra.mxu0 %v4566
          %4922 = vmatpush.bf16.msra.mxu0 %v4562
          %4923 = vmatpush.bf16.msra.mxu0 %v4558
          %4924 = vmatmul.bf16.gmra.mxu0 %v4040
          %v4925 = vpop.f32.mrf.mxu0
          %v4926 = vadd.f32 0.0, %v4925
          %v4927 = vpop.f32.mrf.mxu0
          %4928 = vdwg.mxu0
          %4929 = vmatpush.bf16.msra.mxu0 %v4618
          %4930 = vmatpush.bf16.msra.mxu0 %v4614
          %4931 = vmatpush.bf16.msra.mxu0 %v4610
          %4932 = vmatpush.bf16.msra.mxu0 %v4606
          %4933 = vmatpush.bf16.msra.mxu0 %v4602
          %4934 = vmatpush.bf16.msra.mxu0 %v4598
          %4935 = vmatpush.bf16.msra.mxu0 %v4594
          %4936 = vmatpush.bf16.msra.mxu0 %v4590
          %4937 = vmatmul.bf16.gmra.mxu0 %v4041
          %v4938 = vpop.f32.mrf.mxu0
          %v4939 = vadd.f32 %v4926, %v4938
          %v4940 = vpop.f32.mrf.mxu0
          %4941 = vdwg.mxu0
          %4942 = vmatpush.bf16.msra.mxu0 %v4650
          %4943 = vmatpush.bf16.msra.mxu0 %v4646
          %4944 = vmatpush.bf16.msra.mxu0 %v4642
          %4945 = vmatpush.bf16.msra.mxu0 %v4638
          %4946 = vmatpush.bf16.msra.mxu0 %v4634
          %4947 = vmatpush.bf16.msra.mxu0 %v4630
          %4948 = vmatpush.bf16.msra.mxu0 %v4626
          %4949 = vmatpush.bf16.msra.mxu0 %v4622
          %4950 = vmatmul.bf16.gmra.mxu0 %v4042
          %v4951 = vpop.f32.mrf.mxu0
          %v4952 = vadd.f32 %v4939, %v4951
          %v4953 = vpop.f32.mrf.mxu0
          %4954 = vdwg.mxu0
          %4955 = vmatpush.bf16.msra.mxu0 %v4682
          %4956 = vmatpush.bf16.msra.mxu0 %v4678
          %4957 = vmatpush.bf16.msra.mxu0 %v4674
          %4958 = vmatpush.bf16.msra.mxu0 %v4670
          %4959 = vmatpush.bf16.msra.mxu0 %v4666
          %4960 = vmatpush.bf16.msra.mxu0 %v4662
          %4961 = vmatpush.bf16.msra.mxu0 %v4658
          %4962 = vmatpush.bf16.msra.mxu0 %v4654
          %4963 = vmatmul.bf16.gmra.mxu0 %v4043
          %v4964 = vpop.f32.mrf.mxu0
          %v4965 = vadd.f32 %v4952, %v4964
          %v4966 = vpop.f32.mrf.mxu0
          %4967 = vdwg.mxu0
          %4968 = vmatpush.bf16.msra.mxu0 %v4587
          %4969 = vmatpush.bf16.msra.mxu0 %v4583
          %4970 = vmatpush.bf16.msra.mxu0 %v4579
          %4971 = vmatpush.bf16.msra.mxu0 %v4575
          %4972 = vmatpush.bf16.msra.mxu0 %v4571
          %4973 = vmatpush.bf16.msra.mxu0 %v4567
          %4974 = vmatpush.bf16.msra.mxu0 %v4563
          %4975 = vmatpush.bf16.msra.mxu0 %v4559
          %4976 = vmatmul.bf16.gmra.mxu0 %v4040
          %v4977 = vpop.f32.mrf.mxu0
          %v4978 = vadd.f32 0.0, %v4977
          %v4979 = vpop.f32.mrf.mxu0
          %4980 = vdwg.mxu0
          %4981 = vmatpush.bf16.msra.mxu0 %v4619
          %4982 = vmatpush.bf16.msra.mxu0 %v4615
          %4983 = vmatpush.bf16.msra.mxu0 %v4611
          %4984 = vmatpush.bf16.msra.mxu0 %v4607
          %4985 = vmatpush.bf16.msra.mxu0 %v4603
          %4986 = vmatpush.bf16.msra.mxu0 %v4599
          %4987 = vmatpush.bf16.msra.mxu0 %v4595
          %4988 = vmatpush.bf16.msra.mxu0 %v4591
          %4989 = vmatmul.bf16.gmra.mxu0 %v4041
          %v4990 = vpop.f32.mrf.mxu0
          %v4991 = vadd.f32 %v4978, %v4990
          %v4992 = vpop.f32.mrf.mxu0
          %4993 = vdwg.mxu0
          %4994 = vmatpush.bf16.msra.mxu0 %v4651
          %4995 = vmatpush.bf16.msra.mxu0 %v4647
          %4996 = vmatpush.bf16.msra.mxu0 %v4643
          %4997 = vmatpush.bf16.msra.mxu0 %v4639
          %4998 = vmatpush.bf16.msra.mxu0 %v4635
          %4999 = vmatpush.bf16.msra.mxu0 %v4631
          %5000 = vmatpush.bf16.msra.mxu0 %v4627
          %5001 = vmatpush.bf16.msra.mxu0 %v4623
          %5002 = vmatmul.bf16.gmra.mxu0 %v4042
          %v5003 = vpop.f32.mrf.mxu0
          %v5004 = vadd.f32 %v4991, %v5003
          %v5005 = vpop.f32.mrf.mxu0
          %5006 = vdwg.mxu0
          %5007 = vmatpush.bf16.msra.mxu0 %v4683
          %5008 = vmatpush.bf16.msra.mxu0 %v4679
          %5009 = vmatpush.bf16.msra.mxu0 %v4675
          %5010 = vmatpush.bf16.msra.mxu0 %v4671
          %5011 = vmatpush.bf16.msra.mxu0 %v4667
          %5012 = vmatpush.bf16.msra.mxu0 %v4663
          %5013 = vmatpush.bf16.msra.mxu0 %v4659
          %5014 = vmatpush.bf16.msra.mxu0 %v4655
          %5015 = vmatmul.bf16.gmra.mxu0 %v4043
          %v5016 = vpop.f32.mrf.mxu0
          %v5017 = vadd.f32 %v5004, %v5016
          %v5018 = vpop.f32.mrf.mxu0
          %5019 = vdwg.mxu0
          %v5148 = vunpack.c.l.b16 %v3912
          %v5149 = vunpack.c.h.b16 %v3912
          %v5150 = vunpack.c.l.b16 %v3913
          %v5151 = vunpack.c.h.b16 %v3913
          %v5152 = vunpack.c.l.b16 %v3914
          %v5153 = vunpack.c.h.b16 %v3914
          %v5154 = vunpack.c.l.b16 %v3915
          %v5155 = vunpack.c.h.b16 %v3915
          %v5156 = vunpack.c.l.b16 %v3916
          %v5157 = vunpack.c.h.b16 %v3916
          %v5158 = vunpack.c.l.b16 %v3917
          %v5159 = vunpack.c.h.b16 %v3917
          %v5160 = vunpack.c.l.b16 %v3918
          %v5161 = vunpack.c.h.b16 %v3918
          %v5162 = vunpack.c.l.b16 %v3919
          %v5163 = vunpack.c.h.b16 %v3919
          %v5164 = vunpack.c.l.b16 %v3920
          %v5165 = vunpack.c.h.b16 %v3920
          %v5166 = vunpack.c.l.b16 %v3921
          %v5167 = vunpack.c.h.b16 %v3921
          %v5168 = vunpack.c.l.b16 %v3922
          %v5169 = vunpack.c.h.b16 %v3922
          %v5170 = vunpack.c.l.b16 %v3923
          %v5171 = vunpack.c.h.b16 %v3923
          %v5172 = vunpack.c.l.b16 %v3924
          %v5173 = vunpack.c.h.b16 %v3924
          %v5174 = vunpack.c.l.b16 %v3925
          %v5175 = vunpack.c.h.b16 %v3925
          %v5176 = vunpack.c.l.b16 %v3926
          %v5177 = vunpack.c.h.b16 %v3926
          %v5178 = vunpack.c.l.b16 %v3927
          %v5179 = vunpack.c.h.b16 %v3927
          %v5180 = vunpack.c.l.b16 %v3928
          %v5181 = vunpack.c.h.b16 %v3928
          %v5182 = vunpack.c.l.b16 %v3929
          %v5183 = vunpack.c.h.b16 %v3929
          %v5184 = vunpack.c.l.b16 %v3930
          %v5185 = vunpack.c.h.b16 %v3930
          %v5186 = vunpack.c.l.b16 %v3931
          %v5187 = vunpack.c.h.b16 %v3931
          %v5188 = vunpack.c.l.b16 %v3932
          %v5189 = vunpack.c.h.b16 %v3932
          %v5190 = vunpack.c.l.b16 %v3933
          %v5191 = vunpack.c.h.b16 %v3933
          %v5192 = vunpack.c.l.b16 %v3934
          %v5193 = vunpack.c.h.b16 %v3934
          %v5194 = vunpack.c.l.b16 %v3935
          %v5195 = vunpack.c.h.b16 %v3935
          %v5196 = vunpack.c.l.b16 %v3936
          %v5197 = vunpack.c.h.b16 %v3936
          %v5198 = vunpack.c.l.b16 %v3937
          %v5199 = vunpack.c.h.b16 %v3937
          %v5200 = vunpack.c.l.b16 %v3938
          %v5201 = vunpack.c.h.b16 %v3938
          %v5202 = vunpack.c.l.b16 %v3939
          %v5203 = vunpack.c.h.b16 %v3939
          %v5204 = vunpack.c.l.b16 %v3940
          %v5205 = vunpack.c.h.b16 %v3940
          %v5206 = vunpack.c.l.b16 %v3941
          %v5207 = vunpack.c.h.b16 %v3941
          %v5208 = vunpack.c.l.b16 %v3942
          %v5209 = vunpack.c.h.b16 %v3942
          %v5210 = vunpack.c.l.b16 %v3943
          %v5211 = vunpack.c.h.b16 %v3943
          %v5212 = vunpack.c.l.b16 %v3944
          %v5213 = vunpack.c.h.b16 %v3944
          %v5214 = vunpack.c.l.b16 %v3945
          %v5215 = vunpack.c.h.b16 %v3945
          %v5216 = vunpack.c.l.b16 %v3946
          %v5217 = vunpack.c.h.b16 %v3946
          %v5218 = vunpack.c.l.b16 %v3947
          %v5219 = vunpack.c.h.b16 %v3947
          %v5220 = vunpack.c.l.b16 %v3948
          %v5221 = vunpack.c.h.b16 %v3948
          %v5222 = vunpack.c.l.b16 %v3949
          %v5223 = vunpack.c.h.b16 %v3949
          %v5224 = vunpack.c.l.b16 %v3950
          %v5225 = vunpack.c.h.b16 %v3950
          %v5226 = vunpack.c.l.b16 %v3951
          %v5227 = vunpack.c.h.b16 %v3951
          %v5228 = vunpack.c.l.b16 %v3952
          %v5229 = vunpack.c.h.b16 %v3952
          %v5230 = vunpack.c.l.b16 %v3953
          %v5231 = vunpack.c.h.b16 %v3953
          %v5232 = vunpack.c.l.b16 %v3954
          %v5233 = vunpack.c.h.b16 %v3954
          %v5234 = vunpack.c.l.b16 %v3955
          %v5235 = vunpack.c.h.b16 %v3955
          %v5236 = vunpack.c.l.b16 %v3956
          %v5237 = vunpack.c.h.b16 %v3956
          %v5238 = vunpack.c.l.b16 %v3957
          %v5239 = vunpack.c.h.b16 %v3957
          %v5240 = vunpack.c.l.b16 %v3958
          %v5241 = vunpack.c.h.b16 %v3958
          %v5242 = vunpack.c.l.b16 %v3959
          %v5243 = vunpack.c.h.b16 %v3959
          %v5244 = vunpack.c.l.b16 %v3960
          %v5245 = vunpack.c.h.b16 %v3960
          %v5246 = vunpack.c.l.b16 %v3961
          %v5247 = vunpack.c.h.b16 %v3961
          %v5248 = vunpack.c.l.b16 %v3962
          %v5249 = vunpack.c.h.b16 %v3962
          %v5250 = vunpack.c.l.b16 %v3963
          %v5251 = vunpack.c.h.b16 %v3963
          %v5252 = vunpack.c.l.b16 %v3964
          %v5253 = vunpack.c.h.b16 %v3964
          %v5254 = vunpack.c.l.b16 %v3965
          %v5255 = vunpack.c.h.b16 %v3965
          %v5256 = vunpack.c.l.b16 %v3966
          %v5257 = vunpack.c.h.b16 %v3966
          %v5258 = vunpack.c.l.b16 %v3967
          %v5259 = vunpack.c.h.b16 %v3967
          %v5260 = vunpack.c.l.b16 %v3968
          %v5261 = vunpack.c.h.b16 %v3968
          %v5262 = vunpack.c.l.b16 %v3969
          %v5263 = vunpack.c.h.b16 %v3969
          %v5264 = vunpack.c.l.b16 %v3970
          %v5265 = vunpack.c.h.b16 %v3970
          %v5266 = vunpack.c.l.b16 %v3971
          %v5267 = vunpack.c.h.b16 %v3971
          %v5268 = vunpack.c.l.b16 %v3972
          %v5269 = vunpack.c.h.b16 %v3972
          %v5270 = vunpack.c.l.b16 %v3973
          %v5271 = vunpack.c.h.b16 %v3973
          %v5272 = vunpack.c.l.b16 %v3974
          %v5273 = vunpack.c.h.b16 %v3974
          %v5274 = vunpack.c.l.b16 %v3975
          %v5275 = vunpack.c.h.b16 %v3975
          %v5276 = vunpack.c.l.b16 %v3976
          %v5277 = vunpack.c.h.b16 %v3976
          %v5278 = vunpack.c.l.b16 %v3977
          %v5279 = vunpack.c.h.b16 %v3977
          %v5280 = vunpack.c.l.b16 %v3978
          %v5281 = vunpack.c.h.b16 %v3978
          %v5282 = vunpack.c.l.b16 %v3979
          %v5283 = vunpack.c.h.b16 %v3979
          %v5284 = vunpack.c.l.b16 %v3980
          %v5285 = vunpack.c.h.b16 %v3980
          %v5286 = vunpack.c.l.b16 %v3981
          %v5287 = vunpack.c.h.b16 %v3981
          %v5288 = vunpack.c.l.b16 %v3982
          %v5289 = vunpack.c.h.b16 %v3982
          %v5290 = vunpack.c.l.b16 %v3983
          %v5291 = vunpack.c.h.b16 %v3983
          %v5292 = vunpack.c.l.b16 %v3984
          %v5293 = vunpack.c.h.b16 %v3984
          %v5294 = vunpack.c.l.b16 %v3985
          %v5295 = vunpack.c.h.b16 %v3985
          %v5296 = vunpack.c.l.b16 %v3986
          %v5297 = vunpack.c.h.b16 %v3986
          %v5298 = vunpack.c.l.b16 %v3987
          %v5299 = vunpack.c.h.b16 %v3987
          %v5300 = vunpack.c.l.b16 %v3988
          %v5301 = vunpack.c.h.b16 %v3988
          %v5302 = vunpack.c.l.b16 %v3989
          %v5303 = vunpack.c.h.b16 %v3989
          %v5304 = vunpack.c.l.b16 %v3990
          %v5305 = vunpack.c.h.b16 %v3990
          %v5306 = vunpack.c.l.b16 %v3991
          %v5307 = vunpack.c.h.b16 %v3991
          %v5308 = vunpack.c.l.b16 %v3992
          %v5309 = vunpack.c.h.b16 %v3992
          %v5310 = vunpack.c.l.b16 %v3993
          %v5311 = vunpack.c.h.b16 %v3993
          %v5312 = vunpack.c.l.b16 %v3994
          %v5313 = vunpack.c.h.b16 %v3994
          %v5314 = vunpack.c.l.b16 %v3995
          %v5315 = vunpack.c.h.b16 %v3995
          %v5316 = vunpack.c.l.b16 %v3996
          %v5317 = vunpack.c.h.b16 %v3996
          %v5318 = vunpack.c.l.b16 %v3997
          %v5319 = vunpack.c.h.b16 %v3997
          %v5320 = vunpack.c.l.b16 %v3998
          %v5321 = vunpack.c.h.b16 %v3998
          %v5322 = vunpack.c.l.b16 %v3999
          %v5323 = vunpack.c.h.b16 %v3999
          %v5324 = vunpack.c.l.b16 %v4000
          %v5325 = vunpack.c.h.b16 %v4000
          %v5326 = vunpack.c.l.b16 %v4001
          %v5327 = vunpack.c.h.b16 %v4001
          %v5328 = vunpack.c.l.b16 %v4002
          %v5329 = vunpack.c.h.b16 %v4002
          %v5330 = vunpack.c.l.b16 %v4003
          %v5331 = vunpack.c.h.b16 %v4003
          %v5332 = vunpack.c.l.b16 %v4004
          %v5333 = vunpack.c.h.b16 %v4004
          %v5334 = vunpack.c.l.b16 %v4005
          %v5335 = vunpack.c.h.b16 %v4005
          %v5336 = vunpack.c.l.b16 %v4006
          %v5337 = vunpack.c.h.b16 %v4006
          %v5338 = vunpack.c.l.b16 %v4007
          %v5339 = vunpack.c.h.b16 %v4007
          %v5340 = vunpack.c.l.b16 %v4008
          %v5341 = vunpack.c.h.b16 %v4008
          %v5342 = vunpack.c.l.b16 %v4009
          %v5343 = vunpack.c.h.b16 %v4009
          %v5344 = vunpack.c.l.b16 %v4010
          %v5345 = vunpack.c.h.b16 %v4010
          %v5346 = vunpack.c.l.b16 %v4011
          %v5347 = vunpack.c.h.b16 %v4011
          %v5348 = vunpack.c.l.b16 %v4012
          %v5349 = vunpack.c.h.b16 %v4012
          %v5350 = vunpack.c.l.b16 %v4013
          %v5351 = vunpack.c.h.b16 %v4013
          %v5352 = vunpack.c.l.b16 %v4014
          %v5353 = vunpack.c.h.b16 %v4014
          %v5354 = vunpack.c.l.b16 %v4015
          %v5355 = vunpack.c.h.b16 %v4015
          %v5356 = vunpack.c.l.b16 %v4016
          %v5357 = vunpack.c.h.b16 %v4016
          %v5358 = vunpack.c.l.b16 %v4017
          %v5359 = vunpack.c.h.b16 %v4017
          %v5360 = vunpack.c.l.b16 %v4018
          %v5361 = vunpack.c.h.b16 %v4018
          %v5362 = vunpack.c.l.b16 %v4019
          %v5363 = vunpack.c.h.b16 %v4019
          %v5364 = vunpack.c.l.b16 %v4020
          %v5365 = vunpack.c.h.b16 %v4020
          %v5366 = vunpack.c.l.b16 %v4021
          %v5367 = vunpack.c.h.b16 %v4021
          %v5368 = vunpack.c.l.b16 %v4022
          %v5369 = vunpack.c.h.b16 %v4022
          %v5370 = vunpack.c.l.b16 %v4023
          %v5371 = vunpack.c.h.b16 %v4023
          %v5372 = vunpack.c.l.b16 %v4024
          %v5373 = vunpack.c.h.b16 %v4024
          %v5374 = vunpack.c.l.b16 %v4025
          %v5375 = vunpack.c.h.b16 %v4025
          %v5376 = vunpack.c.l.b16 %v4026
          %v5377 = vunpack.c.h.b16 %v4026
          %v5378 = vunpack.c.l.b16 %v4027
          %v5379 = vunpack.c.h.b16 %v4027
          %v5380 = vunpack.c.l.b16 %v4028
          %v5381 = vunpack.c.h.b16 %v4028
          %v5382 = vunpack.c.l.b16 %v4029
          %v5383 = vunpack.c.h.b16 %v4029
          %v5384 = vunpack.c.l.b16 %v4030
          %v5385 = vunpack.c.h.b16 %v4030
          %v5386 = vunpack.c.l.b16 %v4031
          %v5387 = vunpack.c.h.b16 %v4031
          %v5388 = vunpack.c.l.b16 %v4032
          %v5389 = vunpack.c.h.b16 %v4032
          %v5390 = vunpack.c.l.b16 %v4033
          %v5391 = vunpack.c.h.b16 %v4033
          %v5392 = vunpack.c.l.b16 %v4034
          %v5393 = vunpack.c.h.b16 %v4034
          %v5394 = vunpack.c.l.b16 %v4035
          %v5395 = vunpack.c.h.b16 %v4035
          %v5396 = vunpack.c.l.b16 %v4036
          %v5397 = vunpack.c.h.b16 %v4036
          %v5398 = vunpack.c.l.b16 %v4037
          %v5399 = vunpack.c.h.b16 %v4037
          %v5400 = vunpack.c.l.b16 %v4038
          %v5401 = vunpack.c.h.b16 %v4038
          %v5402 = vunpack.c.l.b16 %v4039
          %v5403 = vunpack.c.h.b16 %v4039
          %v5404 = vpack.c.b16 %v5152, %v5148
          %v5405 = vpack.c.b16 %v5153, %v5149
          %v5406 = vpack.c.b16 %v5154, %v5150
          %v5407 = vpack.c.b16 %v5155, %v5151
          %v5408 = vpack.c.b16 %v5160, %v5156
          %v5409 = vpack.c.b16 %v5161, %v5157
          %v5410 = vpack.c.b16 %v5162, %v5158
          %v5411 = vpack.c.b16 %v5163, %v5159
          %v5412 = vpack.c.b16 %v5168, %v5164
          %v5413 = vpack.c.b16 %v5169, %v5165
          %v5414 = vpack.c.b16 %v5170, %v5166
          %v5415 = vpack.c.b16 %v5171, %v5167
          %v5416 = vpack.c.b16 %v5176, %v5172
          %v5417 = vpack.c.b16 %v5177, %v5173
          %v5418 = vpack.c.b16 %v5178, %v5174
          %v5419 = vpack.c.b16 %v5179, %v5175
          %v5420 = vpack.c.b16 %v5184, %v5180
          %v5421 = vpack.c.b16 %v5185, %v5181
          %v5422 = vpack.c.b16 %v5186, %v5182
          %v5423 = vpack.c.b16 %v5187, %v5183
          %v5424 = vpack.c.b16 %v5192, %v5188
          %v5425 = vpack.c.b16 %v5193, %v5189
          %v5426 = vpack.c.b16 %v5194, %v5190
          %v5427 = vpack.c.b16 %v5195, %v5191
          %v5428 = vpack.c.b16 %v5200, %v5196
          %v5429 = vpack.c.b16 %v5201, %v5197
          %v5430 = vpack.c.b16 %v5202, %v5198
          %v5431 = vpack.c.b16 %v5203, %v5199
          %v5432 = vpack.c.b16 %v5208, %v5204
          %v5433 = vpack.c.b16 %v5209, %v5205
          %v5434 = vpack.c.b16 %v5210, %v5206
          %v5435 = vpack.c.b16 %v5211, %v5207
          %v5436 = vpack.c.b16 %v5216, %v5212
          %v5437 = vpack.c.b16 %v5217, %v5213
          %v5438 = vpack.c.b16 %v5218, %v5214
          %v5439 = vpack.c.b16 %v5219, %v5215
          %v5440 = vpack.c.b16 %v5224, %v5220
          %v5441 = vpack.c.b16 %v5225, %v5221
          %v5442 = vpack.c.b16 %v5226, %v5222
          %v5443 = vpack.c.b16 %v5227, %v5223
          %v5444 = vpack.c.b16 %v5232, %v5228
          %v5445 = vpack.c.b16 %v5233, %v5229
          %v5446 = vpack.c.b16 %v5234, %v5230
          %v5447 = vpack.c.b16 %v5235, %v5231
          %v5448 = vpack.c.b16 %v5240, %v5236
          %v5449 = vpack.c.b16 %v5241, %v5237
          %v5450 = vpack.c.b16 %v5242, %v5238
          %v5451 = vpack.c.b16 %v5243, %v5239
          %v5452 = vpack.c.b16 %v5248, %v5244
          %v5453 = vpack.c.b16 %v5249, %v5245
          %v5454 = vpack.c.b16 %v5250, %v5246
          %v5455 = vpack.c.b16 %v5251, %v5247
          %v5456 = vpack.c.b16 %v5256, %v5252
          %v5457 = vpack.c.b16 %v5257, %v5253
          %v5458 = vpack.c.b16 %v5258, %v5254
          %v5459 = vpack.c.b16 %v5259, %v5255
          %v5460 = vpack.c.b16 %v5264, %v5260
          %v5461 = vpack.c.b16 %v5265, %v5261
          %v5462 = vpack.c.b16 %v5266, %v5262
          %v5463 = vpack.c.b16 %v5267, %v5263
          %v5464 = vpack.c.b16 %v5272, %v5268
          %v5465 = vpack.c.b16 %v5273, %v5269
          %v5466 = vpack.c.b16 %v5274, %v5270
          %v5467 = vpack.c.b16 %v5275, %v5271
          %v5468 = vpack.c.b16 %v5280, %v5276
          %v5469 = vpack.c.b16 %v5281, %v5277
          %v5470 = vpack.c.b16 %v5282, %v5278
          %v5471 = vpack.c.b16 %v5283, %v5279
          %v5472 = vpack.c.b16 %v5288, %v5284
          %v5473 = vpack.c.b16 %v5289, %v5285
          %v5474 = vpack.c.b16 %v5290, %v5286
          %v5475 = vpack.c.b16 %v5291, %v5287
          %v5476 = vpack.c.b16 %v5296, %v5292
          %v5477 = vpack.c.b16 %v5297, %v5293
          %v5478 = vpack.c.b16 %v5298, %v5294
          %v5479 = vpack.c.b16 %v5299, %v5295
          %v5480 = vpack.c.b16 %v5304, %v5300
          %v5481 = vpack.c.b16 %v5305, %v5301
          %v5482 = vpack.c.b16 %v5306, %v5302
          %v5483 = vpack.c.b16 %v5307, %v5303
          %v5484 = vpack.c.b16 %v5312, %v5308
          %v5485 = vpack.c.b16 %v5313, %v5309
          %v5486 = vpack.c.b16 %v5314, %v5310
          %v5487 = vpack.c.b16 %v5315, %v5311
          %v5488 = vpack.c.b16 %v5320, %v5316
          %v5489 = vpack.c.b16 %v5321, %v5317
          %v5490 = vpack.c.b16 %v5322, %v5318
          %v5491 = vpack.c.b16 %v5323, %v5319
          %v5492 = vpack.c.b16 %v5328, %v5324
          %v5493 = vpack.c.b16 %v5329, %v5325
          %v5494 = vpack.c.b16 %v5330, %v5326
          %v5495 = vpack.c.b16 %v5331, %v5327
          %v5496 = vpack.c.b16 %v5336, %v5332
          %v5497 = vpack.c.b16 %v5337, %v5333
          %v5498 = vpack.c.b16 %v5338, %v5334
          %v5499 = vpack.c.b16 %v5339, %v5335
          %v5500 = vpack.c.b16 %v5344, %v5340
          %v5501 = vpack.c.b16 %v5345, %v5341
          %v5502 = vpack.c.b16 %v5346, %v5342
          %v5503 = vpack.c.b16 %v5347, %v5343
          %v5504 = vpack.c.b16 %v5352, %v5348
          %v5505 = vpack.c.b16 %v5353, %v5349
          %v5506 = vpack.c.b16 %v5354, %v5350
          %v5507 = vpack.c.b16 %v5355, %v5351
          %v5508 = vpack.c.b16 %v5360, %v5356
          %v5509 = vpack.c.b16 %v5361, %v5357
          %v5510 = vpack.c.b16 %v5362, %v5358
          %v5511 = vpack.c.b16 %v5363, %v5359
          %v5512 = vpack.c.b16 %v5368, %v5364
          %v5513 = vpack.c.b16 %v5369, %v5365
          %v5514 = vpack.c.b16 %v5370, %v5366
          %v5515 = vpack.c.b16 %v5371, %v5367
          %v5516 = vpack.c.b16 %v5376, %v5372
          %v5517 = vpack.c.b16 %v5377, %v5373
          %v5518 = vpack.c.b16 %v5378, %v5374
          %v5519 = vpack.c.b16 %v5379, %v5375
          %v5520 = vpack.c.b16 %v5384, %v5380
          %v5521 = vpack.c.b16 %v5385, %v5381
          %v5522 = vpack.c.b16 %v5386, %v5382
          %v5523 = vpack.c.b16 %v5387, %v5383
          %v5524 = vpack.c.b16 %v5392, %v5388
          %v5525 = vpack.c.b16 %v5393, %v5389
          %v5526 = vpack.c.b16 %v5394, %v5390
          %v5527 = vpack.c.b16 %v5395, %v5391
          %v5528 = vpack.c.b16 %v5400, %v5396
          %v5529 = vpack.c.b16 %v5401, %v5397
          %v5530 = vpack.c.b16 %v5402, %v5398
          %v5531 = vpack.c.b16 %v5403, %v5399
          %5660 = vmatpush.bf16.msra.mxu0 %v5432
          %5661 = vmatpush.bf16.msra.mxu0 %v5428
          %5662 = vmatpush.bf16.msra.mxu0 %v5424
          %5663 = vmatpush.bf16.msra.mxu0 %v5420
          %5664 = vmatpush.bf16.msra.mxu0 %v5416
          %5665 = vmatpush.bf16.msra.mxu0 %v5412
          %5666 = vmatpush.bf16.msra.mxu0 %v5408
          %5667 = vmatpush.bf16.msra.mxu0 %v5404
          %5668 = vmatmul.bf16.gmra.mxu0 %v3908
          %v5669 = vpop.f32.mrf.mxu0
          %v5670 = vadd.f32 %v4861, %v5669
          %v5671 = vpop.f32.mrf.mxu0
          %5672 = vdwg.mxu0
          %5673 = vmatpush.bf16.msra.mxu0 %v5464
          %5674 = vmatpush.bf16.msra.mxu0 %v5460
          %5675 = vmatpush.bf16.msra.mxu0 %v5456
          %5676 = vmatpush.bf16.msra.mxu0 %v5452
          %5677 = vmatpush.bf16.msra.mxu0 %v5448
          %5678 = vmatpush.bf16.msra.mxu0 %v5444
          %5679 = vmatpush.bf16.msra.mxu0 %v5440
          %5680 = vmatpush.bf16.msra.mxu0 %v5436
          %5681 = vmatmul.bf16.gmra.mxu0 %v3909
          %v5682 = vpop.f32.mrf.mxu0
          %v5683 = vadd.f32 %v5670, %v5682
          %v5684 = vpop.f32.mrf.mxu0
          %5685 = vdwg.mxu0
          %5686 = vmatpush.bf16.msra.mxu0 %v5496
          %5687 = vmatpush.bf16.msra.mxu0 %v5492
          %5688 = vmatpush.bf16.msra.mxu0 %v5488
          %5689 = vmatpush.bf16.msra.mxu0 %v5484
          %5690 = vmatpush.bf16.msra.mxu0 %v5480
          %5691 = vmatpush.bf16.msra.mxu0 %v5476
          %5692 = vmatpush.bf16.msra.mxu0 %v5472
          %5693 = vmatpush.bf16.msra.mxu0 %v5468
          %5694 = vmatmul.bf16.gmra.mxu0 %v3910
          %v5695 = vpop.f32.mrf.mxu0
          %v5696 = vadd.f32 %v5683, %v5695
          %v5697 = vpop.f32.mrf.mxu0
          %5698 = vdwg.mxu0
          %5699 = vmatpush.bf16.msra.mxu0 %v5528
          %5700 = vmatpush.bf16.msra.mxu0 %v5524
          %5701 = vmatpush.bf16.msra.mxu0 %v5520
          %5702 = vmatpush.bf16.msra.mxu0 %v5516
          %5703 = vmatpush.bf16.msra.mxu0 %v5512
          %5704 = vmatpush.bf16.msra.mxu0 %v5508
          %5705 = vmatpush.bf16.msra.mxu0 %v5504
          %5706 = vmatpush.bf16.msra.mxu0 %v5500
          %5707 = vmatmul.bf16.gmra.mxu0 %v3911
          %v5708 = vpop.f32.mrf.mxu0
          %v5709 = vadd.f32 %v5696, %v5708
          %v5710 = vpop.f32.mrf.mxu0
          %5711 = vdwg.mxu0
          %5712 = vmatpush.bf16.msra.mxu0 %v5433
          %5713 = vmatpush.bf16.msra.mxu0 %v5429
          %5714 = vmatpush.bf16.msra.mxu0 %v5425
          %5715 = vmatpush.bf16.msra.mxu0 %v5421
          %5716 = vmatpush.bf16.msra.mxu0 %v5417
          %5717 = vmatpush.bf16.msra.mxu0 %v5413
          %5718 = vmatpush.bf16.msra.mxu0 %v5409
          %5719 = vmatpush.bf16.msra.mxu0 %v5405
          %5720 = vmatmul.bf16.gmra.mxu0 %v3908
          %v5721 = vpop.f32.mrf.mxu0
          %v5722 = vadd.f32 %v4913, %v5721
          %v5723 = vpop.f32.mrf.mxu0
          %5724 = vdwg.mxu0
          %5725 = vmatpush.bf16.msra.mxu0 %v5465
          %5726 = vmatpush.bf16.msra.mxu0 %v5461
          %5727 = vmatpush.bf16.msra.mxu0 %v5457
          %5728 = vmatpush.bf16.msra.mxu0 %v5453
          %5729 = vmatpush.bf16.msra.mxu0 %v5449
          %5730 = vmatpush.bf16.msra.mxu0 %v5445
          %5731 = vmatpush.bf16.msra.mxu0 %v5441
          %5732 = vmatpush.bf16.msra.mxu0 %v5437
          %5733 = vmatmul.bf16.gmra.mxu0 %v3909
          %v5734 = vpop.f32.mrf.mxu0
          %v5735 = vadd.f32 %v5722, %v5734
          %v5736 = vpop.f32.mrf.mxu0
          %5737 = vdwg.mxu0
          %5738 = vmatpush.bf16.msra.mxu0 %v5497
          %5739 = vmatpush.bf16.msra.mxu0 %v5493
          %5740 = vmatpush.bf16.msra.mxu0 %v5489
          %5741 = vmatpush.bf16.msra.mxu0 %v5485
          %5742 = vmatpush.bf16.msra.mxu0 %v5481
          %5743 = vmatpush.bf16.msra.mxu0 %v5477
          %5744 = vmatpush.bf16.msra.mxu0 %v5473
          %5745 = vmatpush.bf16.msra.mxu0 %v5469
          %5746 = vmatmul.bf16.gmra.mxu0 %v3910
          %v5747 = vpop.f32.mrf.mxu0
          %v5748 = vadd.f32 %v5735, %v5747
          %v5749 = vpop.f32.mrf.mxu0
          %5750 = vdwg.mxu0
          %5751 = vmatpush.bf16.msra.mxu0 %v5529
          %5752 = vmatpush.bf16.msra.mxu0 %v5525
          %5753 = vmatpush.bf16.msra.mxu0 %v5521
          %5754 = vmatpush.bf16.msra.mxu0 %v5517
          %5755 = vmatpush.bf16.msra.mxu0 %v5513
          %5756 = vmatpush.bf16.msra.mxu0 %v5509
          %5757 = vmatpush.bf16.msra.mxu0 %v5505
          %5758 = vmatpush.bf16.msra.mxu0 %v5501
          %5759 = vmatmul.bf16.gmra.mxu0 %v3911
          %v5760 = vpop.f32.mrf.mxu0
          %v5761 = vadd.f32 %v5748, %v5760
          %v5762 = vpop.f32.mrf.mxu0
          %5763 = vdwg.mxu0
          %5764 = vmatpush.bf16.msra.mxu0 %v5434
          %5765 = vmatpush.bf16.msra.mxu0 %v5430
          %5766 = vmatpush.bf16.msra.mxu0 %v5426
          %5767 = vmatpush.bf16.msra.mxu0 %v5422
          %5768 = vmatpush.bf16.msra.mxu0 %v5418
          %5769 = vmatpush.bf16.msra.mxu0 %v5414
          %5770 = vmatpush.bf16.msra.mxu0 %v5410
          %5771 = vmatpush.bf16.msra.mxu0 %v5406
          %5772 = vmatmul.bf16.gmra.mxu0 %v3908
          %v5773 = vpop.f32.mrf.mxu0
          %v5774 = vadd.f32 %v4965, %v5773
          %v5775 = vpop.f32.mrf.mxu0
          %5776 = vdwg.mxu0
          %5777 = vmatpush.bf16.msra.mxu0 %v5466
          %5778 = vmatpush.bf16.msra.mxu0 %v5462
          %5779 = vmatpush.bf16.msra.mxu0 %v5458
          %5780 = vmatpush.bf16.msra.mxu0 %v5454
          %5781 = vmatpush.bf16.msra.mxu0 %v5450
          %5782 = vmatpush.bf16.msra.mxu0 %v5446
          %5783 = vmatpush.bf16.msra.mxu0 %v5442
          %5784 = vmatpush.bf16.msra.mxu0 %v5438
          %5785 = vmatmul.bf16.gmra.mxu0 %v3909
          %v5786 = vpop.f32.mrf.mxu0
          %v5787 = vadd.f32 %v5774, %v5786
          %v5788 = vpop.f32.mrf.mxu0
          %5789 = vdwg.mxu0
          %5790 = vmatpush.bf16.msra.mxu0 %v5498
          %5791 = vmatpush.bf16.msra.mxu0 %v5494
          %5792 = vmatpush.bf16.msra.mxu0 %v5490
          %5793 = vmatpush.bf16.msra.mxu0 %v5486
          %5794 = vmatpush.bf16.msra.mxu0 %v5482
          %5795 = vmatpush.bf16.msra.mxu0 %v5478
          %5796 = vmatpush.bf16.msra.mxu0 %v5474
          %5797 = vmatpush.bf16.msra.mxu0 %v5470
          %5798 = vmatmul.bf16.gmra.mxu0 %v3910
          %v5799 = vpop.f32.mrf.mxu0
          %v5800 = vadd.f32 %v5787, %v5799
          %v5801 = vpop.f32.mrf.mxu0
          %5802 = vdwg.mxu0
          %5803 = vmatpush.bf16.msra.mxu0 %v5530
          %5804 = vmatpush.bf16.msra.mxu0 %v5526
          %5805 = vmatpush.bf16.msra.mxu0 %v5522
          %5806 = vmatpush.bf16.msra.mxu0 %v5518
          %5807 = vmatpush.bf16.msra.mxu0 %v5514
          %5808 = vmatpush.bf16.msra.mxu0 %v5510
          %5809 = vmatpush.bf16.msra.mxu0 %v5506
          %5810 = vmatpush.bf16.msra.mxu0 %v5502
          %5811 = vmatmul.bf16.gmra.mxu0 %v3911
          %v5812 = vpop.f32.mrf.mxu0
          %v5813 = vadd.f32 %v5800, %v5812
          %v5814 = vpop.f32.mrf.mxu0
          %5815 = vdwg.mxu0
          %5816 = vmatpush.bf16.msra.mxu0 %v5435
          %5817 = vmatpush.bf16.msra.mxu0 %v5431
          %5818 = vmatpush.bf16.msra.mxu0 %v5427
          %5819 = vmatpush.bf16.msra.mxu0 %v5423
          %5820 = vmatpush.bf16.msra.mxu0 %v5419
          %5821 = vmatpush.bf16.msra.mxu0 %v5415
          %5822 = vmatpush.bf16.msra.mxu0 %v5411
          %5823 = vmatpush.bf16.msra.mxu0 %v5407
          %5824 = vmatmul.bf16.gmra.mxu0 %v3908
          %v5825 = vpop.f32.mrf.mxu0
          %v5826 = vadd.f32 %v5017, %v5825
          %v5827 = vpop.f32.mrf.mxu0
          %5828 = vdwg.mxu0
          %5829 = vmatpush.bf16.msra.mxu0 %v5467
          %5830 = vmatpush.bf16.msra.mxu0 %v5463
          %5831 = vmatpush.bf16.msra.mxu0 %v5459
          %5832 = vmatpush.bf16.msra.mxu0 %v5455
          %5833 = vmatpush.bf16.msra.mxu0 %v5451
          %5834 = vmatpush.bf16.msra.mxu0 %v5447
          %5835 = vmatpush.bf16.msra.mxu0 %v5443
          %5836 = vmatpush.bf16.msra.mxu0 %v5439
          %5837 = vmatmul.bf16.gmra.mxu0 %v3909
          %v5838 = vpop.f32.mrf.mxu0
          %v5839 = vadd.f32 %v5826, %v5838
          %v5840 = vpop.f32.mrf.mxu0
          %5841 = vdwg.mxu0
          %5842 = vmatpush.bf16.msra.mxu0 %v5499
          %5843 = vmatpush.bf16.msra.mxu0 %v5495
          %5844 = vmatpush.bf16.msra.mxu0 %v5491
          %5845 = vmatpush.bf16.msra.mxu0 %v5487
          %5846 = vmatpush.bf16.msra.mxu0 %v5483
          %5847 = vmatpush.bf16.msra.mxu0 %v5479
          %5848 = vmatpush.bf16.msra.mxu0 %v5475
          %5849 = vmatpush.bf16.msra.mxu0 %v5471
          %5850 = vmatmul.bf16.gmra.mxu0 %v3910
          %v5851 = vpop.f32.mrf.mxu0
          %v5852 = vadd.f32 %v5839, %v5851
          %v5853 = vpop.f32.mrf.mxu0
          %5854 = vdwg.mxu0
          %5855 = vmatpush.bf16.msra.mxu0 %v5531
          %5856 = vmatpush.bf16.msra.mxu0 %v5527
          %5857 = vmatpush.bf16.msra.mxu0 %v5523
          %5858 = vmatpush.bf16.msra.mxu0 %v5519
          %5859 = vmatpush.bf16.msra.mxu0 %v5515
          %5860 = vmatpush.bf16.msra.mxu0 %v5511
          %5861 = vmatpush.bf16.msra.mxu0 %v5507
          %5862 = vmatpush.bf16.msra.mxu0 %v5503
          %5863 = vmatmul.bf16.gmra.mxu0 %v3911
          %v5864 = vpop.f32.mrf.mxu0
          %v5865 = vadd.f32 %v5852, %v5864
          %v5866 = vpop.f32.mrf.mxu0
          %5867 = vdwg.mxu0
          %v5868 = vld [vmem:[#allocation21] sm:$0xf]
          %v5870 = vperm.slane %v5868, 0
          %v5871 = vperm.slane %v5868, 1
          %v5872 = vperm.slane %v5868, 2
          %v5873 = vperm.slane %v5868, 3
          %v5878 = vadd.f32 %v5709, %v5870
          %v5879 = vadd.f32 %v5761, %v5871
          %v5880 = vadd.f32 %v5813, %v5872
          %v5881 = vadd.f32 %v5865, %v5873
          %v5882 = vmax.f32 %v5878, 0.0
          %v5883 = vmax.f32 %v5879, 0.0
          %v5884 = vmax.f32 %v5880, 0.0
          %v5885 = vmax.f32 %v5881, 0.0
          %v5886 = vpack.c.bf16 %v5882, %v5882
          %v5887 = vpack.c.bf16 %v5883, %v5883
          %v5888 = vpack.c.bf16 %v5884, %v5884
          %v5889 = vpack.c.bf16 %v5885, %v5885
          %v5890 = vld [vmem:[#allocation23] sm:$0xf]
          %v5891 = vld [vmem:[#allocation23 + $0x4] sm:$0xf]
          %v5892 = vld [vmem:[#allocation23 + $0x8] sm:$0xf]
          %v5893 = vld [vmem:[#allocation23 + $0xc] sm:$0xf]
          %v5894 = vld [vmem:[#allocation23 + $0x10] sm:$0xf]
          %v5895 = vld [vmem:[#allocation23 + $0x14] sm:$0xf]
          %v5896 = vld [vmem:[#allocation23 + $0x18] sm:$0xf]
          %v5897 = vld [vmem:[#allocation23 + $0x1c] sm:$0xf]
          %v5898 = vld [vmem:[#allocation23 + $0x20] sm:$0xf]
          %v5899 = vld [vmem:[#allocation23 + $0x24] sm:$0xf]
          %v5900 = vld [vmem:[#allocation23 + $0x28] sm:$0xf]
          %v5901 = vld [vmem:[#allocation23 + $0x2c] sm:$0xf]
          %v5902 = vld [vmem:[#allocation23 + $0x30] sm:$0xf]
          %v5903 = vld [vmem:[#allocation23 + $0x34] sm:$0xf]
          %v5904 = vld [vmem:[#allocation23 + $0x38] sm:$0xf]
          %v5905 = vld [vmem:[#allocation23 + $0x3c] sm:$0xf]
          %v5906 = vld [vmem:[#allocation23 + $0x40] sm:$0xf]
          %v5907 = vld [vmem:[#allocation23 + $0x44] sm:$0xf]
          %v5908 = vld [vmem:[#allocation23 + $0x48] sm:$0xf]
          %v5909 = vld [vmem:[#allocation23 + $0x4c] sm:$0xf]
          %v5910 = vld [vmem:[#allocation23 + $0x50] sm:$0xf]
          %v5911 = vld [vmem:[#allocation23 + $0x54] sm:$0xf]
          %v5912 = vld [vmem:[#allocation23 + $0x58] sm:$0xf]
          %v5913 = vld [vmem:[#allocation23 + $0x5c] sm:$0xf]
          %v5914 = vld [vmem:[#allocation23 + $0x60] sm:$0xf]
          %v5915 = vld [vmem:[#allocation23 + $0x64] sm:$0xf]
          %v5916 = vld [vmem:[#allocation23 + $0x68] sm:$0xf]
          %v5917 = vld [vmem:[#allocation23 + $0x6c] sm:$0xf]
          %v5918 = vld [vmem:[#allocation23 + $0x70] sm:$0xf]
          %v5919 = vld [vmem:[#allocation23 + $0x74] sm:$0xf]
          %v5920 = vld [vmem:[#allocation23 + $0x78] sm:$0xf]
          %v5921 = vld [vmem:[#allocation23 + $0x7c] sm:$0xf]
          %v5922 = vld [vmem:[#allocation23 + $0x80] sm:$0xf]
          %v5923 = vld [vmem:[#allocation23 + $0x84] sm:$0xf]
          %v5924 = vld [vmem:[#allocation23 + $0x88] sm:$0xf]
          %v5925 = vld [vmem:[#allocation23 + $0x8c] sm:$0xf]
          %v5926 = vld [vmem:[#allocation23 + $0x90] sm:$0xf]
          %v5927 = vld [vmem:[#allocation23 + $0x94] sm:$0xf]
          %v5928 = vld [vmem:[#allocation23 + $0x98] sm:$0xf]
          %v5929 = vld [vmem:[#allocation23 + $0x9c] sm:$0xf]
          %v5930 = vld [vmem:[#allocation23 + $0xa0] sm:$0xf]
          %v5931 = vld [vmem:[#allocation23 + $0xa4] sm:$0xf]
          %v5932 = vld [vmem:[#allocation23 + $0xa8] sm:$0xf]
          %v5933 = vld [vmem:[#allocation23 + $0xac] sm:$0xf]
          %v5934 = vld [vmem:[#allocation23 + $0xb0] sm:$0xf]
          %v5935 = vld [vmem:[#allocation23 + $0xb4] sm:$0xf]
          %v5936 = vld [vmem:[#allocation23 + $0xb8] sm:$0xf]
          %v5937 = vld [vmem:[#allocation23 + $0xbc] sm:$0xf]
          %v5938 = vld [vmem:[#allocation23 + $0xc0] sm:$0xf]
          %v5939 = vld [vmem:[#allocation23 + $0xc4] sm:$0xf]
          %v5940 = vld [vmem:[#allocation23 + $0xc8] sm:$0xf]
          %v5941 = vld [vmem:[#allocation23 + $0xcc] sm:$0xf]
          %v5942 = vld [vmem:[#allocation23 + $0xd0] sm:$0xf]
          %v5943 = vld [vmem:[#allocation23 + $0xd4] sm:$0xf]
          %v5944 = vld [vmem:[#allocation23 + $0xd8] sm:$0xf]
          %v5945 = vld [vmem:[#allocation23 + $0xdc] sm:$0xf]
          %v5946 = vld [vmem:[#allocation23 + $0xe0] sm:$0xf]
          %v5947 = vld [vmem:[#allocation23 + $0xe4] sm:$0xf]
          %v5948 = vld [vmem:[#allocation23 + $0xe8] sm:$0xf]
          %v5949 = vld [vmem:[#allocation23 + $0xec] sm:$0xf]
          %v5950 = vld [vmem:[#allocation23 + $0xf0] sm:$0xf]
          %v5951 = vld [vmem:[#allocation23 + $0xf4] sm:$0xf]
          %v5952 = vld [vmem:[#allocation23 + $0xf8] sm:$0xf]
          %v5953 = vld [vmem:[#allocation23 + $0xfc] sm:$0xf]
          %v5954 = vld [vmem:[#allocation24] sm:$0x1]
          %v5956 = vperm.slane %v5954, 0
          %v6022 = vunpack.c.l.b16 %v5890
          %v6023 = vunpack.c.l.b16 %v5891
          %v6024 = vunpack.c.l.b16 %v5892
          %v6025 = vunpack.c.l.b16 %v5893
          %v6026 = vunpack.c.l.b16 %v5894
          %v6027 = vunpack.c.l.b16 %v5895
          %v6028 = vunpack.c.l.b16 %v5896
          %v6029 = vunpack.c.l.b16 %v5897
          %v6030 = vunpack.c.l.b16 %v5898
          %v6031 = vunpack.c.l.b16 %v5899
          %v6032 = vunpack.c.l.b16 %v5900
          %v6033 = vunpack.c.l.b16 %v5901
          %v6034 = vunpack.c.l.b16 %v5902
          %v6035 = vunpack.c.l.b16 %v5903
          %v6036 = vunpack.c.l.b16 %v5904
          %v6037 = vunpack.c.l.b16 %v5905
          %v6038 = vunpack.c.l.b16 %v5906
          %v6039 = vunpack.c.l.b16 %v5907
          %v6040 = vunpack.c.l.b16 %v5908
          %v6041 = vunpack.c.l.b16 %v5909
          %v6042 = vunpack.c.l.b16 %v5910
          %v6043 = vunpack.c.l.b16 %v5911
          %v6044 = vunpack.c.l.b16 %v5912
          %v6045 = vunpack.c.l.b16 %v5913
          %v6046 = vunpack.c.l.b16 %v5914
          %v6047 = vunpack.c.l.b16 %v5915
          %v6048 = vunpack.c.l.b16 %v5916
          %v6049 = vunpack.c.l.b16 %v5917
          %v6050 = vunpack.c.l.b16 %v5918
          %v6051 = vunpack.c.l.b16 %v5919
          %v6052 = vunpack.c.l.b16 %v5920
          %v6053 = vunpack.c.l.b16 %v5921
          %v6054 = vunpack.c.l.b16 %v5922
          %v6055 = vunpack.c.l.b16 %v5923
          %v6056 = vunpack.c.l.b16 %v5924
          %v6057 = vunpack.c.l.b16 %v5925
          %v6058 = vunpack.c.l.b16 %v5926
          %v6059 = vunpack.c.l.b16 %v5927
          %v6060 = vunpack.c.l.b16 %v5928
          %v6061 = vunpack.c.l.b16 %v5929
          %v6062 = vunpack.c.l.b16 %v5930
          %v6063 = vunpack.c.l.b16 %v5931
          %v6064 = vunpack.c.l.b16 %v5932
          %v6065 = vunpack.c.l.b16 %v5933
          %v6066 = vunpack.c.l.b16 %v5934
          %v6067 = vunpack.c.l.b16 %v5935
          %v6068 = vunpack.c.l.b16 %v5936
          %v6069 = vunpack.c.l.b16 %v5937
          %v6070 = vunpack.c.l.b16 %v5938
          %v6071 = vunpack.c.l.b16 %v5939
          %v6072 = vunpack.c.l.b16 %v5940
          %v6073 = vunpack.c.l.b16 %v5941
          %v6074 = vunpack.c.l.b16 %v5942
          %v6075 = vunpack.c.l.b16 %v5943
          %v6076 = vunpack.c.l.b16 %v5944
          %v6077 = vunpack.c.l.b16 %v5945
          %v6078 = vunpack.c.l.b16 %v5946
          %v6079 = vunpack.c.l.b16 %v5947
          %v6080 = vunpack.c.l.b16 %v5948
          %v6081 = vunpack.c.l.b16 %v5949
          %v6082 = vunpack.c.l.b16 %v5950
          %v6083 = vunpack.c.l.b16 %v5951
          %v6084 = vunpack.c.l.b16 %v5952
          %v6085 = vunpack.c.l.b16 %v5953
          %v6086 = vpack.c.b16 %v6023, %v6022
          %v6087 = vpack.c.b16 %v6025, %v6024
          %v6088 = vpack.c.b16 %v6027, %v6026
          %v6089 = vpack.c.b16 %v6029, %v6028
          %v6090 = vpack.c.b16 %v6031, %v6030
          %v6091 = vpack.c.b16 %v6033, %v6032
          %v6092 = vpack.c.b16 %v6035, %v6034
          %v6093 = vpack.c.b16 %v6037, %v6036
          %v6094 = vpack.c.b16 %v6039, %v6038
          %v6095 = vpack.c.b16 %v6041, %v6040
          %v6096 = vpack.c.b16 %v6043, %v6042
          %v6097 = vpack.c.b16 %v6045, %v6044
          %v6098 = vpack.c.b16 %v6047, %v6046
          %v6099 = vpack.c.b16 %v6049, %v6048
          %v6100 = vpack.c.b16 %v6051, %v6050
          %v6101 = vpack.c.b16 %v6053, %v6052
          %v6102 = vpack.c.b16 %v6055, %v6054
          %v6103 = vpack.c.b16 %v6057, %v6056
          %v6104 = vpack.c.b16 %v6059, %v6058
          %v6105 = vpack.c.b16 %v6061, %v6060
          %v6106 = vpack.c.b16 %v6063, %v6062
          %v6107 = vpack.c.b16 %v6065, %v6064
          %v6108 = vpack.c.b16 %v6067, %v6066
          %v6109 = vpack.c.b16 %v6069, %v6068
          %v6110 = vpack.c.b16 %v6071, %v6070
          %v6111 = vpack.c.b16 %v6073, %v6072
          %v6112 = vpack.c.b16 %v6075, %v6074
          %v6113 = vpack.c.b16 %v6077, %v6076
          %v6114 = vpack.c.b16 %v6079, %v6078
          %v6115 = vpack.c.b16 %v6081, %v6080
          %v6116 = vpack.c.b16 %v6083, %v6082
          %v6117 = vpack.c.b16 %v6085, %v6084
          %6150 = vmatpush.bf16.msra.mxu0 %v6093
          %6151 = vmatpush.bf16.msra.mxu0 %v6092
          %6152 = vmatpush.bf16.msra.mxu0 %v6091
          %6153 = vmatpush.bf16.msra.mxu0 %v6090
          %6154 = vmatpush.bf16.msra.mxu0 %v6089
          %6155 = vmatpush.bf16.msra.mxu0 %v6088
          %6156 = vmatpush.bf16.msra.mxu0 %v6087
          %6157 = vmatpush.bf16.msra.mxu0 %v6086
          %6158 = vmatmul.bf16.gmra.mxu0 %v5886
          %v6159 = vpop.f32.mrf.mxu0
          %v6160 = vadd.f32 %v5956, %v6159
          %v6161 = vpop.f32.mrf.mxu0
          %6162 = vdwg.mxu0
          %6163 = vmatpush.bf16.msra.mxu0 %v6101
          %6164 = vmatpush.bf16.msra.mxu0 %v6100
          %6165 = vmatpush.bf16.msra.mxu0 %v6099
          %6166 = vmatpush.bf16.msra.mxu0 %v6098
          %6167 = vmatpush.bf16.msra.mxu0 %v6097
          %6168 = vmatpush.bf16.msra.mxu0 %v6096
          %6169 = vmatpush.bf16.msra.mxu0 %v6095
          %6170 = vmatpush.bf16.msra.mxu0 %v6094
          %6171 = vmatmul.bf16.gmra.mxu0 %v5887
          %v6172 = vpop.f32.mrf.mxu0
          %v6173 = vadd.f32 %v6160, %v6172
          %v6174 = vpop.f32.mrf.mxu0
          %6175 = vdwg.mxu0
          %6176 = vmatpush.bf16.msra.mxu0 %v6109
          %6177 = vmatpush.bf16.msra.mxu0 %v6108
          %6178 = vmatpush.bf16.msra.mxu0 %v6107
          %6179 = vmatpush.bf16.msra.mxu0 %v6106
          %6180 = vmatpush.bf16.msra.mxu0 %v6105
          %6181 = vmatpush.bf16.msra.mxu0 %v6104
          %6182 = vmatpush.bf16.msra.mxu0 %v6103
          %6183 = vmatpush.bf16.msra.mxu0 %v6102
          %6184 = vmatmul.bf16.gmra.mxu0 %v5888
          %v6185 = vpop.f32.mrf.mxu0
          %v6186 = vadd.f32 %v6173, %v6185
          %v6187 = vpop.f32.mrf.mxu0
          %6188 = vdwg.mxu0
          %6189 = vmatpush.bf16.msra.mxu0 %v6117
          %6190 = vmatpush.bf16.msra.mxu0 %v6116
          %6191 = vmatpush.bf16.msra.mxu0 %v6115
          %6192 = vmatpush.bf16.msra.mxu0 %v6114
          %6193 = vmatpush.bf16.msra.mxu0 %v6113
          %6194 = vmatpush.bf16.msra.mxu0 %v6112
          %6195 = vmatpush.bf16.msra.mxu0 %v6111
          %6196 = vmatpush.bf16.msra.mxu0 %v6110
          %6197 = vmatmul.bf16.gmra.mxu0 %v5889
          %v6198 = vpop.f32.mrf.mxu0
          %v6199 = vadd.f32 %v6186, %v6198
          %v6200 = vpop.f32.mrf.mxu0
          %6201 = vdwg.mxu0
          %6202 = vst [vmem:[#allocation26] sm:$0xff] %v6199
        $region148: #{tpu_custom_call.1} parent=79 // pred_fallthru
          _
        // Predicated region
        $region149: #{tpu_custom_call.1} parent=79 // pred_check
          %p6203 = pneg %p404
        $region150: #{tpu_custom_call.1} parent=79 // pred_check_branch
          %6205 = sbr.rel (%p6203) target = $region152
        $region151: #{tpu_custom_call.1} parent=79 // pred_region
          %6207 = vsyncadd [#allocation5], 0
          %s6208 = smul.addr %s38, 8
          %s6209 = scalar_lea.hbm %s15, %s6208
          %s6211 = sshll.u32 [#allocation26], 4
          %s6212 = int_to_ptr.vmem [resolvable:$true] %s6211
          %s6213 = sshll.u32 %s6209, 4
          %s6214 = int_to_ptr.hbm [resolvable:$true] %s6213
          %6216 = dma.vmem_to_hbm [thread:$0]  %s6212, 128, %s6214, [#allocation5]
        $region152: #{tpu_custom_call.1} parent=79 // pred_fallthru
          _
        // Predicated region
        $region153: #{tpu_custom_call.1} parent=79 // pred_check
          %p6217 = pneg %p404
        $region154: #{tpu_custom_call.1} parent=79 // pred_check_branch
          %6219 = sbr.rel (%p6217) target = $region156
        $region155: #{tpu_custom_call.1} parent=79 // pred_region
          %6221 = dma.done [#allocation5], 128
        $region156: #{tpu_custom_call.1} parent=79 // pred_fallthru
          _
      $region80: #{tpu_custom_call.1} parent=5 // pred_fallthru
        _
      %p6222 = scmp.le.s32.totalorder 2, %s29
      // Predicated region
      $region157: #{tpu_custom_call.1} parent=5 // pred_check
        %p6223 = pneg %p6222
      $region158: #{tpu_custom_call.1} parent=5 // pred_check_branch
        %6225 = sbr.rel (%p6223) target = $region160
      $region159: #{tpu_custom_call.1} parent=5 // pred_region
        %s6226 = ssub.s32 %s29, 2
      $region160: #{tpu_custom_call.1} parent=5 // pred_fallthru
        _
    $region6: #{tpu_custom_call.1} parent=1 // loop_footer
      %s33 = sadd.s32 1, %s29
    $region7: #{tpu_custom_call.1} parent=1 // loop_footer_branch
      %28 = sbr.rel target = $region3
    $region8: #{tpu_custom_call.1} parent=1 // loop_exit
      _
    %6227 = vsyncpa [#allocation4], 1
    %s6228 = scalar_lea.sflag [#allocation4], 1
    %6229 = vsyncpa %s6228, 1
    %6230 = vsyncpa [#allocation7], 1
    %6231 = vsyncpa [#allocation13], 1
    %6232 = vsyncpa [#allocation16], 1
    %6233 = vsyncpa [#allocation19], 1
    %6234 = vsyncpa [#allocation22], 1
    %6235 = vsyncpa [#allocation25], 1
    %6236 = vsyncpa [#allocation5], 1
    %s6237 = scalar_lea.sflag [#allocation5], 1
    %6238 = vsyncpa %s6237, 1

</llo_original>
